<compile_context>
chip_gen: v7x
topology: tpu7x:2x2x1
jax: 0.10.0
libtpu: 0.0.40
codegen_flags: <defaults>
</compile_context>

<pallas_src>
import math

import jax
import jax.numpy as jnp
from jax.experimental import pallas as pl
from jax.experimental.pallas import tpu as pltpu

# ----------------------------- configuration --------------------------------
DIM = 32          # config['dim']
HEAD_DIM = 8      # config['head_dim']
NUM_HEAD = 4      # config['num_head']
HIDDEN = 64       # config['hidden_dim']
WINDOW = 4        # config['window_size'] (local_context)
NUM_LAYERS = 2    # config['num_layers']
SHARED_WEIGHT = False
DROPOUT_PROB = 0.0  # nn.Dropout(p=0.0) == identity
B, T = 2, 16
# Performer default feature count: int(d * log(d))
NB_FEATURES = int(HEAD_DIM * math.log(HEAD_DIM))  # = 16
SOFTMAX_TEMP = 1.0 / math.sqrt(HEAD_DIM)
LN_EPS = 1e-5

# packed "big" projection layout (per layer):
#   [ Wq*sqrt(t) | Wk*sqrt(t) | Wv | pad | Wq*sqrt(t)@omega^T | Wk*sqrt(t)@omega^T ]
QKV_W = NUM_HEAD * HEAD_DIM                      # 32
FEAT_W = 2 * NUM_HEAD * NB_FEATURES              # 128  ([qp_all | kp_all])
FEAT_OFF = ((3 * QKV_W + 127) // 128) * 128      # 128  (lane-tile aligned)
NCOL = FEAT_OFF + FEAT_W                         # 256


# ------------------------------- in-kernel math -------------------------------
def _erf(x):
    # Abramowitz & Stegun 7.1.26 polynomial erf, |error| <= ~1.5e-7 exact;
    # rational term uses the EUP approximate reciprocal (review suggestion).
    # TODO(synk): switch to jax.lax.erf once its Mosaic lowering is guaranteed.
    p = 0.3275911
    a1, a2, a3, a4, a5 = 0.254829592, -0.284496736, 1.421413741, -1.453152027, 1.061405429
    sign = jnp.where(x >= 0.0, 1.0, -1.0)
    ax = jnp.abs(x)
    t = pl.reciprocal(1.0 + p * ax, approx=True)
    poly = ((((a5 * t + a4) * t + a3) * t + a2) * t + a1) * t
    return sign * (1.0 - poly * jnp.exp(-ax * ax))


def _backbone_kernel(x_ref, win_ref, lrm_ref, nmat_ref,
                     wbig_ref, bbig_ref, wo_ref, bo_ref,
                     ln1g_ref, ln1b_ref, w1_ref, b1_ref, w2_ref, b2_ref,
                     ln2g_ref, ln2b_ref, o_ref):
    x = x_ref[...]                 # (B*T, DIM), batch folded into sublanes
    win = win_ref[...] > 0.0       # (B*T, B*T) block-diag local-window & key-valid
    lrm = lrm_ref[...]             # (B*T, B*T) block-diag key-valid (float 0/1)
    nmat = nmat_ref[...]           # (2*H*hd, 2*H*m), -0.5 block indicator

    H, hd, m = NUM_HEAD, HEAD_DIM, NB_FEATURES
    dn = (((1,), (1,)), ((), ()))  # contract dim-1 of both operands (A @ B.T)

    def layer_norm(y, g, b):
        mu = jnp.mean(y, axis=-1, keepdims=True)
        var = jnp.mean(jnp.square(y - mu), axis=-1, keepdims=True)
        return (y - mu) * jax.lax.rsqrt(var + LN_EPS) * g + b

    for l in range(NUM_LAYERS):
        # ---- fused QKV + Performer-feature projection: one wide MXU push ----
        proj = jnp.dot(x, wbig_ref[l], preferred_element_type=jnp.float32) + bbig_ref[l]
        qk = proj[:, :2 * QKV_W]                    # [qs_all | ks_all]  (BT, 64)
        v_all = proj[:, 2 * QKV_W:3 * QKV_W]        # (BT, 32)

        # FAVOR+ positive features for ALL heads at once:
        #   exp( qs@omega^T + bias(+log 1/sqrt(m))  - 0.5*||qs_h||^2 per head )
        # the per-head squared norms are broadcast into the feature layout via
        # one matmul against the constant -0.5 block-indicator matrix.
        feat = jnp.exp(proj[:, FEAT_OFF:FEAT_OFF + FEAT_W]
                       + jnp.dot(qk * qk, nmat, preferred_element_type=jnp.float32))
        # feat = [ qp_all (BT, H*m) | kp_all (BT, H*m) ]

        # ---------------- SBLocalAttention per head ---------------------------
        heads = []
        for h in range(H):
            qs = qk[:, h * hd:(h + 1) * hd]
            ks = qk[:, QKV_W + h * hd:QKV_W + (h + 1) * hd]
            vh = v_all[:, h * hd:(h + 1) * hd]
            qp = feat[:, h * m:(h + 1) * m]
            kp = feat[:, H * m + h * m:H * m + (h + 1) * m]

            # exact local scores (temp already folded into the packed weights)
            s = jax.lax.dot_general(qs, ks, dn, preferred_element_type=jnp.float32)
            # low-rank (Performer) residual outside the window
            lr = jax.lax.dot_general(qp, kp, dn, preferred_element_type=jnp.float32)
            # TODO(synk): no per-row max subtraction before exp; safe at this
            # scale (small temp / T) but would need a banded max for large T.
            a = jnp.where(win, jnp.exp(s), lr * lrm)

            den = jnp.sum(a, axis=-1, keepdims=True)
            den = jnp.where(den > 0.0, den, 1.0)      # guard fully-padded rows
            num = jnp.dot(a, vh, preferred_element_type=jnp.float32)
            heads.append(num * pl.reciprocal(den, approx=True))

        # combine_heads (lane concat) + output projection as ONE K=32 matmul
        attn_out = jnp.dot(jnp.concatenate(heads, axis=-1), wo_ref[l],
                           preferred_element_type=jnp.float32) + bo_ref[l]

        # ---------------- residual + LayerNorm 1 (dropout p=0 == identity) ----
        y1 = layer_norm(x + attn_out, ln1g_ref[l], ln1b_ref[l])

        # ---------------- FFN with exact (erf-based) GELU, fused --------------
        h1 = jnp.dot(y1, w1_ref[l], preferred_element_type=jnp.float32) + b1_ref[l]
        h1 = 0.5 * h1 * (1.0 + _erf(h1 * (1.0 / math.sqrt(2.0))))
        ff = jnp.dot(h1, w2_ref[l], preferred_element_type=jnp.float32) + b2_ref[l]

        # ---------------- residual + LayerNorm 2 ------------------------------
        x = layer_norm(y1 + ff, ln2g_ref[l], ln2b_ref[l])

    o_ref[...] = x


# ------------------------------ parameter init -------------------------------
def init_linear(key, fan_in, fan_out):
    kw, kb = jax.random.split(key)
    bound = 1.0 / math.sqrt(fan_in)
    w = jax.random.uniform(kw, (fan_in, fan_out), jnp.float32, -bound, bound)
    b = jax.random.uniform(kb, (fan_out,), jnp.float32, -bound, bound)
    return w, b


def gaussian_orthogonal_matrix(key, m, d):
    # Performer orthogonal random features (ortho_scaling = 0: chi(d) row norms).
    nb_blocks = math.ceil(m / d)
    keys = jax.random.split(key, nb_blocks + 1)
    blocks = []
    for i in range(nb_blocks):
        g = jax.random.normal(keys[i], (d, d), jnp.float32)
        qmat, _ = jnp.linalg.qr(g)
        blocks.append(qmat.T)
    mat = jnp.concatenate(blocks, axis=0)[:m]
    norms = jnp.linalg.norm(
        jax.random.normal(keys[-1], (m, d), jnp.float32), axis=1
    )
    return mat * norms[:, None]   # (m, d)


def init_block_params(key):
    ks = jax.random.split(key, 7)
    wq, bq = init_linear(ks[0], DIM, NUM_HEAD * HEAD_DIM)
    wk, bk = init_linear(ks[1], DIM, NUM_HEAD * HEAD_DIM)
    wv, bv = init_linear(ks[2], DIM, NUM_HEAD * HEAD_DIM)
    wo, bo = init_linear(ks[3], NUM_HEAD * HEAD_DIM, DIM)
    # TODO(synk): SBLocalAttention redraws the Performer projection each forward
    # (new_feature_map); here it is a fixed deterministic draw per layer.
    omega = gaussian_orthogonal_matrix(ks[4], NB_FEATURES, HEAD_DIM)
    w1, b1 = init_linear(ks[5], DIM, HIDDEN)
    w2, b2 = init_linear(ks[6], HIDDEN, DIM)
    return {
        "attn": {"wq": wq, "bq": bq, "wk": wk, "bk": bk, "wv": wv, "bv": bv,
                 "wo": wo, "bo": bo, "omega": omega},
        "ln1_g": jnp.ones((DIM,), jnp.float32),
        "ln1_b": jnp.zeros((DIM,), jnp.float32),
        "ffn_w1": w1, "ffn_b1": b1, "ffn_w2": w2, "ffn_b2": b2,
        "ln2_g": jnp.ones((DIM,), jnp.float32),
        "ln2_b": jnp.zeros((DIM,), jnp.float32),
    }


def init_backbone(key):
    n_param_sets = 1 if SHARED_WEIGHT else NUM_LAYERS
    keys = jax.random.split(key, n_param_sets)
    return [init_block_params(k) for k in keys]


def build_norm_matrix():
    """(2*H*hd, 2*H*m) constant mapping per-head squared q/k entries to -0.5 * sums
    aligned with the packed feature layout [qp_all | kp_all]."""
    H, hd, m = NUM_HEAD, HEAD_DIM, NB_FEATURES
    nm = jnp.zeros((2 * H * hd, 2 * H * m), jnp.float32)
    for h in range(H):
        nm = nm.at[h * hd:(h + 1) * hd, h * m:(h + 1) * m].set(-0.5)
        nm = nm.at[H * hd + h * hd:H * hd + (h + 1) * hd,
                   H * m + h * m:H * m + (h + 1) * m].set(-0.5)
    return nm


def pack_backbone_params(params):
    """Fold scalar constants / omega projections into ONE wide per-layer matrix.

    wbig: (L, DIM, 256) = [Wq*sqrt(t) | Wk*sqrt(t) | Wv | 0-pad |
                           Wq*sqrt(t)@omega^T | Wk*sqrt(t)@omega^T]
    bbig: matching (L, 1, 256) bias, with log(1/sqrt(m)) folded into the
          omega-projected bias columns.
    """
    H, hd, m, L = NUM_HEAD, HEAD_DIM, NB_FEATURES, NUM_LAYERS
    st = math.sqrt(SOFTMAX_TEMP)
    log_inv_sqrt_m = -0.5 * math.log(m)
    pad_w = FEAT_OFF - 3 * QKV_W

    acc = {k: [] for k in ("wbig", "bbig", "wo", "bo", "ln1g", "ln1b",
                           "w1", "b1", "w2", "b2", "ln2g", "ln2b")}
    for l in range(L):
        p = params[0] if SHARED_WEIGHT else params[l]
        a = p["attn"]
        omega_t = a["omega"].T                                   # (hd, m)
        wq, bq = a["wq"] * st, a["bq"] * st                      # sqrt(temp) folded
        wk, bk = a["wk"] * st, a["bk"] * st
        wv, bv = a["wv"], a["bv"]
        wqo = jnp.einsum("dhc,cm->dhm", wq.reshape(DIM, H, hd), omega_t).reshape(DIM, H * m)
        wko = jnp.einsum("dhc,cm->dhm", wk.reshape(DIM, H, hd), omega_t).reshape(DIM, H * m)
        bqo = (jnp.einsum("hc,cm->hm", bq.reshape(H, hd), omega_t)
               + log_inv_sqrt_m).reshape(H * m)
        bko = (jnp.einsum("hc,cm->hm", bk.reshape(H, hd), omega_t)
               + log_inv_sqrt_m).reshape(H * m)
        acc["wbig"].append(jnp.concatenate(
            [wq, wk, wv, jnp.zeros((DIM, pad_w), jnp.float32), wqo, wko], axis=1))
        acc["bbig"].append(jnp.concatenate(
            [bq, bk, bv, jnp.zeros((pad_w,), jnp.float32), bqo, bko])[None, :])
        acc["wo"].append(a["wo"])                                # (H*hd, DIM)
        acc["bo"].append(a["bo"][None, :])
        acc["ln1g"].append(p["ln1_g"][None, :]); acc["ln1b"].append(p["ln1_b"][None, :])
        acc["w1"].append(p["ffn_w1"]); acc["b1"].append(p["ffn_b1"][None, :])
        acc["w2"].append(p["ffn_w2"]); acc["b2"].append(p["ffn_b2"][None, :])
        acc["ln2g"].append(p["ln2_g"][None, :]); acc["ln2b"].append(p["ln2_b"][None, :])

    packed = {k: jnp.stack(v) for k, v in acc.items()}
    packed["nmat"] = build_norm_matrix()
    return packed


# ------------------------------- model forward --------------------------------
def compute_masks(mask):
    """Block-diagonal (B*T, B*T) masks for the batch-folded layout.

    win_mask: same batch & inside local window & key valid (LengthMask semantics)
    lr_mask : same batch & key valid  (support of the low-rank residual)
    """
    Bsz, Tq = mask.shape
    lengths = jnp.sum(mask, axis=-1)                                   # (B,)
    pos = jnp.arange(Tq)
    valid = (pos[None, :] < lengths[:, None]).reshape(Bsz * Tq)        # (B*T,)
    b_idx = jnp.repeat(jnp.arange(Bsz), Tq)
    t_idx = jnp.tile(jnp.arange(Tq), Bsz)
    same_b = b_idx[:, None] == b_idx[None, :]
    start = t_idx[:, None] - WINDOW // 2
    in_win = (t_idx[None, :] >= start) & (t_idx[None, :] < start + WINDOW)
    win_mask = (same_b & in_win & valid[None, :]).astype(jnp.float32)
    lr_mask = (same_b & valid[None, :]).astype(jnp.float32)
    return win_mask, lr_mask


def backbone_forward(packed, X, mask):
    Bsz, Tq, dim = X.shape
    BT = Bsz * Tq
    win_mask, lr_mask = compute_masks(mask)
    x2d = X.reshape(BT, dim)        # batch folded into sublanes -> single grid step

    weight_order = ["wbig", "bbig", "wo", "bo", "ln1g", "ln1b",
                    "w1", "b1", "w2", "b2", "ln2g", "ln2b"]
    ins = [x2d, win_mask, lr_mask, packed["nmat"]] + [packed[k] for k in weight_order]

    def full(arr):
        # whole array resident in VMEM; block == full array shape
        return pl.BlockSpec(arr.shape, lambda i, n=arr.ndim: (0,) * n)

    out2d = pl.pallas_call(
        _backbone_kernel,
        out_shape=jax.ShapeDtypeStruct((BT, dim), jnp.float32),
        grid=(1,),
        in_specs=[full(a) for a in ins],
        out_specs=pl.BlockSpec((BT, dim), lambda i: (0, 0)),
        compiler_params=pltpu.CompilerParams(dimension_semantics=("arbitrary",)),
    )(*ins)
    return out2d.reshape(Bsz, Tq, dim)


# ---------------------------------- main --------------------------------------
if __name__ == "__main__":
    root = jax.random.PRNGKey(0)
    k_params, k_x = jax.random.split(root)

    params = init_backbone(k_params)
    packed = pack_backbone_params(params)

    X = jax.random.normal(k_x, (B, T, DIM), jnp.float32)
    # mask: 1 = token, 0 = pad (second sequence padded after position 12)
    mask = jnp.ones((B, T), jnp.float32).at[1, 12:].set(0.0)

    fwd = jax.jit(backbone_forward)
    out = jax.block_until_ready(fwd(packed, X, mask))

    assert out.shape == (B, T, DIM)
    assert bool(jnp.all(jnp.isfinite(out)))
    print("KERNEL_OK")
</pallas_src>

<mosaic_0001>
module attributes {stable_mosaic.version = 11 : i64} {
  func.func @_backbone_kernel(%arg0: i32, %arg1: memref<32x32xf32, #tpu.memory_space<vmem>>, %arg2: memref<32x32xf32, #tpu.memory_space<vmem>>, %arg3: memref<32x32xf32, #tpu.memory_space<vmem>>, %arg4: memref<64x128xf32, #tpu.memory_space<vmem>>, %arg5: memref<2x32x256xf32, #tpu.memory_space<vmem>>, %arg6: memref<2x1x256xf32, #tpu.memory_space<vmem>>, %arg7: memref<2x32x32xf32, #tpu.memory_space<vmem>>, %arg8: memref<2x1x32xf32, #tpu.memory_space<vmem>>, %arg9: memref<2x1x32xf32, #tpu.memory_space<vmem>>, %arg10: memref<2x1x32xf32, #tpu.memory_space<vmem>>, %arg11: memref<2x32x64xf32, #tpu.memory_space<vmem>>, %arg12: memref<2x1x64xf32, #tpu.memory_space<vmem>>, %arg13: memref<2x64x32xf32, #tpu.memory_space<vmem>>, %arg14: memref<2x1x32xf32, #tpu.memory_space<vmem>>, %arg15: memref<2x1x32xf32, #tpu.memory_space<vmem>>, %arg16: memref<2x1x32xf32, #tpu.memory_space<vmem>>, %arg17: memref<32x32xf32, #tpu.memory_space<vmem>>) attributes {dimension_semantics = [#tpu.dimension_semantics<arbitrary>], iteration_bounds = array<i64: 1>, scalar_prefetch = 0 : i64, scratch_operands = 0 : i64, tpu.core_type = #tpu.core_type<tc>, window_params = [{pipeline_mode = #tpu.pipeline_mode<synchronous>, transform_indices = @transform_0, window_bounds = array<i64: 32, 32>}, {pipeline_mode = #tpu.pipeline_mode<synchronous>, transform_indices = @transform_1, window_bounds = array<i64: 32, 32>}, {pipeline_mode = #tpu.pipeline_mode<synchronous>, transform_indices = @transform_2, window_bounds = array<i64: 32, 32>}, {pipeline_mode = #tpu.pipeline_mode<synchronous>, transform_indices = @transform_3, window_bounds = array<i64: 64, 128>}, {pipeline_mode = #tpu.pipeline_mode<synchronous>, transform_indices = @transform_4, window_bounds = array<i64: 2, 32, 256>}, {pipeline_mode = #tpu.pipeline_mode<synchronous>, transform_indices = @transform_5, window_bounds = array<i64: 2, 1, 256>}, {pipeline_mode = #tpu.pipeline_mode<synchronous>, transform_indices = @transform_6, window_bounds = array<i64: 2, 32, 32>}, {pipeline_mode = #tpu.pipeline_mode<synchronous>, transform_indices = @transform_7, window_bounds = array<i64: 2, 1, 32>}, {pipeline_mode = #tpu.pipeline_mode<synchronous>, transform_indices = @transform_8, window_bounds = array<i64: 2, 1, 32>}, {pipeline_mode = #tpu.pipeline_mode<synchronous>, transform_indices = @transform_9, window_bounds = array<i64: 2, 1, 32>}, {pipeline_mode = #tpu.pipeline_mode<synchronous>, transform_indices = @transform_10, window_bounds = array<i64: 2, 32, 64>}, {pipeline_mode = #tpu.pipeline_mode<synchronous>, transform_indices = @transform_11, window_bounds = array<i64: 2, 1, 64>}, {pipeline_mode = #tpu.pipeline_mode<synchronous>, transform_indices = @transform_12, window_bounds = array<i64: 2, 64, 32>}, {pipeline_mode = #tpu.pipeline_mode<synchronous>, transform_indices = @transform_13, window_bounds = array<i64: 2, 1, 32>}, {pipeline_mode = #tpu.pipeline_mode<synchronous>, transform_indices = @transform_14, window_bounds = array<i64: 2, 1, 32>}, {pipeline_mode = #tpu.pipeline_mode<synchronous>, transform_indices = @transform_15, window_bounds = array<i64: 2, 1, 32>}, {pipeline_mode = #tpu.pipeline_mode<synchronous>, transform_indices = @transform_16, window_bounds = array<i64: 32, 32>}]} {
    %c0 = arith.constant 0 : index
    %c0_0 = arith.constant 0 : index
    %0 = vector.load %arg1[%c0, %c0_0] : memref<32x32xf32, #tpu.memory_space<vmem>>, vector<32x32xf32>
    %c0_1 = arith.constant 0 : index
    %c0_2 = arith.constant 0 : index
    %1 = vector.load %arg2[%c0_1, %c0_2] : memref<32x32xf32, #tpu.memory_space<vmem>>, vector<32x32xf32>
    %cst = arith.constant 0.000000e+00 : f32
    %2 = vector.broadcast %cst : f32 to vector<32x32xf32>
    %3 = arith.cmpf ogt, %1, %2 : vector<32x32xf32>
    %c0_3 = arith.constant 0 : index
    %c0_4 = arith.constant 0 : index
    %4 = vector.load %arg3[%c0_3, %c0_4] : memref<32x32xf32, #tpu.memory_space<vmem>>, vector<32x32xf32>
    %c0_5 = arith.constant 0 : index
    %c0_6 = arith.constant 0 : index
    %5 = vector.load %arg4[%c0_5, %c0_6] : memref<64x128xf32, #tpu.memory_space<vmem>>, vector<64x128xf32>
    %c0_7 = arith.constant 0 : index
    %c0_8 = arith.constant 0 : index
    %c0_9 = arith.constant 0 : index
    %6 = vector.load %arg5[%c0_7, %c0_8, %c0_9] : memref<2x32x256xf32, #tpu.memory_space<vmem>>, vector<1x32x256xf32>
    %7 = vector.shape_cast %6 : vector<1x32x256xf32> to vector<32x256xf32>
    %cst_10 = arith.constant dense<0.000000e+00> : vector<32x256xf32>
    %8 = tpu.matmul %0, %7, %cst_10 {dimension_numbers = #tpu.dot_dimension_numbers<[1], [0], [0], [1], [0, 0, 1, 1], [], []>} : vector<32x32xf32>, vector<32x256xf32>, vector<32x256xf32> -> vector<32x256xf32>
    %c0_11 = arith.constant 0 : index
    %c0_12 = arith.constant 0 : index
    %c0_13 = arith.constant 0 : index
    %9 = vector.load %arg6[%c0_11, %c0_12, %c0_13] : memref<2x1x256xf32, #tpu.memory_space<vmem>>, vector<1x1x256xf32>
    %10 = vector.shape_cast %9 : vector<1x1x256xf32> to vector<1x256xf32>
    %11 = vector.broadcast %10 : vector<1x256xf32> to vector<32x256xf32>
    %12 = arith.addf %8, %11 : vector<32x256xf32>
    %13 = vector.extract_strided_slice %12 {offsets = [0, 0], sizes = [32, 64], strides = [1, 1]} : vector<32x256xf32> to vector<32x64xf32>
    %14 = vector.extract_strided_slice %12 {offsets = [0, 64], sizes = [32, 32], strides = [1, 1]} : vector<32x256xf32> to vector<32x32xf32>
    %15 = vector.extract_strided_slice %12 {offsets = [0, 128], sizes = [32, 128], strides = [1, 1]} : vector<32x256xf32> to vector<32x128xf32>
    %16 = arith.mulf %13, %13 : vector<32x64xf32>
    %cst_14 = arith.constant dense<0.000000e+00> : vector<32x128xf32>
    %17 = tpu.matmul %16, %5, %cst_14 {dimension_numbers = #tpu.dot_dimension_numbers<[1], [0], [0], [1], [0, 0, 1, 1], [], []>} : vector<32x64xf32>, vector<64x128xf32>, vector<32x128xf32> -> vector<32x128xf32>
    %18 = arith.addf %15, %17 : vector<32x128xf32>
    %19 = math.exp %18 : vector<32x128xf32>
    %20 = vector.extract_strided_slice %13 {offsets = [0, 0], sizes = [32, 8], strides = [1, 1]} : vector<32x64xf32> to vector<32x8xf32>
    %21 = vector.extract_strided_slice %13 {offsets = [0, 32], sizes = [32, 8], strides = [1, 1]} : vector<32x64xf32> to vector<32x8xf32>
    %22 = vector.extract_strided_slice %14 {offsets = [0, 0], sizes = [32, 8], strides = [1, 1]} : vector<32x32xf32> to vector<32x8xf32>
    %23 = vector.extract_strided_slice %19 {offsets = [0, 0], sizes = [32, 16], strides = [1, 1]} : vector<32x128xf32> to vector<32x16xf32>
    %24 = vector.extract_strided_slice %19 {offsets = [0, 64], sizes = [32, 16], strides = [1, 1]} : vector<32x128xf32> to vector<32x16xf32>
    %cst_15 = arith.constant dense<0.000000e+00> : vector<32x32xf32>
    %25 = tpu.matmul %20, %21, %cst_15 {dimension_numbers = #tpu.dot_dimension_numbers<[1], [1], [0], [0], [0, 0, 1, 0], [], []>} : vector<32x8xf32>, vector<32x8xf32>, vector<32x32xf32> -> vector<32x32xf32>
    %cst_16 = arith.constant dense<0.000000e+00> : vector<32x32xf32>
    %26 = tpu.matmul %23, %24, %cst_16 {dimension_numbers = #tpu.dot_dimension_numbers<[1], [1], [0], [0], [0, 0, 1, 0], [], []>} : vector<32x16xf32>, vector<32x16xf32>, vector<32x32xf32> -> vector<32x32xf32>
    %27 = math.exp %25 : vector<32x32xf32>
    %28 = arith.mulf %26, %4 : vector<32x32xf32>
    %29 = arith.select %3, %27, %28 : vector<32x32xi1>, vector<32x32xf32>
    %cst_17 = arith.constant dense<0.000000e+00> : vector<32xf32>
    %30 = vector.multi_reduction <add>, %29, %cst_17 [1] : vector<32x32xf32> to vector<32xf32>
    %31 = vector.shape_cast %30 : vector<32xf32> to vector<32x1xf32>
    %cst_18 = arith.constant 0.000000e+00 : f32
    %32 = vector.broadcast %cst_18 : f32 to vector<32x1xf32>
    %33 = arith.cmpf ogt, %31, %32 : vector<32x1xf32>
    %cst_19 = arith.constant 1.000000e+00 : f32
    %34 = vector.broadcast %cst_19 : f32 to vector<32x1xf32>
    %35 = arith.select %33, %31, %34 : vector<32x1xi1>, vector<32x1xf32>
    %cst_20 = arith.constant dense<0.000000e+00> : vector<32x8xf32>
    %36 = tpu.matmul %29, %22, %cst_20 {dimension_numbers = #tpu.dot_dimension_numbers<[1], [0], [0], [1], [0, 0, 1, 1], [], []>} : vector<32x32xf32>, vector<32x8xf32>, vector<32x8xf32> -> vector<32x8xf32>
    %37 = tpu.reciprocal %35 {approx = true} : vector<32x1xf32> -> vector<32x1xf32>
    %38 = vector.broadcast %37 : vector<32x1xf32> to vector<32x8xf32>
    %39 = arith.mulf %36, %38 : vector<32x8xf32>
    %40 = vector.extract_strided_slice %13 {offsets = [0, 8], sizes = [32, 8], strides = [1, 1]} : vector<32x64xf32> to vector<32x8xf32>
    %41 = vector.extract_strided_slice %13 {offsets = [0, 40], sizes = [32, 8], strides = [1, 1]} : vector<32x64xf32> to vector<32x8xf32>
    %42 = vector.extract_strided_slice %14 {offsets = [0, 8], sizes = [32, 8], strides = [1, 1]} : vector<32x32xf32> to vector<32x8xf32>
    %43 = vector.extract_strided_slice %19 {offsets = [0, 16], sizes = [32, 16], strides = [1, 1]} : vector<32x128xf32> to vector<32x16xf32>
    %44 = vector.extract_strided_slice %19 {offsets = [0, 80], sizes = [32, 16], strides = [1, 1]} : vector<32x128xf32> to vector<32x16xf32>
    %cst_21 = arith.constant dense<0.000000e+00> : vector<32x32xf32>
    %45 = tpu.matmul %40, %41, %cst_21 {dimension_numbers = #tpu.dot_dimension_numbers<[1], [1], [0], [0], [0, 0, 1, 0], [], []>} : vector<32x8xf32>, vector<32x8xf32>, vector<32x32xf32> -> vector<32x32xf32>
    %cst_22 = arith.constant dense<0.000000e+00> : vector<32x32xf32>
    %46 = tpu.matmul %43, %44, %cst_22 {dimension_numbers = #tpu.dot_dimension_numbers<[1], [1], [0], [0], [0, 0, 1, 0], [], []>} : vector<32x16xf32>, vector<32x16xf32>, vector<32x32xf32> -> vector<32x32xf32>
    %47 = math.exp %45 : vector<32x32xf32>
    %48 = arith.mulf %46, %4 : vector<32x32xf32>
    %49 = arith.select %3, %47, %48 : vector<32x32xi1>, vector<32x32xf32>
    %cst_23 = arith.constant dense<0.000000e+00> : vector<32xf32>
    %50 = vector.multi_reduction <add>, %49, %cst_23 [1] : vector<32x32xf32> to vector<32xf32>
    %51 = vector.shape_cast %50 : vector<32xf32> to vector<32x1xf32>
    %cst_24 = arith.constant 0.000000e+00 : f32
    %52 = vector.broadcast %cst_24 : f32 to vector<32x1xf32>
    %53 = arith.cmpf ogt, %51, %52 : vector<32x1xf32>
    %cst_25 = arith.constant 1.000000e+00 : f32
    %54 = vector.broadcast %cst_25 : f32 to vector<32x1xf32>
    %55 = arith.select %53, %51, %54 : vector<32x1xi1>, vector<32x1xf32>
    %cst_26 = arith.constant dense<0.000000e+00> : vector<32x8xf32>
    %56 = tpu.matmul %49, %42, %cst_26 {dimension_numbers = #tpu.dot_dimension_numbers<[1], [0], [0], [1], [0, 0, 1, 1], [], []>} : vector<32x32xf32>, vector<32x8xf32>, vector<32x8xf32> -> vector<32x8xf32>
    %57 = tpu.reciprocal %55 {approx = true} : vector<32x1xf32> -> vector<32x1xf32>
    %58 = vector.broadcast %57 : vector<32x1xf32> to vector<32x8xf32>
    %59 = arith.mulf %56, %58 : vector<32x8xf32>
    %60 = vector.extract_strided_slice %13 {offsets = [0, 16], sizes = [32, 8], strides = [1, 1]} : vector<32x64xf32> to vector<32x8xf32>
    %61 = vector.extract_strided_slice %13 {offsets = [0, 48], sizes = [32, 8], strides = [1, 1]} : vector<32x64xf32> to vector<32x8xf32>
    %62 = vector.extract_strided_slice %14 {offsets = [0, 16], sizes = [32, 8], strides = [1, 1]} : vector<32x32xf32> to vector<32x8xf32>
    %63 = vector.extract_strided_slice %19 {offsets = [0, 32], sizes = [32, 16], strides = [1, 1]} : vector<32x128xf32> to vector<32x16xf32>
    %64 = vector.extract_strided_slice %19 {offsets = [0, 96], sizes = [32, 16], strides = [1, 1]} : vector<32x128xf32> to vector<32x16xf32>
    %cst_27 = arith.constant dense<0.000000e+00> : vector<32x32xf32>
    %65 = tpu.matmul %60, %61, %cst_27 {dimension_numbers = #tpu.dot_dimension_numbers<[1], [1], [0], [0], [0, 0, 1, 0], [], []>} : vector<32x8xf32>, vector<32x8xf32>, vector<32x32xf32> -> vector<32x32xf32>
    %cst_28 = arith.constant dense<0.000000e+00> : vector<32x32xf32>
    %66 = tpu.matmul %63, %64, %cst_28 {dimension_numbers = #tpu.dot_dimension_numbers<[1], [1], [0], [0], [0, 0, 1, 0], [], []>} : vector<32x16xf32>, vector<32x16xf32>, vector<32x32xf32> -> vector<32x32xf32>
    %67 = math.exp %65 : vector<32x32xf32>
    %68 = arith.mulf %66, %4 : vector<32x32xf32>
    %69 = arith.select %3, %67, %68 : vector<32x32xi1>, vector<32x32xf32>
    %cst_29 = arith.constant dense<0.000000e+00> : vector<32xf32>
    %70 = vector.multi_reduction <add>, %69, %cst_29 [1] : vector<32x32xf32> to vector<32xf32>
    %71 = vector.shape_cast %70 : vector<32xf32> to vector<32x1xf32>
    %cst_30 = arith.constant 0.000000e+00 : f32
    %72 = vector.broadcast %cst_30 : f32 to vector<32x1xf32>
    %73 = arith.cmpf ogt, %71, %72 : vector<32x1xf32>
    %cst_31 = arith.constant 1.000000e+00 : f32
    %74 = vector.broadcast %cst_31 : f32 to vector<32x1xf32>
    %75 = arith.select %73, %71, %74 : vector<32x1xi1>, vector<32x1xf32>
    %cst_32 = arith.constant dense<0.000000e+00> : vector<32x8xf32>
    %76 = tpu.matmul %69, %62, %cst_32 {dimension_numbers = #tpu.dot_dimension_numbers<[1], [0], [0], [1], [0, 0, 1, 1], [], []>} : vector<32x32xf32>, vector<32x8xf32>, vector<32x8xf32> -> vector<32x8xf32>
    %77 = tpu.reciprocal %75 {approx = true} : vector<32x1xf32> -> vector<32x1xf32>
    %78 = vector.broadcast %77 : vector<32x1xf32> to vector<32x8xf32>
    %79 = arith.mulf %76, %78 : vector<32x8xf32>
    %80 = vector.extract_strided_slice %13 {offsets = [0, 24], sizes = [32, 8], strides = [1, 1]} : vector<32x64xf32> to vector<32x8xf32>
    %81 = vector.extract_strided_slice %13 {offsets = [0, 56], sizes = [32, 8], strides = [1, 1]} : vector<32x64xf32> to vector<32x8xf32>
    %82 = vector.extract_strided_slice %14 {offsets = [0, 24], sizes = [32, 8], strides = [1, 1]} : vector<32x32xf32> to vector<32x8xf32>
    %83 = vector.extract_strided_slice %19 {offsets = [0, 48], sizes = [32, 16], strides = [1, 1]} : vector<32x128xf32> to vector<32x16xf32>
    %84 = vector.extract_strided_slice %19 {offsets = [0, 112], sizes = [32, 16], strides = [1, 1]} : vector<32x128xf32> to vector<32x16xf32>
    %cst_33 = arith.constant dense<0.000000e+00> : vector<32x32xf32>
    %85 = tpu.matmul %80, %81, %cst_33 {dimension_numbers = #tpu.dot_dimension_numbers<[1], [1], [0], [0], [0, 0, 1, 0], [], []>} : vector<32x8xf32>, vector<32x8xf32>, vector<32x32xf32> -> vector<32x32xf32>
    %cst_34 = arith.constant dense<0.000000e+00> : vector<32x32xf32>
    %86 = tpu.matmul %83, %84, %cst_34 {dimension_numbers = #tpu.dot_dimension_numbers<[1], [1], [0], [0], [0, 0, 1, 0], [], []>} : vector<32x16xf32>, vector<32x16xf32>, vector<32x32xf32> -> vector<32x32xf32>
    %87 = math.exp %85 : vector<32x32xf32>
    %88 = arith.mulf %86, %4 : vector<32x32xf32>
    %89 = arith.select %3, %87, %88 : vector<32x32xi1>, vector<32x32xf32>
    %cst_35 = arith.constant dense<0.000000e+00> : vector<32xf32>
    %90 = vector.multi_reduction <add>, %89, %cst_35 [1] : vector<32x32xf32> to vector<32xf32>
    %91 = vector.shape_cast %90 : vector<32xf32> to vector<32x1xf32>
    %cst_36 = arith.constant 0.000000e+00 : f32
    %92 = vector.broadcast %cst_36 : f32 to vector<32x1xf32>
    %93 = arith.cmpf ogt, %91, %92 : vector<32x1xf32>
    %cst_37 = arith.constant 1.000000e+00 : f32
    %94 = vector.broadcast %cst_37 : f32 to vector<32x1xf32>
    %95 = arith.select %93, %91, %94 : vector<32x1xi1>, vector<32x1xf32>
    %cst_38 = arith.constant dense<0.000000e+00> : vector<32x8xf32>
    %96 = tpu.matmul %89, %82, %cst_38 {dimension_numbers = #tpu.dot_dimension_numbers<[1], [0], [0], [1], [0, 0, 1, 1], [], []>} : vector<32x32xf32>, vector<32x8xf32>, vector<32x8xf32> -> vector<32x8xf32>
    %97 = tpu.reciprocal %95 {approx = true} : vector<32x1xf32> -> vector<32x1xf32>
    %98 = vector.broadcast %97 : vector<32x1xf32> to vector<32x8xf32>
    %99 = arith.mulf %96, %98 : vector<32x8xf32>
    %100 = tpu.concatenate %39, %59, %79, %99 in 1 : vector<32x8xf32>, vector<32x8xf32>, vector<32x8xf32>, vector<32x8xf32> -> vector<32x32xf32>
    %c0_39 = arith.constant 0 : index
    %c0_40 = arith.constant 0 : index
    %c0_41 = arith.constant 0 : index
    %101 = vector.load %arg7[%c0_39, %c0_40, %c0_41] : memref<2x32x32xf32, #tpu.memory_space<vmem>>, vector<1x32x32xf32>
    %102 = vector.shape_cast %101 : vector<1x32x32xf32> to vector<32x32xf32>
    %cst_42 = arith.constant dense<0.000000e+00> : vector<32x32xf32>
    %103 = tpu.matmul %100, %102, %cst_42 {dimension_numbers = #tpu.dot_dimension_numbers<[1], [0], [0], [1], [0, 0, 1, 1], [], []>} : vector<32x32xf32>, vector<32x32xf32>, vector<32x32xf32> -> vector<32x32xf32>
    %c0_43 = arith.constant 0 : index
    %c0_44 = arith.constant 0 : index
    %c0_45 = arith.constant 0 : index
    %104 = vector.load %arg8[%c0_43, %c0_44, %c0_45] : memref<2x1x32xf32, #tpu.memory_space<vmem>>, vector<1x1x32xf32>
    %105 = vector.shape_cast %104 : vector<1x1x32xf32> to vector<1x32xf32>
    %106 = vector.broadcast %105 : vector<1x32xf32> to vector<32x32xf32>
    %107 = arith.addf %103, %106 : vector<32x32xf32>
    %108 = arith.addf %0, %107 : vector<32x32xf32>
    %c0_46 = arith.constant 0 : index
    %c0_47 = arith.constant 0 : index
    %c0_48 = arith.constant 0 : index
    %109 = vector.load %arg9[%c0_46, %c0_47, %c0_48] : memref<2x1x32xf32, #tpu.memory_space<vmem>>, vector<1x1x32xf32>
    %110 = vector.shape_cast %109 : vector<1x1x32xf32> to vector<1x32xf32>
    %c0_49 = arith.constant 0 : index
    %c0_50 = arith.constant 0 : index
    %c0_51 = arith.constant 0 : index
    %111 = vector.load %arg10[%c0_49, %c0_50, %c0_51] : memref<2x1x32xf32, #tpu.memory_space<vmem>>, vector<1x1x32xf32>
    %112 = vector.shape_cast %111 : vector<1x1x32xf32> to vector<1x32xf32>
    %cst_52 = arith.constant dense<0.000000e+00> : vector<32xf32>
    %113 = vector.multi_reduction <add>, %108, %cst_52 [1] : vector<32x32xf32> to vector<32xf32>
    %114 = vector.shape_cast %113 : vector<32xf32> to vector<32x1xf32>
    %cst_53 = arith.constant 3.200000e+01 : f32
    %115 = vector.broadcast %cst_53 : f32 to vector<32x1xf32>
    %116 = arith.divf %114, %115 : vector<32x1xf32>
    %117 = vector.broadcast %116 : vector<32x1xf32> to vector<32x32xf32>
    %118 = arith.subf %108, %117 : vector<32x32xf32>
    %119 = arith.mulf %118, %118 : vector<32x32xf32>
    %cst_54 = arith.constant dense<0.000000e+00> : vector<32xf32>
    %120 = vector.multi_reduction <add>, %119, %cst_54 [1] : vector<32x32xf32> to vector<32xf32>
    %121 = vector.shape_cast %120 : vector<32xf32> to vector<32x1xf32>
    %cst_55 = arith.constant 3.200000e+01 : f32
    %122 = vector.broadcast %cst_55 : f32 to vector<32x1xf32>
    %123 = arith.divf %121, %122 : vector<32x1xf32>
    %124 = vector.broadcast %116 : vector<32x1xf32> to vector<32x32xf32>
    %125 = arith.subf %108, %124 : vector<32x32xf32>
    %cst_56 = arith.constant 9.99999974E-6 : f32
    %126 = vector.broadcast %cst_56 : f32 to vector<32x1xf32>
    %127 = arith.addf %123, %126 : vector<32x1xf32>
    %128 = math.rsqrt %127 : vector<32x1xf32>
    %129 = vector.broadcast %128 : vector<32x1xf32> to vector<32x32xf32>
    %130 = arith.mulf %125, %129 : vector<32x32xf32>
    %131 = vector.broadcast %110 : vector<1x32xf32> to vector<32x32xf32>
    %132 = arith.mulf %130, %131 : vector<32x32xf32>
    %133 = vector.broadcast %112 : vector<1x32xf32> to vector<32x32xf32>
    %134 = arith.addf %132, %133 : vector<32x32xf32>
    %c0_57 = arith.constant 0 : index
    %c0_58 = arith.constant 0 : index
    %c0_59 = arith.constant 0 : index
    %135 = vector.load %arg11[%c0_57, %c0_58, %c0_59] : memref<2x32x64xf32, #tpu.memory_space<vmem>>, vector<1x32x64xf32>
    %136 = vector.shape_cast %135 : vector<1x32x64xf32> to vector<32x64xf32>
    %cst_60 = arith.constant dense<0.000000e+00> : vector<32x64xf32>
    %137 = tpu.matmul %134, %136, %cst_60 {dimension_numbers = #tpu.dot_dimension_numbers<[1], [0], [0], [1], [0, 0, 1, 1], [], []>} : vector<32x32xf32>, vector<32x64xf32>, vector<32x64xf32> -> vector<32x64xf32>
    %c0_61 = arith.constant 0 : index
    %c0_62 = arith.constant 0 : index
    %c0_63 = arith.constant 0 : index
    %138 = vector.load %arg12[%c0_61, %c0_62, %c0_63] : memref<2x1x64xf32, #tpu.memory_space<vmem>>, vector<1x1x64xf32>
    %139 = vector.shape_cast %138 : vector<1x1x64xf32> to vector<1x64xf32>
    %140 = vector.broadcast %139 : vector<1x64xf32> to vector<32x64xf32>
    %141 = arith.addf %137, %140 : vector<32x64xf32>
    %cst_64 = arith.constant 5.000000e-01 : f32
    %142 = vector.broadcast %cst_64 : f32 to vector<32x64xf32>
    %143 = arith.mulf %142, %141 : vector<32x64xf32>
    %cst_65 = arith.constant 0.707106769 : f32
    %144 = vector.broadcast %cst_65 : f32 to vector<32x64xf32>
    %145 = arith.mulf %141, %144 : vector<32x64xf32>
    %cst_66 = arith.constant 0.000000e+00 : f32
    %146 = vector.broadcast %cst_66 : f32 to vector<32x64xf32>
    %147 = arith.cmpf oge, %145, %146 : vector<32x64xf32>
    %cst_67 = arith.constant 1.000000e+00 : f32
    %cst_68 = arith.constant -1.000000e+00 : f32
    %148 = vector.broadcast %cst_67 : f32 to vector<32x64xf32>
    %149 = vector.broadcast %cst_68 : f32 to vector<32x64xf32>
    %150 = arith.select %147, %148, %149 : vector<32x64xi1>, vector<32x64xf32>
    %151 = math.absf %145 : vector<32x64xf32>
    %cst_69 = arith.constant 0.327591091 : f32
    %152 = vector.broadcast %cst_69 : f32 to vector<32x64xf32>
    %153 = arith.mulf %152, %151 : vector<32x64xf32>
    %cst_70 = arith.constant 1.000000e+00 : f32
    %154 = vector.broadcast %cst_70 : f32 to vector<32x64xf32>
    %155 = arith.addf %154, %153 : vector<32x64xf32>
    %156 = tpu.reciprocal %155 {approx = true} : vector<32x64xf32> -> vector<32x64xf32>
    %cst_71 = arith.constant 1.06140542 : f32
    %157 = vector.broadcast %cst_71 : f32 to vector<32x64xf32>
    %158 = arith.mulf %157, %156 : vector<32x64xf32>
    %cst_72 = arith.constant -1.45315206 : f32
    %159 = vector.broadcast %cst_72 : f32 to vector<32x64xf32>
    %160 = arith.addf %158, %159 : vector<32x64xf32>
    %161 = arith.mulf %160, %156 : vector<32x64xf32>
    %cst_73 = arith.constant 1.42141378 : f32
    %162 = vector.broadcast %cst_73 : f32 to vector<32x64xf32>
    %163 = arith.addf %161, %162 : vector<32x64xf32>
    %164 = arith.mulf %163, %156 : vector<32x64xf32>
    %cst_74 = arith.constant -0.284496725 : f32
    %165 = vector.broadcast %cst_74 : f32 to vector<32x64xf32>
    %166 = arith.addf %164, %165 : vector<32x64xf32>
    %167 = arith.mulf %166, %156 : vector<32x64xf32>
    %cst_75 = arith.constant 0.254829586 : f32
    %168 = vector.broadcast %cst_75 : f32 to vector<32x64xf32>
    %169 = arith.addf %167, %168 : vector<32x64xf32>
    %170 = arith.mulf %169, %156 : vector<32x64xf32>
    %cst_76 = arith.constant 0.000000e+00 : f32
    %171 = vector.broadcast %cst_76 : f32 to vector<32x64xf32>
    %172 = arith.subf %171, %151 : vector<32x64xf32>
    %173 = arith.mulf %172, %151 : vector<32x64xf32>
    %174 = math.exp %173 : vector<32x64xf32>
    %175 = arith.mulf %170, %174 : vector<32x64xf32>
    %cst_77 = arith.constant 1.000000e+00 : f32
    %176 = vector.broadcast %cst_77 : f32 to vector<32x64xf32>
    %177 = arith.subf %176, %175 : vector<32x64xf32>
    %178 = arith.mulf %150, %177 : vector<32x64xf32>
    %cst_78 = arith.constant 1.000000e+00 : f32
    %179 = vector.broadcast %cst_78 : f32 to vector<32x64xf32>
    %180 = arith.addf %179, %178 : vector<32x64xf32>
    %181 = arith.mulf %143, %180 : vector<32x64xf32>
    %c0_79 = arith.constant 0 : index
    %c0_80 = arith.constant 0 : index
    %c0_81 = arith.constant 0 : index
    %182 = vector.load %arg13[%c0_79, %c0_80, %c0_81] : memref<2x64x32xf32, #tpu.memory_space<vmem>>, vector<1x64x32xf32>
    %183 = vector.shape_cast %182 : vector<1x64x32xf32> to vector<64x32xf32>
    %cst_82 = arith.constant dense<0.000000e+00> : vector<32x32xf32>
    %184 = tpu.matmul %181, %183, %cst_82 {dimension_numbers = #tpu.dot_dimension_numbers<[1], [0], [0], [1], [0, 0, 1, 1], [], []>} : vector<32x64xf32>, vector<64x32xf32>, vector<32x32xf32> -> vector<32x32xf32>
    %c0_83 = arith.constant 0 : index
    %c0_84 = arith.constant 0 : index
    %c0_85 = arith.constant 0 : index
    %185 = vector.load %arg14[%c0_83, %c0_84, %c0_85] : memref<2x1x32xf32, #tpu.memory_space<vmem>>, vector<1x1x32xf32>
    %186 = vector.shape_cast %185 : vector<1x1x32xf32> to vector<1x32xf32>
    %187 = vector.broadcast %186 : vector<1x32xf32> to vector<32x32xf32>
    %188 = arith.addf %184, %187 : vector<32x32xf32>
    %189 = arith.addf %134, %188 : vector<32x32xf32>
    %c0_86 = arith.constant 0 : index
    %c0_87 = arith.constant 0 : index
    %c0_88 = arith.constant 0 : index
    %190 = vector.load %arg15[%c0_86, %c0_87, %c0_88] : memref<2x1x32xf32, #tpu.memory_space<vmem>>, vector<1x1x32xf32>
    %191 = vector.shape_cast %190 : vector<1x1x32xf32> to vector<1x32xf32>
    %c0_89 = arith.constant 0 : index
    %c0_90 = arith.constant 0 : index
    %c0_91 = arith.constant 0 : index
    %192 = vector.load %arg16[%c0_89, %c0_90, %c0_91] : memref<2x1x32xf32, #tpu.memory_space<vmem>>, vector<1x1x32xf32>
    %193 = vector.shape_cast %192 : vector<1x1x32xf32> to vector<1x32xf32>
    %cst_92 = arith.constant dense<0.000000e+00> : vector<32xf32>
    %194 = vector.multi_reduction <add>, %189, %cst_92 [1] : vector<32x32xf32> to vector<32xf32>
    %195 = vector.shape_cast %194 : vector<32xf32> to vector<32x1xf32>
    %cst_93 = arith.constant 3.200000e+01 : f32
    %196 = vector.broadcast %cst_93 : f32 to vector<32x1xf32>
    %197 = arith.divf %195, %196 : vector<32x1xf32>
    %198 = vector.broadcast %197 : vector<32x1xf32> to vector<32x32xf32>
    %199 = arith.subf %189, %198 : vector<32x32xf32>
    %200 = arith.mulf %199, %199 : vector<32x32xf32>
    %cst_94 = arith.constant dense<0.000000e+00> : vector<32xf32>
    %201 = vector.multi_reduction <add>, %200, %cst_94 [1] : vector<32x32xf32> to vector<32xf32>
    %202 = vector.shape_cast %201 : vector<32xf32> to vector<32x1xf32>
    %cst_95 = arith.constant 3.200000e+01 : f32
    %203 = vector.broadcast %cst_95 : f32 to vector<32x1xf32>
    %204 = arith.divf %202, %203 : vector<32x1xf32>
    %205 = vector.broadcast %197 : vector<32x1xf32> to vector<32x32xf32>
    %206 = arith.subf %189, %205 : vector<32x32xf32>
    %cst_96 = arith.constant 9.99999974E-6 : f32
    %207 = vector.broadcast %cst_96 : f32 to vector<32x1xf32>
    %208 = arith.addf %204, %207 : vector<32x1xf32>
    %209 = math.rsqrt %208 : vector<32x1xf32>
    %210 = vector.broadcast %209 : vector<32x1xf32> to vector<32x32xf32>
    %211 = arith.mulf %206, %210 : vector<32x32xf32>
    %212 = vector.broadcast %191 : vector<1x32xf32> to vector<32x32xf32>
    %213 = arith.mulf %211, %212 : vector<32x32xf32>
    %214 = vector.broadcast %193 : vector<1x32xf32> to vector<32x32xf32>
    %215 = arith.addf %213, %214 : vector<32x32xf32>
    %c1 = arith.constant 1 : index
    %c0_97 = arith.constant 0 : index
    %c0_98 = arith.constant 0 : index
    %216 = vector.load %arg5[%c1, %c0_97, %c0_98] : memref<2x32x256xf32, #tpu.memory_space<vmem>>, vector<1x32x256xf32>
    %217 = vector.shape_cast %216 : vector<1x32x256xf32> to vector<32x256xf32>
    %cst_99 = arith.constant dense<0.000000e+00> : vector<32x256xf32>
    %218 = tpu.matmul %215, %217, %cst_99 {dimension_numbers = #tpu.dot_dimension_numbers<[1], [0], [0], [1], [0, 0, 1, 1], [], []>} : vector<32x32xf32>, vector<32x256xf32>, vector<32x256xf32> -> vector<32x256xf32>
    %c1_100 = arith.constant 1 : index
    %c0_101 = arith.constant 0 : index
    %c0_102 = arith.constant 0 : index
    %219 = vector.load %arg6[%c1_100, %c0_101, %c0_102] : memref<2x1x256xf32, #tpu.memory_space<vmem>>, vector<1x1x256xf32>
    %220 = vector.shape_cast %219 : vector<1x1x256xf32> to vector<1x256xf32>
    %221 = vector.broadcast %220 : vector<1x256xf32> to vector<32x256xf32>
    %222 = arith.addf %218, %221 : vector<32x256xf32>
    %223 = vector.extract_strided_slice %222 {offsets = [0, 0], sizes = [32, 64], strides = [1, 1]} : vector<32x256xf32> to vector<32x64xf32>
    %224 = vector.extract_strided_slice %222 {offsets = [0, 64], sizes = [32, 32], strides = [1, 1]} : vector<32x256xf32> to vector<32x32xf32>
    %225 = vector.extract_strided_slice %222 {offsets = [0, 128], sizes = [32, 128], strides = [1, 1]} : vector<32x256xf32> to vector<32x128xf32>
    %226 = arith.mulf %223, %223 : vector<32x64xf32>
    %cst_103 = arith.constant dense<0.000000e+00> : vector<32x128xf32>
    %227 = tpu.matmul %226, %5, %cst_103 {dimension_numbers = #tpu.dot_dimension_numbers<[1], [0], [0], [1], [0, 0, 1, 1], [], []>} : vector<32x64xf32>, vector<64x128xf32>, vector<32x128xf32> -> vector<32x128xf32>
    %228 = arith.addf %225, %227 : vector<32x128xf32>
    %229 = math.exp %228 : vector<32x128xf32>
    %230 = vector.extract_strided_slice %223 {offsets = [0, 0], sizes = [32, 8], strides = [1, 1]} : vector<32x64xf32> to vector<32x8xf32>
    %231 = vector.extract_strided_slice %223 {offsets = [0, 32], sizes = [32, 8], strides = [1, 1]} : vector<32x64xf32> to vector<32x8xf32>
    %232 = vector.extract_strided_slice %224 {offsets = [0, 0], sizes = [32, 8], strides = [1, 1]} : vector<32x32xf32> to vector<32x8xf32>
    %233 = vector.extract_strided_slice %229 {offsets = [0, 0], sizes = [32, 16], strides = [1, 1]} : vector<32x128xf32> to vector<32x16xf32>
    %234 = vector.extract_strided_slice %229 {offsets = [0, 64], sizes = [32, 16], strides = [1, 1]} : vector<32x128xf32> to vector<32x16xf32>
    %cst_104 = arith.constant dense<0.000000e+00> : vector<32x32xf32>
    %235 = tpu.matmul %230, %231, %cst_104 {dimension_numbers = #tpu.dot_dimension_numbers<[1], [1], [0], [0], [0, 0, 1, 0], [], []>} : vector<32x8xf32>, vector<32x8xf32>, vector<32x32xf32> -> vector<32x32xf32>
    %cst_105 = arith.constant dense<0.000000e+00> : vector<32x32xf32>
    %236 = tpu.matmul %233, %234, %cst_105 {dimension_numbers = #tpu.dot_dimension_numbers<[1], [1], [0], [0], [0, 0, 1, 0], [], []>} : vector<32x16xf32>, vector<32x16xf32>, vector<32x32xf32> -> vector<32x32xf32>
    %237 = math.exp %235 : vector<32x32xf32>
    %238 = arith.mulf %236, %4 : vector<32x32xf32>
    %239 = arith.select %3, %237, %238 : vector<32x32xi1>, vector<32x32xf32>
    %cst_106 = arith.constant dense<0.000000e+00> : vector<32xf32>
    %240 = vector.multi_reduction <add>, %239, %cst_106 [1] : vector<32x32xf32> to vector<32xf32>
    %241 = vector.shape_cast %240 : vector<32xf32> to vector<32x1xf32>
    %cst_107 = arith.constant 0.000000e+00 : f32
    %242 = vector.broadcast %cst_107 : f32 to vector<32x1xf32>
    %243 = arith.cmpf ogt, %241, %242 : vector<32x1xf32>
    %cst_108 = arith.constant 1.000000e+00 : f32
    %244 = vector.broadcast %cst_108 : f32 to vector<32x1xf32>
    %245 = arith.select %243, %241, %244 : vector<32x1xi1>, vector<32x1xf32>
    %cst_109 = arith.constant dense<0.000000e+00> : vector<32x8xf32>
    %246 = tpu.matmul %239, %232, %cst_109 {dimension_numbers = #tpu.dot_dimension_numbers<[1], [0], [0], [1], [0, 0, 1, 1], [], []>} : vector<32x32xf32>, vector<32x8xf32>, vector<32x8xf32> -> vector<32x8xf32>
    %247 = tpu.reciprocal %245 {approx = true} : vector<32x1xf32> -> vector<32x1xf32>
    %248 = vector.broadcast %247 : vector<32x1xf32> to vector<32x8xf32>
    %249 = arith.mulf %246, %248 : vector<32x8xf32>
    %250 = vector.extract_strided_slice %223 {offsets = [0, 8], sizes = [32, 8], strides = [1, 1]} : vector<32x64xf32> to vector<32x8xf32>
    %251 = vector.extract_strided_slice %223 {offsets = [0, 40], sizes = [32, 8], strides = [1, 1]} : vector<32x64xf32> to vector<32x8xf32>
    %252 = vector.extract_strided_slice %224 {offsets = [0, 8], sizes = [32, 8], strides = [1, 1]} : vector<32x32xf32> to vector<32x8xf32>
    %253 = vector.extract_strided_slice %229 {offsets = [0, 16], sizes = [32, 16], strides = [1, 1]} : vector<32x128xf32> to vector<32x16xf32>
    %254 = vector.extract_strided_slice %229 {offsets = [0, 80], sizes = [32, 16], strides = [1, 1]} : vector<32x128xf32> to vector<32x16xf32>
    %cst_110 = arith.constant dense<0.000000e+00> : vector<32x32xf32>
    %255 = tpu.matmul %250, %251, %cst_110 {dimension_numbers = #tpu.dot_dimension_numbers<[1], [1], [0], [0], [0, 0, 1, 0], [], []>} : vector<32x8xf32>, vector<32x8xf32>, vector<32x32xf32> -> vector<32x32xf32>
    %cst_111 = arith.constant dense<0.000000e+00> : vector<32x32xf32>
    %256 = tpu.matmul %253, %254, %cst_111 {dimension_numbers = #tpu.dot_dimension_numbers<[1], [1], [0], [0], [0, 0, 1, 0], [], []>} : vector<32x16xf32>, vector<32x16xf32>, vector<32x32xf32> -> vector<32x32xf32>
    %257 = math.exp %255 : vector<32x32xf32>
    %258 = arith.mulf %256, %4 : vector<32x32xf32>
    %259 = arith.select %3, %257, %258 : vector<32x32xi1>, vector<32x32xf32>
    %cst_112 = arith.constant dense<0.000000e+00> : vector<32xf32>
    %260 = vector.multi_reduction <add>, %259, %cst_112 [1] : vector<32x32xf32> to vector<32xf32>
    %261 = vector.shape_cast %260 : vector<32xf32> to vector<32x1xf32>
    %cst_113 = arith.constant 0.000000e+00 : f32
    %262 = vector.broadcast %cst_113 : f32 to vector<32x1xf32>
    %263 = arith.cmpf ogt, %261, %262 : vector<32x1xf32>
    %cst_114 = arith.constant 1.000000e+00 : f32
    %264 = vector.broadcast %cst_114 : f32 to vector<32x1xf32>
    %265 = arith.select %263, %261, %264 : vector<32x1xi1>, vector<32x1xf32>
    %cst_115 = arith.constant dense<0.000000e+00> : vector<32x8xf32>
    %266 = tpu.matmul %259, %252, %cst_115 {dimension_numbers = #tpu.dot_dimension_numbers<[1], [0], [0], [1], [0, 0, 1, 1], [], []>} : vector<32x32xf32>, vector<32x8xf32>, vector<32x8xf32> -> vector<32x8xf32>
    %267 = tpu.reciprocal %265 {approx = true} : vector<32x1xf32> -> vector<32x1xf32>
    %268 = vector.broadcast %267 : vector<32x1xf32> to vector<32x8xf32>
    %269 = arith.mulf %266, %268 : vector<32x8xf32>
    %270 = vector.extract_strided_slice %223 {offsets = [0, 16], sizes = [32, 8], strides = [1, 1]} : vector<32x64xf32> to vector<32x8xf32>
    %271 = vector.extract_strided_slice %223 {offsets = [0, 48], sizes = [32, 8], strides = [1, 1]} : vector<32x64xf32> to vector<32x8xf32>
    %272 = vector.extract_strided_slice %224 {offsets = [0, 16], sizes = [32, 8], strides = [1, 1]} : vector<32x32xf32> to vector<32x8xf32>
    %273 = vector.extract_strided_slice %229 {offsets = [0, 32], sizes = [32, 16], strides = [1, 1]} : vector<32x128xf32> to vector<32x16xf32>
    %274 = vector.extract_strided_slice %229 {offsets = [0, 96], sizes = [32, 16], strides = [1, 1]} : vector<32x128xf32> to vector<32x16xf32>
    %cst_116 = arith.constant dense<0.000000e+00> : vector<32x32xf32>
    %275 = tpu.matmul %270, %271, %cst_116 {dimension_numbers = #tpu.dot_dimension_numbers<[1], [1], [0], [0], [0, 0, 1, 0], [], []>} : vector<32x8xf32>, vector<32x8xf32>, vector<32x32xf32> -> vector<32x32xf32>
    %cst_117 = arith.constant dense<0.000000e+00> : vector<32x32xf32>
    %276 = tpu.matmul %273, %274, %cst_117 {dimension_numbers = #tpu.dot_dimension_numbers<[1], [1], [0], [0], [0, 0, 1, 0], [], []>} : vector<32x16xf32>, vector<32x16xf32>, vector<32x32xf32> -> vector<32x32xf32>
    %277 = math.exp %275 : vector<32x32xf32>
    %278 = arith.mulf %276, %4 : vector<32x32xf32>
    %279 = arith.select %3, %277, %278 : vector<32x32xi1>, vector<32x32xf32>
    %cst_118 = arith.constant dense<0.000000e+00> : vector<32xf32>
    %280 = vector.multi_reduction <add>, %279, %cst_118 [1] : vector<32x32xf32> to vector<32xf32>
    %281 = vector.shape_cast %280 : vector<32xf32> to vector<32x1xf32>
    %cst_119 = arith.constant 0.000000e+00 : f32
    %282 = vector.broadcast %cst_119 : f32 to vector<32x1xf32>
    %283 = arith.cmpf ogt, %281, %282 : vector<32x1xf32>
    %cst_120 = arith.constant 1.000000e+00 : f32
    %284 = vector.broadcast %cst_120 : f32 to vector<32x1xf32>
    %285 = arith.select %283, %281, %284 : vector<32x1xi1>, vector<32x1xf32>
    %cst_121 = arith.constant dense<0.000000e+00> : vector<32x8xf32>
    %286 = tpu.matmul %279, %272, %cst_121 {dimension_numbers = #tpu.dot_dimension_numbers<[1], [0], [0], [1], [0, 0, 1, 1], [], []>} : vector<32x32xf32>, vector<32x8xf32>, vector<32x8xf32> -> vector<32x8xf32>
    %287 = tpu.reciprocal %285 {approx = true} : vector<32x1xf32> -> vector<32x1xf32>
    %288 = vector.broadcast %287 : vector<32x1xf32> to vector<32x8xf32>
    %289 = arith.mulf %286, %288 : vector<32x8xf32>
    %290 = vector.extract_strided_slice %223 {offsets = [0, 24], sizes = [32, 8], strides = [1, 1]} : vector<32x64xf32> to vector<32x8xf32>
    %291 = vector.extract_strided_slice %223 {offsets = [0, 56], sizes = [32, 8], strides = [1, 1]} : vector<32x64xf32> to vector<32x8xf32>
    %292 = vector.extract_strided_slice %224 {offsets = [0, 24], sizes = [32, 8], strides = [1, 1]} : vector<32x32xf32> to vector<32x8xf32>
    %293 = vector.extract_strided_slice %229 {offsets = [0, 48], sizes = [32, 16], strides = [1, 1]} : vector<32x128xf32> to vector<32x16xf32>
    %294 = vector.extract_strided_slice %229 {offsets = [0, 112], sizes = [32, 16], strides = [1, 1]} : vector<32x128xf32> to vector<32x16xf32>
    %cst_122 = arith.constant dense<0.000000e+00> : vector<32x32xf32>
    %295 = tpu.matmul %290, %291, %cst_122 {dimension_numbers = #tpu.dot_dimension_numbers<[1], [1], [0], [0], [0, 0, 1, 0], [], []>} : vector<32x8xf32>, vector<32x8xf32>, vector<32x32xf32> -> vector<32x32xf32>
    %cst_123 = arith.constant dense<0.000000e+00> : vector<32x32xf32>
    %296 = tpu.matmul %293, %294, %cst_123 {dimension_numbers = #tpu.dot_dimension_numbers<[1], [1], [0], [0], [0, 0, 1, 0], [], []>} : vector<32x16xf32>, vector<32x16xf32>, vector<32x32xf32> -> vector<32x32xf32>
    %297 = math.exp %295 : vector<32x32xf32>
    %298 = arith.mulf %296, %4 : vector<32x32xf32>
    %299 = arith.select %3, %297, %298 : vector<32x32xi1>, vector<32x32xf32>
    %cst_124 = arith.constant dense<0.000000e+00> : vector<32xf32>
    %300 = vector.multi_reduction <add>, %299, %cst_124 [1] : vector<32x32xf32> to vector<32xf32>
    %301 = vector.shape_cast %300 : vector<32xf32> to vector<32x1xf32>
    %cst_125 = arith.constant 0.000000e+00 : f32
    %302 = vector.broadcast %cst_125 : f32 to vector<32x1xf32>
    %303 = arith.cmpf ogt, %301, %302 : vector<32x1xf32>
    %cst_126 = arith.constant 1.000000e+00 : f32
    %304 = vector.broadcast %cst_126 : f32 to vector<32x1xf32>
    %305 = arith.select %303, %301, %304 : vector<32x1xi1>, vector<32x1xf32>
    %cst_127 = arith.constant dense<0.000000e+00> : vector<32x8xf32>
    %306 = tpu.matmul %299, %292, %cst_127 {dimension_numbers = #tpu.dot_dimension_numbers<[1], [0], [0], [1], [0, 0, 1, 1], [], []>} : vector<32x32xf32>, vector<32x8xf32>, vector<32x8xf32> -> vector<32x8xf32>
    %307 = tpu.reciprocal %305 {approx = true} : vector<32x1xf32> -> vector<32x1xf32>
    %308 = vector.broadcast %307 : vector<32x1xf32> to vector<32x8xf32>
    %309 = arith.mulf %306, %308 : vector<32x8xf32>
    %310 = tpu.concatenate %249, %269, %289, %309 in 1 : vector<32x8xf32>, vector<32x8xf32>, vector<32x8xf32>, vector<32x8xf32> -> vector<32x32xf32>
    %c1_128 = arith.constant 1 : index
    %c0_129 = arith.constant 0 : index
    %c0_130 = arith.constant 0 : index
    %311 = vector.load %arg7[%c1_128, %c0_129, %c0_130] : memref<2x32x32xf32, #tpu.memory_space<vmem>>, vector<1x32x32xf32>
    %312 = vector.shape_cast %311 : vector<1x32x32xf32> to vector<32x32xf32>
    %cst_131 = arith.constant dense<0.000000e+00> : vector<32x32xf32>
    %313 = tpu.matmul %310, %312, %cst_131 {dimension_numbers = #tpu.dot_dimension_numbers<[1], [0], [0], [1], [0, 0, 1, 1], [], []>} : vector<32x32xf32>, vector<32x32xf32>, vector<32x32xf32> -> vector<32x32xf32>
    %c1_132 = arith.constant 1 : index
    %c0_133 = arith.constant 0 : index
    %c0_134 = arith.constant 0 : index
    %314 = vector.load %arg8[%c1_132, %c0_133, %c0_134] : memref<2x1x32xf32, #tpu.memory_space<vmem>>, vector<1x1x32xf32>
    %315 = vector.shape_cast %314 : vector<1x1x32xf32> to vector<1x32xf32>
    %316 = vector.broadcast %315 : vector<1x32xf32> to vector<32x32xf32>
    %317 = arith.addf %313, %316 : vector<32x32xf32>
    %318 = arith.addf %215, %317 : vector<32x32xf32>
    %c1_135 = arith.constant 1 : index
    %c0_136 = arith.constant 0 : index
    %c0_137 = arith.constant 0 : index
    %319 = vector.load %arg9[%c1_135, %c0_136, %c0_137] : memref<2x1x32xf32, #tpu.memory_space<vmem>>, vector<1x1x32xf32>
    %320 = vector.shape_cast %319 : vector<1x1x32xf32> to vector<1x32xf32>
    %c1_138 = arith.constant 1 : index
    %c0_139 = arith.constant 0 : index
    %c0_140 = arith.constant 0 : index
    %321 = vector.load %arg10[%c1_138, %c0_139, %c0_140] : memref<2x1x32xf32, #tpu.memory_space<vmem>>, vector<1x1x32xf32>
    %322 = vector.shape_cast %321 : vector<1x1x32xf32> to vector<1x32xf32>
    %cst_141 = arith.constant dense<0.000000e+00> : vector<32xf32>
    %323 = vector.multi_reduction <add>, %318, %cst_141 [1] : vector<32x32xf32> to vector<32xf32>
    %324 = vector.shape_cast %323 : vector<32xf32> to vector<32x1xf32>
    %cst_142 = arith.constant 3.200000e+01 : f32
    %325 = vector.broadcast %cst_142 : f32 to vector<32x1xf32>
    %326 = arith.divf %324, %325 : vector<32x1xf32>
    %327 = vector.broadcast %326 : vector<32x1xf32> to vector<32x32xf32>
    %328 = arith.subf %318, %327 : vector<32x32xf32>
    %329 = arith.mulf %328, %328 : vector<32x32xf32>
    %cst_143 = arith.constant dense<0.000000e+00> : vector<32xf32>
    %330 = vector.multi_reduction <add>, %329, %cst_143 [1] : vector<32x32xf32> to vector<32xf32>
    %331 = vector.shape_cast %330 : vector<32xf32> to vector<32x1xf32>
    %cst_144 = arith.constant 3.200000e+01 : f32
    %332 = vector.broadcast %cst_144 : f32 to vector<32x1xf32>
    %333 = arith.divf %331, %332 : vector<32x1xf32>
    %334 = vector.broadcast %326 : vector<32x1xf32> to vector<32x32xf32>
    %335 = arith.subf %318, %334 : vector<32x32xf32>
    %cst_145 = arith.constant 9.99999974E-6 : f32
    %336 = vector.broadcast %cst_145 : f32 to vector<32x1xf32>
    %337 = arith.addf %333, %336 : vector<32x1xf32>
    %338 = math.rsqrt %337 : vector<32x1xf32>
    %339 = vector.broadcast %338 : vector<32x1xf32> to vector<32x32xf32>
    %340 = arith.mulf %335, %339 : vector<32x32xf32>
    %341 = vector.broadcast %320 : vector<1x32xf32> to vector<32x32xf32>
    %342 = arith.mulf %340, %341 : vector<32x32xf32>
    %343 = vector.broadcast %322 : vector<1x32xf32> to vector<32x32xf32>
    %344 = arith.addf %342, %343 : vector<32x32xf32>
    %c1_146 = arith.constant 1 : index
    %c0_147 = arith.constant 0 : index
    %c0_148 = arith.constant 0 : index
    %345 = vector.load %arg11[%c1_146, %c0_147, %c0_148] : memref<2x32x64xf32, #tpu.memory_space<vmem>>, vector<1x32x64xf32>
    %346 = vector.shape_cast %345 : vector<1x32x64xf32> to vector<32x64xf32>
    %cst_149 = arith.constant dense<0.000000e+00> : vector<32x64xf32>
    %347 = tpu.matmul %344, %346, %cst_149 {dimension_numbers = #tpu.dot_dimension_numbers<[1], [0], [0], [1], [0, 0, 1, 1], [], []>} : vector<32x32xf32>, vector<32x64xf32>, vector<32x64xf32> -> vector<32x64xf32>
    %c1_150 = arith.constant 1 : index
    %c0_151 = arith.constant 0 : index
    %c0_152 = arith.constant 0 : index
    %348 = vector.load %arg12[%c1_150, %c0_151, %c0_152] : memref<2x1x64xf32, #tpu.memory_space<vmem>>, vector<1x1x64xf32>
    %349 = vector.shape_cast %348 : vector<1x1x64xf32> to vector<1x64xf32>
    %350 = vector.broadcast %349 : vector<1x64xf32> to vector<32x64xf32>
    %351 = arith.addf %347, %350 : vector<32x64xf32>
    %cst_153 = arith.constant 5.000000e-01 : f32
    %352 = vector.broadcast %cst_153 : f32 to vector<32x64xf32>
    %353 = arith.mulf %352, %351 : vector<32x64xf32>
    %cst_154 = arith.constant 0.707106769 : f32
    %354 = vector.broadcast %cst_154 : f32 to vector<32x64xf32>
    %355 = arith.mulf %351, %354 : vector<32x64xf32>
    %cst_155 = arith.constant 0.000000e+00 : f32
    %356 = vector.broadcast %cst_155 : f32 to vector<32x64xf32>
    %357 = arith.cmpf oge, %355, %356 : vector<32x64xf32>
    %cst_156 = arith.constant 1.000000e+00 : f32
    %cst_157 = arith.constant -1.000000e+00 : f32
    %358 = vector.broadcast %cst_156 : f32 to vector<32x64xf32>
    %359 = vector.broadcast %cst_157 : f32 to vector<32x64xf32>
    %360 = arith.select %357, %358, %359 : vector<32x64xi1>, vector<32x64xf32>
    %361 = math.absf %355 : vector<32x64xf32>
    %cst_158 = arith.constant 0.327591091 : f32
    %362 = vector.broadcast %cst_158 : f32 to vector<32x64xf32>
    %363 = arith.mulf %362, %361 : vector<32x64xf32>
    %cst_159 = arith.constant 1.000000e+00 : f32
    %364 = vector.broadcast %cst_159 : f32 to vector<32x64xf32>
    %365 = arith.addf %364, %363 : vector<32x64xf32>
    %366 = tpu.reciprocal %365 {approx = true} : vector<32x64xf32> -> vector<32x64xf32>
    %cst_160 = arith.constant 1.06140542 : f32
    %367 = vector.broadcast %cst_160 : f32 to vector<32x64xf32>
    %368 = arith.mulf %367, %366 : vector<32x64xf32>
    %cst_161 = arith.constant -1.45315206 : f32
    %369 = vector.broadcast %cst_161 : f32 to vector<32x64xf32>
    %370 = arith.addf %368, %369 : vector<32x64xf32>
    %371 = arith.mulf %370, %366 : vector<32x64xf32>
    %cst_162 = arith.constant 1.42141378 : f32
    %372 = vector.broadcast %cst_162 : f32 to vector<32x64xf32>
    %373 = arith.addf %371, %372 : vector<32x64xf32>
    %374 = arith.mulf %373, %366 : vector<32x64xf32>
    %cst_163 = arith.constant -0.284496725 : f32
    %375 = vector.broadcast %cst_163 : f32 to vector<32x64xf32>
    %376 = arith.addf %374, %375 : vector<32x64xf32>
    %377 = arith.mulf %376, %366 : vector<32x64xf32>
    %cst_164 = arith.constant 0.254829586 : f32
    %378 = vector.broadcast %cst_164 : f32 to vector<32x64xf32>
    %379 = arith.addf %377, %378 : vector<32x64xf32>
    %380 = arith.mulf %379, %366 : vector<32x64xf32>
    %cst_165 = arith.constant 0.000000e+00 : f32
    %381 = vector.broadcast %cst_165 : f32 to vector<32x64xf32>
    %382 = arith.subf %381, %361 : vector<32x64xf32>
    %383 = arith.mulf %382, %361 : vector<32x64xf32>
    %384 = math.exp %383 : vector<32x64xf32>
    %385 = arith.mulf %380, %384 : vector<32x64xf32>
    %cst_166 = arith.constant 1.000000e+00 : f32
    %386 = vector.broadcast %cst_166 : f32 to vector<32x64xf32>
    %387 = arith.subf %386, %385 : vector<32x64xf32>
    %388 = arith.mulf %360, %387 : vector<32x64xf32>
    %cst_167 = arith.constant 1.000000e+00 : f32
    %389 = vector.broadcast %cst_167 : f32 to vector<32x64xf32>
    %390 = arith.addf %389, %388 : vector<32x64xf32>
    %391 = arith.mulf %353, %390 : vector<32x64xf32>
    %c1_168 = arith.constant 1 : index
    %c0_169 = arith.constant 0 : index
    %c0_170 = arith.constant 0 : index
    %392 = vector.load %arg13[%c1_168, %c0_169, %c0_170] : memref<2x64x32xf32, #tpu.memory_space<vmem>>, vector<1x64x32xf32>
    %393 = vector.shape_cast %392 : vector<1x64x32xf32> to vector<64x32xf32>
    %cst_171 = arith.constant dense<0.000000e+00> : vector<32x32xf32>
    %394 = tpu.matmul %391, %393, %cst_171 {dimension_numbers = #tpu.dot_dimension_numbers<[1], [0], [0], [1], [0, 0, 1, 1], [], []>} : vector<32x64xf32>, vector<64x32xf32>, vector<32x32xf32> -> vector<32x32xf32>
    %c1_172 = arith.constant 1 : index
    %c0_173 = arith.constant 0 : index
    %c0_174 = arith.constant 0 : index
    %395 = vector.load %arg14[%c1_172, %c0_173, %c0_174] : memref<2x1x32xf32, #tpu.memory_space<vmem>>, vector<1x1x32xf32>
    %396 = vector.shape_cast %395 : vector<1x1x32xf32> to vector<1x32xf32>
    %397 = vector.broadcast %396 : vector<1x32xf32> to vector<32x32xf32>
    %398 = arith.addf %394, %397 : vector<32x32xf32>
    %399 = arith.addf %344, %398 : vector<32x32xf32>
    %c1_175 = arith.constant 1 : index
    %c0_176 = arith.constant 0 : index
    %c0_177 = arith.constant 0 : index
    %400 = vector.load %arg15[%c1_175, %c0_176, %c0_177] : memref<2x1x32xf32, #tpu.memory_space<vmem>>, vector<1x1x32xf32>
    %401 = vector.shape_cast %400 : vector<1x1x32xf32> to vector<1x32xf32>
    %c1_178 = arith.constant 1 : index
    %c0_179 = arith.constant 0 : index
    %c0_180 = arith.constant 0 : index
    %402 = vector.load %arg16[%c1_178, %c0_179, %c0_180] : memref<2x1x32xf32, #tpu.memory_space<vmem>>, vector<1x1x32xf32>
    %403 = vector.shape_cast %402 : vector<1x1x32xf32> to vector<1x32xf32>
    %cst_181 = arith.constant dense<0.000000e+00> : vector<32xf32>
    %404 = vector.multi_reduction <add>, %399, %cst_181 [1] : vector<32x32xf32> to vector<32xf32>
    %405 = vector.shape_cast %404 : vector<32xf32> to vector<32x1xf32>
    %cst_182 = arith.constant 3.200000e+01 : f32
    %406 = vector.broadcast %cst_182 : f32 to vector<32x1xf32>
    %407 = arith.divf %405, %406 : vector<32x1xf32>
    %408 = vector.broadcast %407 : vector<32x1xf32> to vector<32x32xf32>
    %409 = arith.subf %399, %408 : vector<32x32xf32>
    %410 = arith.mulf %409, %409 : vector<32x32xf32>
    %cst_183 = arith.constant dense<0.000000e+00> : vector<32xf32>
    %411 = vector.multi_reduction <add>, %410, %cst_183 [1] : vector<32x32xf32> to vector<32xf32>
    %412 = vector.shape_cast %411 : vector<32xf32> to vector<32x1xf32>
    %cst_184 = arith.constant 3.200000e+01 : f32
    %413 = vector.broadcast %cst_184 : f32 to vector<32x1xf32>
    %414 = arith.divf %412, %413 : vector<32x1xf32>
    %415 = vector.broadcast %407 : vector<32x1xf32> to vector<32x32xf32>
    %416 = arith.subf %399, %415 : vector<32x32xf32>
    %cst_185 = arith.constant 9.99999974E-6 : f32
    %417 = vector.broadcast %cst_185 : f32 to vector<32x1xf32>
    %418 = arith.addf %414, %417 : vector<32x1xf32>
    %419 = math.rsqrt %418 : vector<32x1xf32>
    %420 = vector.broadcast %419 : vector<32x1xf32> to vector<32x32xf32>
    %421 = arith.mulf %416, %420 : vector<32x32xf32>
    %422 = vector.broadcast %401 : vector<1x32xf32> to vector<32x32xf32>
    %423 = arith.mulf %421, %422 : vector<32x32xf32>
    %424 = vector.broadcast %403 : vector<1x32xf32> to vector<32x32xf32>
    %425 = arith.addf %423, %424 : vector<32x32xf32>
    %c0_186 = arith.constant 0 : index
    %c0_187 = arith.constant 0 : index
    %426 = vector.load %arg17[%c0_186, %c0_187] : memref<32x32xf32, #tpu.memory_space<vmem>>, vector<32x32xf32>
    tpu.vector_store %arg17[%c0_186, %c0_187], %425 {strides = array<i32>} : memref<32x32xf32, #tpu.memory_space<vmem>>, vector<32x32xf32>,
    return
  }
  func.func @transform_0(%arg0: i32) -> (i32, i32) {
    %c0_i32 = arith.constant 0 : i32
    %c0_i32_0 = arith.constant 0 : i32
    %c0_i32_1 = arith.constant 0 : i32
    return %c0_i32, %c0_i32_0 : i32, i32
  }
  func.func @transform_1(%arg0: i32) -> (i32, i32) {
    %c0_i32 = arith.constant 0 : i32
    %c0_i32_0 = arith.constant 0 : i32
    %c0_i32_1 = arith.constant 0 : i32
    return %c0_i32, %c0_i32_0 : i32, i32
  }
  func.func @transform_2(%arg0: i32) -> (i32, i32) {
    %c0_i32 = arith.constant 0 : i32
    %c0_i32_0 = arith.constant 0 : i32
    %c0_i32_1 = arith.constant 0 : i32
    return %c0_i32, %c0_i32_0 : i32, i32
  }
  func.func @transform_3(%arg0: i32) -> (i32, i32) {
    %c0_i32 = arith.constant 0 : i32
    %c0_i32_0 = arith.constant 0 : i32
    %c0_i32_1 = arith.constant 0 : i32
    return %c0_i32, %c0_i32_0 : i32, i32
  }
  func.func @transform_4(%arg0: i32) -> (i32, i32, i32) {
    %c0_i32 = arith.constant 0 : i32
    %c0_i32_0 = arith.constant 0 : i32
    %c0_i32_1 = arith.constant 0 : i32
    %c0_i32_2 = arith.constant 0 : i32
    return %c0_i32, %c0_i32_0, %c0_i32_1 : i32, i32, i32
  }
  func.func @transform_5(%arg0: i32) -> (i32, i32, i32) {
    %c0_i32 = arith.constant 0 : i32
    %c0_i32_0 = arith.constant 0 : i32
    %c0_i32_1 = arith.constant 0 : i32
    %c0_i32_2 = arith.constant 0 : i32
    return %c0_i32, %c0_i32_0, %c0_i32_1 : i32, i32, i32
  }
  func.func @transform_6(%arg0: i32) -> (i32, i32, i32) {
    %c0_i32 = arith.constant 0 : i32
    %c0_i32_0 = arith.constant 0 : i32
    %c0_i32_1 = arith.constant 0 : i32
    %c0_i32_2 = arith.constant 0 : i32
    return %c0_i32, %c0_i32_0, %c0_i32_1 : i32, i32, i32
  }
  func.func @transform_7(%arg0: i32) -> (i32, i32, i32) {
    %c0_i32 = arith.constant 0 : i32
    %c0_i32_0 = arith.constant 0 : i32
    %c0_i32_1 = arith.constant 0 : i32
    %c0_i32_2 = arith.constant 0 : i32
    return %c0_i32, %c0_i32_0, %c0_i32_1 : i32, i32, i32
  }
  func.func @transform_8(%arg0: i32) -> (i32, i32, i32) {
    %c0_i32 = arith.constant 0 : i32
    %c0_i32_0 = arith.constant 0 : i32
    %c0_i32_1 = arith.constant 0 : i32
    %c0_i32_2 = arith.constant 0 : i32
    return %c0_i32, %c0_i32_0, %c0_i32_1 : i32, i32, i32
  }
  func.func @transform_9(%arg0: i32) -> (i32, i32, i32) {
    %c0_i32 = arith.constant 0 : i32
    %c0_i32_0 = arith.constant 0 : i32
    %c0_i32_1 = arith.constant 0 : i32
    %c0_i32_2 = arith.constant 0 : i32
    return %c0_i32, %c0_i32_0, %c0_i32_1 : i32, i32, i32
  }
  func.func @transform_10(%arg0: i32) -> (i32, i32, i32) {
    %c0_i32 = arith.constant 0 : i32
    %c0_i32_0 = arith.constant 0 : i32
    %c0_i32_1 = arith.constant 0 : i32
    %c0_i32_2 = arith.constant 0 : i32
    return %c0_i32, %c0_i32_0, %c0_i32_1 : i32, i32, i32
  }
  func.func @transform_11(%arg0: i32) -> (i32, i32, i32) {
    %c0_i32 = arith.constant 0 : i32
    %c0_i32_0 = arith.constant 0 : i32
    %c0_i32_1 = arith.constant 0 : i32
    %c0_i32_2 = arith.constant 0 : i32
    return %c0_i32, %c0_i32_0, %c0_i32_1 : i32, i32, i32
  }
  func.func @transform_12(%arg0: i32) -> (i32, i32, i32) {
    %c0_i32 = arith.constant 0 : i32
    %c0_i32_0 = arith.constant 0 : i32
    %c0_i32_1 = arith.constant 0 : i32
    %c0_i32_2 = arith.constant 0 : i32
    return %c0_i32, %c0_i32_0, %c0_i32_1 : i32, i32, i32
  }
  func.func @transform_13(%arg0: i32) -> (i32, i32, i32) {
    %c0_i32 = arith.constant 0 : i32
    %c0_i32_0 = arith.constant 0 : i32
    %c0_i32_1 = arith.constant 0 : i32
    %c0_i32_2 = arith.constant 0 : i32
    return %c0_i32, %c0_i32_0, %c0_i32_1 : i32, i32, i32
  }
  func.func @transform_14(%arg0: i32) -> (i32, i32, i32) {
    %c0_i32 = arith.constant 0 : i32
    %c0_i32_0 = arith.constant 0 : i32
    %c0_i32_1 = arith.constant 0 : i32
    %c0_i32_2 = arith.constant 0 : i32
    return %c0_i32, %c0_i32_0, %c0_i32_1 : i32, i32, i32
  }
  func.func @transform_15(%arg0: i32) -> (i32, i32, i32) {
    %c0_i32 = arith.constant 0 : i32
    %c0_i32_0 = arith.constant 0 : i32
    %c0_i32_1 = arith.constant 0 : i32
    %c0_i32_2 = arith.constant 0 : i32
    return %c0_i32, %c0_i32_0, %c0_i32_1 : i32, i32, i32
  }
  func.func @transform_16(%arg0: i32) -> (i32, i32) {
    %c0_i32 = arith.constant 0 : i32
    %c0_i32_0 = arith.constant 0 : i32
    %c0_i32_1 = arith.constant 0 : i32
    return %c0_i32, %c0_i32_0 : i32, i32
  }
}

</mosaic_0001>

<llo_original>
// kernel: ge.8
$region0: #{ge.8}
  %s0 = inlined_call_operand.vmem [shape: s32[2,16], index: 0, kind: input, shape index: {}]
  %s1 = inlined_call_operand.vmem [shape: s32[32], index: 1, kind: output, shape index: {}]
  $region1: #{ge.8} parent=0
    #allocation0 [shape = 'u8[4096]{0}', space=vmem, size = 0x1000, scoped, tag = 'scoped mem for output reshape']
    #allocation1 [shape = 'u8[4096]{0}', space=vmem, size = 0x1000, scoped, tag = 'scoped mem for input reshape']
    %s3 = sshllo.u32 0, 2
    %v4 = vld [vmem:[%s0] sm:%s3]
    %5 = vst [vmem:[#allocation1] sm:%s3] %v4
    %v6 = vld [vmem:[#allocation1] sm:$0x1]
    %vm7 = vcmask 130048
    %8 = vst.msk [vmem:[#allocation0] sm:$0x1] %vm7, %v6
    %s9 = scalar_lea.vmem [#allocation1], 1
    %v10 = vld [vmem:[%s9] sm:$0x1]
    %11 = vrot.lane.b32.xlu0 %v10, 16
    %v12 = vpop.permute.xlu0 %11
    %vm13 = vcmask 261248
    %14 = vst.msk [vmem:[#allocation0] sm:$0x1] %vm13, %v12
    %s16 = sshllo.u32 0, 1
    %v18 = vld [vmem:[#allocation0] sm:%s16]
    %s19 = sshllo.u32 0, 1
    %20 = vst [vmem:[%s1] sm:%s19] %v18

// kernel: backbone_forward.1
$region0: #{backbone_forward.1}
  #allocation0 [shape = 'u32[]', space=smem, size = 0x4, offset = 0x4, fixed_abs, tag = 'smem constant byte address 0x4 - core index']
  #allocation1 [shape = 'u32[144,128]{1,0:T(1,128)}', space=vmem, size = 0x12000, scoped, tag = 'internal scratch']
  %s0 = inlined_call_operand.vmem [shape: f32[32,32], index: 0, kind: input, shape index: {}]
  %s1 = inlined_call_operand.vmem [shape: f32[32,32], index: 1, kind: input, shape index: {}]
  %s2 = inlined_call_operand.vmem [shape: f32[32,32], index: 2, kind: input, shape index: {}]
  %s3 = inlined_call_operand.vmem [shape: f32[64,128], index: 3, kind: input, shape index: {}]
  %s4 = inlined_call_operand.vmem [shape: f32[2,32,256], index: 4, kind: input, shape index: {}]
  %s5 = inlined_call_operand.hbm [shape: f32[2,1,256], index: 5, kind: input, shape index: {}]
  %s6 = inlined_call_operand.vmem [shape: f32[2,32,32], index: 6, kind: input, shape index: {}]
  %s7 = inlined_call_operand.hbm [shape: f32[2,1,32], index: 7, kind: input, shape index: {}]
  %s8 = inlined_call_operand.hbm [shape: f32[2,1,32], index: 8, kind: input, shape index: {}]
  %s9 = inlined_call_operand.hbm [shape: f32[2,1,32], index: 9, kind: input, shape index: {}]
  %s10 = inlined_call_operand.hbm [shape: f32[2,32,64], index: 10, kind: input, shape index: {}]
  %s11 = inlined_call_operand.hbm [shape: f32[2,1,64], index: 11, kind: input, shape index: {}]
  %s12 = inlined_call_operand.vmem [shape: f32[2,64,32], index: 12, kind: input, shape index: {}]
  %s13 = inlined_call_operand.hbm [shape: f32[2,1,32], index: 13, kind: input, shape index: {}]
  %s14 = inlined_call_operand.hbm [shape: f32[2,1,32], index: 14, kind: input, shape index: {}]
  %s15 = inlined_call_operand.hbm [shape: f32[2,1,32], index: 15, kind: input, shape index: {}]
  %s16 = inlined_call_operand.hbm [shape: f32[32,32], index: 16, kind: output, shape index: {}]
  %s17 = sld [smem:[#allocation0]]
  $region110: #{backbone_forward.1} parent=0
    _
  %s19 = ssub.s32 1, %s17
  %s20 = scalar_select 0, %s19, %s17
  $region1: #{backbone_forward.1} parent=0
    #allocation2 [shape = 'u8[2048]{0}', space=vmem, size = 0x800, scoped, tag = 'input window, operand 5, single buffered']
    #allocation3 [shape = 's32[1]{0}', space=sflag, size = 0x4, scoped, tag = 'scoped memory for backbone_forward.1']
    #allocation4 [shape = 's32[1]{0}', space=sflag, size = 0x4, scoped, tag = 'scoped memory for backbone_forward.1']
    #allocation5 [shape = 'u8[1024]{0}', space=vmem, size = 0x400, scoped, tag = 'input window, operand 7, single buffered']
    #allocation6 [shape = 's32[1]{0}', space=sflag, size = 0x4, scoped, tag = 'scoped memory for backbone_forward.1']
    #allocation7 [shape = 'u8[1024]{0}', space=vmem, size = 0x400, scoped, tag = 'input window, operand 8, single buffered']
    #allocation8 [shape = 'u8[1024]{0}', space=vmem, size = 0x400, scoped, tag = 'input window, operand 9, single buffered']
    #allocation9 [shape = 's32[1]{0}', space=sflag, size = 0x4, scoped, tag = 'scoped memory for backbone_forward.1']
    #allocation10 [shape = 'u8[32768]{0}', space=vmem, size = 0x8000, scoped, tag = 'input window, operand 10, single buffered']
    #allocation11 [shape = 'u8[1024]{0}', space=vmem, size = 0x400, scoped, tag = 'input window, operand 11, single buffered']
    #allocation12 [shape = 's32[1]{0}', space=sflag, size = 0x4, scoped, tag = 'scoped memory for backbone_forward.1']
    #allocation13 [shape = 'u8[1024]{0}', space=vmem, size = 0x400, scoped, tag = 'input window, operand 13, single buffered']
    #allocation14 [shape = 'u8[1024]{0}', space=vmem, size = 0x400, scoped, tag = 'input window, operand 14, single buffered']
    #allocation15 [shape = 's32[1]{0}', space=sflag, size = 0x4, scoped, tag = 'scoped memory for backbone_forward.1']
    #allocation16 [shape = 'u8[1024]{0}', space=vmem, size = 0x400, scoped, tag = 'input window, operand 15, single buffered']
    #allocation17 [shape = 'u8[16384]{0}', space=vmem, size = 0x4000, scoped, tag = 'output window, operand 0, single buffered']
    %21 = vsyncpa [#allocation3], 0
    %22 = vsyncpa [#allocation6], 0
    %23 = vsyncpa [#allocation9], 0
    %24 = vsyncpa [#allocation12], 0
    %25 = vsyncpa [#allocation15], 0
    %26 = vsyncpa [#allocation4], 0
    // Predicated region
    $region2: #{backbone_forward.1} parent=1 // pred_check
      _
    $region3: #{backbone_forward.1} parent=1 // pred_check_branch
      %28 = sbr.rel (0) target = $region5
    $region4: #{backbone_forward.1} parent=1 // pred_region
      _
    $region5: #{backbone_forward.1} parent=1 // pred_fallthru
      _
    // Predicated region
    $region6: #{backbone_forward.1} parent=1 // pred_check
      _
    $region7: #{backbone_forward.1} parent=1 // pred_check_branch
      %30 = sbr.rel (0) target = $region9
    $region8: #{backbone_forward.1} parent=1 // pred_region
      _
    $region9: #{backbone_forward.1} parent=1 // pred_fallthru
      _
    // Predicated region
    $region10: #{backbone_forward.1} parent=1 // pred_check
      _
    $region11: #{backbone_forward.1} parent=1 // pred_check_branch
      %32 = sbr.rel (0) target = $region13
    $region12: #{backbone_forward.1} parent=1 // pred_region
      _
    $region13: #{backbone_forward.1} parent=1 // pred_fallthru
      _
    // Predicated region
    $region14: #{backbone_forward.1} parent=1 // pred_check
      _
    $region15: #{backbone_forward.1} parent=1 // pred_check_branch
      %34 = sbr.rel (0) target = $region17
    $region16: #{backbone_forward.1} parent=1 // pred_region
      _
    $region17: #{backbone_forward.1} parent=1 // pred_fallthru
      _
    // Predicated region
    $region18: #{backbone_forward.1} parent=1 // pred_check
      _
    $region19: #{backbone_forward.1} parent=1 // pred_check_branch
      %36 = sbr.rel (0) target = $region21
    $region20: #{backbone_forward.1} parent=1 // pred_region
      _
    $region21: #{backbone_forward.1} parent=1 // pred_fallthru
      _
    // Predicated region
    $region22: #{backbone_forward.1} parent=1 // pred_check
      _
    $region23: #{backbone_forward.1} parent=1 // pred_check_branch
      %38 = sbr.rel (0) target = $region25
    $region24: #{backbone_forward.1} parent=1 // pred_region
      %s40 = ssub.s32 64, 64
      %41 = vsyncadd [#allocation3], %s40
      %s42 = sshll.u32 [#allocation2], 4
      %s43 = int_to_ptr.vmem [resolvable:$true] %s42
      %48 = dma.hbm_to_vmem [thread:$0]  %s5, 64, %s43, [#allocation3], 32, 32, 2
    $region25: #{backbone_forward.1} parent=1 // pred_fallthru
      _
    // Predicated region
    $region26: #{backbone_forward.1} parent=1 // pred_check
      _
    $region27: #{backbone_forward.1} parent=1 // pred_check_branch
      %50 = sbr.rel (0) target = $region29
    $region28: #{backbone_forward.1} parent=1 // pred_region
      _
    $region29: #{backbone_forward.1} parent=1 // pred_fallthru
      _
    // Predicated region
    $region30: #{backbone_forward.1} parent=1 // pred_check
      _
    $region31: #{backbone_forward.1} parent=1 // pred_check_branch
      %52 = sbr.rel (0) target = $region33
    $region32: #{backbone_forward.1} parent=1 // pred_region
      %s54 = ssub.s32 32, 32
      %55 = vsyncadd [#allocation6], %s54
      %s56 = sshll.u32 [#allocation5], 4
      %s57 = int_to_ptr.vmem [resolvable:$true] %s56
      %62 = dma.hbm_to_vmem [thread:$0]  %s7, 32, %s57, [#allocation6], 16, 16, 1
    $region33: #{backbone_forward.1} parent=1 // pred_fallthru
      _
    // Predicated region
    $region34: #{backbone_forward.1} parent=1 // pred_check
      _
    $region35: #{backbone_forward.1} parent=1 // pred_check_branch
      %64 = sbr.rel (0) target = $region37
    $region36: #{backbone_forward.1} parent=1 // pred_region
      %s66 = ssub.s32 32, 32
      %67 = vsyncadd [#allocation6], %s66
      %s68 = sshll.u32 [#allocation7], 4
      %s69 = int_to_ptr.vmem [resolvable:$true] %s68
      %74 = dma.hbm_to_vmem [thread:$0]  %s8, 32, %s69, [#allocation6], 16, 16, 1
    $region37: #{backbone_forward.1} parent=1 // pred_fallthru
      _
    // Predicated region
    $region38: #{backbone_forward.1} parent=1 // pred_check
      _
    $region39: #{backbone_forward.1} parent=1 // pred_check_branch
      %76 = sbr.rel (0) target = $region41
    $region40: #{backbone_forward.1} parent=1 // pred_region
      %s78 = ssub.s32 32, 32
      %79 = vsyncadd [#allocation9], %s78
      %s80 = sshll.u32 [#allocation8], 4
      %s81 = int_to_ptr.vmem [resolvable:$true] %s80
      %86 = dma.hbm_to_vmem [thread:$0]  %s9, 32, %s81, [#allocation9], 16, 16, 1
    $region41: #{backbone_forward.1} parent=1 // pred_fallthru
      _
    // Predicated region
    $region42: #{backbone_forward.1} parent=1 // pred_check
      _
    $region43: #{backbone_forward.1} parent=1 // pred_check_branch
      %88 = sbr.rel (0) target = $region45
    $region44: #{backbone_forward.1} parent=1 // pred_region
      %s90 = ssub.s32 1024, 1024
      %91 = vsyncadd [#allocation9], %s90
      %s92 = sshll.u32 [#allocation10], 4
      %s93 = int_to_ptr.vmem [resolvable:$true] %s92
      %98 = dma.hbm_to_vmem [thread:$0]  %s10, 1024, %s93, [#allocation9], 128, 128, 8
    $region45: #{backbone_forward.1} parent=1 // pred_fallthru
      _
    // Predicated region
    $region46: #{backbone_forward.1} parent=1 // pred_check
      _
    $region47: #{backbone_forward.1} parent=1 // pred_check_branch
      %100 = sbr.rel (0) target = $region49
    $region48: #{backbone_forward.1} parent=1 // pred_region
      %s102 = ssub.s32 32, 32
      %103 = vsyncadd [#allocation12], %s102
      %s104 = sshll.u32 [#allocation11], 4
      %s105 = int_to_ptr.vmem [resolvable:$true] %s104
      %110 = dma.hbm_to_vmem [thread:$0]  %s11, 32, %s105, [#allocation12], 16, 16, 1
    $region49: #{backbone_forward.1} parent=1 // pred_fallthru
      _
    // Predicated region
    $region50: #{backbone_forward.1} parent=1 // pred_check
      _
    $region51: #{backbone_forward.1} parent=1 // pred_check_branch
      %112 = sbr.rel (0) target = $region53
    $region52: #{backbone_forward.1} parent=1 // pred_region
      _
    $region53: #{backbone_forward.1} parent=1 // pred_fallthru
      _
    // Predicated region
    $region54: #{backbone_forward.1} parent=1 // pred_check
      _
    $region55: #{backbone_forward.1} parent=1 // pred_check_branch
      %114 = sbr.rel (0) target = $region57
    $region56: #{backbone_forward.1} parent=1 // pred_region
      %s116 = ssub.s32 32, 32
      %117 = vsyncadd [#allocation12], %s116
      %s118 = sshll.u32 [#allocation13], 4
      %s119 = int_to_ptr.vmem [resolvable:$true] %s118
      %124 = dma.hbm_to_vmem [thread:$0]  %s13, 32, %s119, [#allocation12], 16, 16, 1
    $region57: #{backbone_forward.1} parent=1 // pred_fallthru
      _
    // Predicated region
    $region58: #{backbone_forward.1} parent=1 // pred_check
      _
    $region59: #{backbone_forward.1} parent=1 // pred_check_branch
      %126 = sbr.rel (0) target = $region61
    $region60: #{backbone_forward.1} parent=1 // pred_region
      %s128 = ssub.s32 32, 32
      %129 = vsyncadd [#allocation15], %s128
      %s130 = sshll.u32 [#allocation14], 4
      %s131 = int_to_ptr.vmem [resolvable:$true] %s130
      %136 = dma.hbm_to_vmem [thread:$0]  %s14, 32, %s131, [#allocation15], 16, 16, 1
    $region61: #{backbone_forward.1} parent=1 // pred_fallthru
      _
    // Predicated region
    $region62: #{backbone_forward.1} parent=1 // pred_check
      _
    $region63: #{backbone_forward.1} parent=1 // pred_check_branch
      %138 = sbr.rel (0) target = $region65
    $region64: #{backbone_forward.1} parent=1 // pred_region
      %s140 = ssub.s32 32, 32
      %141 = vsyncadd [#allocation15], %s140
      %s142 = sshll.u32 [#allocation16], 4
      %s143 = int_to_ptr.vmem [resolvable:$true] %s142
      %148 = dma.hbm_to_vmem [thread:$0]  %s15, 32, %s143, [#allocation15], 16, 16, 1
    $region65: #{backbone_forward.1} parent=1 // pred_fallthru
      _
    // Predicated region
    $region66: #{backbone_forward.1} parent=1 // pred_check
      _
    $region67: #{backbone_forward.1} parent=1 // pred_check_branch
      %150 = sbr.rel (0) target = $region69
    $region68: #{backbone_forward.1} parent=1 // pred_region
      %151 = dma.done [#allocation3], 64
    $region69: #{backbone_forward.1} parent=1 // pred_fallthru
      _
    // Predicated region
    $region70: #{backbone_forward.1} parent=1 // pred_check
      _
    $region71: #{backbone_forward.1} parent=1 // pred_check_branch
      %153 = sbr.rel (0) target = $region73
    $region72: #{backbone_forward.1} parent=1 // pred_region
      %154 = dma.done [#allocation6], 32
    $region73: #{backbone_forward.1} parent=1 // pred_fallthru
      _
    // Predicated region
    $region74: #{backbone_forward.1} parent=1 // pred_check
      _
    $region75: #{backbone_forward.1} parent=1 // pred_check_branch
      %156 = sbr.rel (0) target = $region77
    $region76: #{backbone_forward.1} parent=1 // pred_region
      %157 = dma.done [#allocation6], 32
    $region77: #{backbone_forward.1} parent=1 // pred_fallthru
      _
    // Predicated region
    $region78: #{backbone_forward.1} parent=1 // pred_check
      _
    $region79: #{backbone_forward.1} parent=1 // pred_check_branch
      %159 = sbr.rel (0) target = $region81
    $region80: #{backbone_forward.1} parent=1 // pred_region
      %160 = dma.done [#allocation9], 32
    $region81: #{backbone_forward.1} parent=1 // pred_fallthru
      _
    // Predicated region
    $region82: #{backbone_forward.1} parent=1 // pred_check
      _
    $region83: #{backbone_forward.1} parent=1 // pred_check_branch
      %162 = sbr.rel (0) target = $region85
    $region84: #{backbone_forward.1} parent=1 // pred_region
      %163 = dma.done [#allocation9], 1024
    $region85: #{backbone_forward.1} parent=1 // pred_fallthru
      _
    // Predicated region
    $region86: #{backbone_forward.1} parent=1 // pred_check
      _
    $region87: #{backbone_forward.1} parent=1 // pred_check_branch
      %165 = sbr.rel (0) target = $region89
    $region88: #{backbone_forward.1} parent=1 // pred_region
      %166 = dma.done [#allocation12], 32
    $region89: #{backbone_forward.1} parent=1 // pred_fallthru
      _
    // Predicated region
    $region90: #{backbone_forward.1} parent=1 // pred_check
      _
    $region91: #{backbone_forward.1} parent=1 // pred_check_branch
      %168 = sbr.rel (0) target = $region93
    $region92: #{backbone_forward.1} parent=1 // pred_region
      %169 = dma.done [#allocation12], 32
    $region93: #{backbone_forward.1} parent=1 // pred_fallthru
      _
    // Predicated region
    $region94: #{backbone_forward.1} parent=1 // pred_check
      _
    $region95: #{backbone_forward.1} parent=1 // pred_check_branch
      %171 = sbr.rel (0) target = $region97
    $region96: #{backbone_forward.1} parent=1 // pred_region
      %172 = dma.done [#allocation15], 32
    $region97: #{backbone_forward.1} parent=1 // pred_fallthru
      _
    // Predicated region
    $region98: #{backbone_forward.1} parent=1 // pred_check
      _
    $region99: #{backbone_forward.1} parent=1 // pred_check_branch
      %174 = sbr.rel (0) target = $region101
    $region100: #{backbone_forward.1} parent=1 // pred_region
      %175 = dma.done [#allocation15], 32
    $region101: #{backbone_forward.1} parent=1 // pred_fallthru
      _
    %v176 = vld [vmem:[%s0] sm:$0xff]
    %v177 = vld [vmem:[%s0 + $0x8] sm:$0xff]
    %v178 = vld [vmem:[%s0 + $0x10] sm:$0xff]
    %v179 = vld [vmem:[%s0 + $0x18] sm:$0xff]
    %v180 = vld [vmem:[%s1] sm:$0xff]
    %v181 = vld [vmem:[%s1 + $0x8] sm:$0xff]
    %v182 = vld [vmem:[%s1 + $0x10] sm:$0xff]
    %v183 = vld [vmem:[%s1 + $0x18] sm:$0xff]
    %vm184 = vcmp.gt.f32.partialorder %v180, 0.0
    %vm185 = vcmp.gt.f32.partialorder %v181, 0.0
    %vm186 = vcmp.gt.f32.partialorder %v182, 0.0
    %vm187 = vcmp.gt.f32.partialorder %v183, 0.0
    %v188 = vld [vmem:[%s2] sm:$0xff]
    %v189 = vld [vmem:[%s2 + $0x8] sm:$0xff]
    %v190 = vld [vmem:[%s2 + $0x10] sm:$0xff]
    %v191 = vld [vmem:[%s2 + $0x18] sm:$0xff]
    %v192 = vld [vmem:[%s3] sm:$0xff]
    %v193 = vld [vmem:[%s3 + $0x8] sm:$0xff]
    %v194 = vld [vmem:[%s3 + $0x10] sm:$0xff]
    %v195 = vld [vmem:[%s3 + $0x18] sm:$0xff]
    %v196 = vld [vmem:[%s3 + $0x20] sm:$0xff]
    %v197 = vld [vmem:[%s3 + $0x28] sm:$0xff]
    %v198 = vld [vmem:[%s3 + $0x30] sm:$0xff]
    %v199 = vld [vmem:[%s3 + $0x38] sm:$0xff]
    %v200 = vld [vmem:[%s4] sm:$0xff]
    %v201 = vld [vmem:[%s4 + $0x8] sm:$0xff]
    %v202 = vld [vmem:[%s4 + $0x10] sm:$0xff]
    %v203 = vld [vmem:[%s4 + $0x18] sm:$0xff]
    %v204 = vld [vmem:[%s4 + $0x20] sm:$0xff]
    %v205 = vld [vmem:[%s4 + $0x28] sm:$0xff]
    %v206 = vld [vmem:[%s4 + $0x30] sm:$0xff]
    %v207 = vld [vmem:[%s4 + $0x38] sm:$0xff]
    %v208 = vld [vmem:[#allocation2] sm:$0x3]
    %v210 = vlaneseq
    %v211 = vshrl.u32 %v210, 7
    %v212 = vsub.s32 0, %v211
    %v213 = vrot.slane %v208, %v212
    %v214 = vlaneseq
    %v215 = vshrl.u32 %v214, 7
    %v216 = vsub.s32 1, %v215
    %v217 = vrot.slane %v208, %v216
    %vm220 = vcmask 261120
    %v222 = vsel %vm220, %v176, 0
    %v225 = vsel %vm220, %v177, 0
    %v228 = vsel %vm220, %v178, 0
    %v231 = vsel %vm220, %v179, 0
    %233 = vmatprep.subr.mxu0 %v201
    %234 = vmatpush1.msra.mxu0 %v200
    %235 = vmatprep.subr.mxu0 %v203
    %236 = vmatpush1.msra.mxu0 %v202
    %237 = vmatprep.subr.mxu0 %v205
    %238 = vmatpush1.msra.mxu0 %v204
    %239 = vmatprep.subr.mxu0 %v207
    %240 = vmatpush1.msra.mxu0 %v206
    %241 = vmatprep.subr.mxu0 0.0
    %242 = vmatpush1.msra.mxu0 0.0
    %243 = vmatprep.subr.mxu0 0.0
    %244 = vmatpush1.msra.mxu0 0.0
    %245 = vmatprep.subr.mxu0 0.0
    %246 = vmatpush1.msra.mxu0 0.0
    %247 = vmatprep.subr.mxu0 0.0
    %248 = vmatpush1.msra.mxu0 0.0
    %249 = vmatprep.subr.mxu0 0.0
    %250 = vmatpush1.msra.mxu0 0.0
    %251 = vmatprep.subr.mxu0 0.0
    %252 = vmatpush1.msra.mxu0 0.0
    %253 = vmatprep.subr.mxu0 0.0
    %254 = vmatpush1.msra.mxu0 0.0
    %255 = vmatprep.subr.mxu0 0.0
    %256 = vmatpush1.msra.mxu0 0.0
    %257 = vmatprep.subr.mxu0 0.0
    %258 = vmatpush1.msra.mxu0 0.0
    %259 = vmatprep.subr.mxu0 0.0
    %260 = vmatpush1.msra.mxu0 0.0
    %261 = vmatprep.subr.mxu0 0.0
    %262 = vmatpush1.msra.mxu0 0.0
    %263 = vmatprep.subr.mxu0 0.0
    %264 = vmatpush1.msra.mxu0 0.0
    %265 = vmatprep.subr.mxu0 0.0
    %266 = vmatpush1.msra.mxu0 0.0
    %267 = vmatprep.subr.mxu0 0.0
    %268 = vmatpush1.msra.mxu0 0.0
    %269 = vmatprep.subr.mxu0 0.0
    %270 = vmatpush1.msra.mxu0 0.0
    %271 = vmatprep.subr.mxu0 0.0
    %272 = vmatpush1.msra.mxu0 0.0
    %273 = vmatprep.subr.mxu0 0.0
    %274 = vmatpush1.msra.mxu0 0.0
    %275 = vmatprep.subr.mxu0 0.0
    %276 = vmatpush1.msra.mxu0 0.0
    %277 = vmatprep.subr.mxu0 0.0
    %278 = vmatpush1.msra.mxu0 0.0
    %279 = vmatprep.subr.mxu0 0.0
    %280 = vmatpush1.msra.mxu0 0.0
    %281 = vmatprep.subr.mxu0 0.0
    %282 = vmatpush1.msra.mxu0 0.0
    %283 = vmatprep.subr.mxu0 0.0
    %284 = vmatpush1.msra.mxu0 0.0
    %285 = vmatprep.subr.mxu0 0.0
    %286 = vmatpush1.msra.mxu0 0.0
    %287 = vmatprep.subr.mxu0 0.0
    %288 = vmatpush1.msra.mxu0 0.0
    %289 = vmatprep.subr.mxu0 0.0
    %290 = vmatpush1.msra.mxu0 0.0
    %291 = vmatprep.subr.mxu0 0.0
    %292 = vmatpush1.msra.mxu0 0.0
    %293 = vmatprep.subr.mxu0 0.0
    %294 = vmatpush1.msra.mxu0 0.0
    %295 = vmatprep.subr.mxu0 0.0
    %296 = vmatpush1.msra.mxu0 0.0
    %297 = vmatprep.mubr.f32.mxu0 0.0
    %298 = vmatmul.mubr.f32.gmra.mrb[0].mxu0 %v222
    %v299 = vpop.f32.mrb[0].mxu0
    %v300 = vadd.f32 %v213, %v299
    %v301 = vpop.f32.mrb[0].mxu0
    %v302 = vadd.f32 %v217, %v301
    %303 = vmatprep.mubr.f32.mxu0 0.0
    %304 = vmatmul.mubr.f32.gmra.mrb[0].mxu0 %v225
    %v305 = vpop.f32.mrb[0].mxu0
    %v306 = vadd.f32 %v213, %v305
    %v307 = vpop.f32.mrb[0].mxu0
    %v308 = vadd.f32 %v217, %v307
    %309 = vmatprep.mubr.f32.mxu0 0.0
    %310 = vmatmul.mubr.f32.gmra.mrb[0].mxu0 %v228
    %v311 = vpop.f32.mrb[0].mxu0
    %v312 = vadd.f32 %v213, %v311
    %v313 = vpop.f32.mrb[0].mxu0
    %v314 = vadd.f32 %v217, %v313
    %315 = vmatprep.mubr.f32.mxu0 0.0
    %316 = vmatmul.mubr.f32.gmra.mrb[0].mxu0 %v231
    %v317 = vpop.f32.mrb[0].mxu0
    %v318 = vadd.f32 %v213, %v317
    %v319 = vpop.f32.mrb[0].mxu0
    %v320 = vadd.f32 %v217, %v319
    %321 = vdwg.mxu0
    %v322 = vmul.f32 %v300, %v300
    %v323 = vmul.f32 %v306, %v306
    %v324 = vmul.f32 %v312, %v312
    %v325 = vmul.f32 %v318, %v318
    %vm326 = vcmask 523264
    %v328 = vsel %vm326, %v322, 0
    %v331 = vsel %vm326, %v323, 0
    %v334 = vsel %vm326, %v324, 0
    %v337 = vsel %vm326, %v325, 0
    %339 = vmatprep.subr.mxu0 0.0
    %340 = vmatpush1.msra.mxu0 %v192
    %341 = vmatprep.subr.mxu0 0.0
    %342 = vmatpush1.msra.mxu0 %v193
    %343 = vmatprep.subr.mxu0 0.0
    %344 = vmatpush1.msra.mxu0 %v194
    %345 = vmatprep.subr.mxu0 0.0
    %346 = vmatpush1.msra.mxu0 %v195
    %347 = vmatprep.subr.mxu0 0.0
    %348 = vmatpush1.msra.mxu0 %v196
    %349 = vmatprep.subr.mxu0 0.0
    %350 = vmatpush1.msra.mxu0 %v197
    %351 = vmatprep.subr.mxu0 0.0
    %352 = vmatpush1.msra.mxu0 %v198
    %353 = vmatprep.subr.mxu0 0.0
    %354 = vmatpush1.msra.mxu0 %v199
    %355 = vmatprep.subr.mxu0 0.0
    %356 = vmatpush1.msra.mxu0 0.0
    %357 = vmatprep.subr.mxu0 0.0
    %358 = vmatpush1.msra.mxu0 0.0
    %359 = vmatprep.subr.mxu0 0.0
    %360 = vmatpush1.msra.mxu0 0.0
    %361 = vmatprep.subr.mxu0 0.0
    %362 = vmatpush1.msra.mxu0 0.0
    %363 = vmatprep.subr.mxu0 0.0
    %364 = vmatpush1.msra.mxu0 0.0
    %365 = vmatprep.subr.mxu0 0.0
    %366 = vmatpush1.msra.mxu0 0.0
    %367 = vmatprep.subr.mxu0 0.0
    %368 = vmatpush1.msra.mxu0 0.0
    %369 = vmatprep.subr.mxu0 0.0
    %370 = vmatpush1.msra.mxu0 0.0
    %371 = vmatprep.subr.mxu0 0.0
    %372 = vmatpush1.msra.mxu0 0.0
    %373 = vmatprep.subr.mxu0 0.0
    %374 = vmatpush1.msra.mxu0 0.0
    %375 = vmatprep.subr.mxu0 0.0
    %376 = vmatpush1.msra.mxu0 0.0
    %377 = vmatprep.subr.mxu0 0.0
    %378 = vmatpush1.msra.mxu0 0.0
    %379 = vmatprep.subr.mxu0 0.0
    %380 = vmatpush1.msra.mxu0 0.0
    %381 = vmatprep.subr.mxu0 0.0
    %382 = vmatpush1.msra.mxu0 0.0
    %383 = vmatprep.subr.mxu0 0.0
    %384 = vmatpush1.msra.mxu0 0.0
    %385 = vmatprep.subr.mxu0 0.0
    %386 = vmatpush1.msra.mxu0 0.0
    %387 = vmatprep.subr.mxu0 0.0
    %388 = vmatpush1.msra.mxu0 0.0
    %389 = vmatprep.subr.mxu0 0.0
    %390 = vmatpush1.msra.mxu0 0.0
    %391 = vmatprep.subr.mxu0 0.0
    %392 = vmatpush1.msra.mxu0 0.0
    %393 = vmatprep.subr.mxu0 0.0
    %394 = vmatpush1.msra.mxu0 0.0
    %395 = vmatprep.subr.mxu0 0.0
    %396 = vmatpush1.msra.mxu0 0.0
    %397 = vmatprep.subr.mxu0 0.0
    %398 = vmatpush1.msra.mxu0 0.0
    %399 = vmatprep.subr.mxu0 0.0
    %400 = vmatpush1.msra.mxu0 0.0
    %401 = vmatprep.subr.mxu0 0.0
    %402 = vmatpush1.msra.mxu0 0.0
    %403 = vmatprep.mubr.f32.mxu0 0.0
    %404 = vmatmul.mubr.f32.gmra.mrb[0].mxu0 %v328
    %v405 = vpop.f32.mrb[0].mxu0
    %v406 = vadd.f32 0.0, %v405
    %v407 = vpop.f32.mrb[0].mxu0
    %408 = vmatprep.mubr.f32.mxu0 0.0
    %409 = vmatmul.mubr.f32.gmra.mrb[0].mxu0 %v331
    %v410 = vpop.f32.mrb[0].mxu0
    %v411 = vadd.f32 0.0, %v410
    %v412 = vpop.f32.mrb[0].mxu0
    %413 = vmatprep.mubr.f32.mxu0 0.0
    %414 = vmatmul.mubr.f32.gmra.mrb[0].mxu0 %v334
    %v415 = vpop.f32.mrb[0].mxu0
    %v416 = vadd.f32 0.0, %v415
    %v417 = vpop.f32.mrb[0].mxu0
    %418 = vmatprep.mubr.f32.mxu0 0.0
    %419 = vmatmul.mubr.f32.gmra.mrb[0].mxu0 %v337
    %v420 = vpop.f32.mrb[0].mxu0
    %v421 = vadd.f32 0.0, %v420
    %v422 = vpop.f32.mrb[0].mxu0
    %423 = vdwg.mxu0
    %v424 = vadd.f32 %v302, %v406
    %v425 = vadd.f32 %v308, %v411
    %v426 = vadd.f32 %v314, %v416
    %v427 = vadd.f32 %v320, %v421
    %v428 = vmul.f32 %v424, 1.442695
    %v429 = vpow.pop %v428
    %v430 = vmul.f32 %v425, 1.442695
    %v431 = vpow.pop %v430
    %v432 = vmul.f32 %v426, 1.442695
    %v433 = vpow.pop %v432
    %v434 = vmul.f32 %v427, 1.442695
    %v435 = vpow.pop %v434
    %440 = vrot.lane.b32.xlu0 %v300, 96
    %v441 = vpop.permute.xlu0 %440
    %442 = vrot.lane.b32.xlu0 %v306, 96
    %v443 = vpop.permute.xlu0 %442
    %444 = vrot.lane.b32.xlu0 %v312, 96
    %v445 = vpop.permute.xlu0 %444
    %446 = vrot.lane.b32.xlu0 %v318, 96
    %v447 = vpop.permute.xlu0 %446
    %vm448 = vcmask 64512
    %v449 = vsel %vm448, %v300, 0
    %v451 = vsel %vm448, %v306, 0
    %v453 = vsel %vm448, %v312, 0
    %v455 = vsel %vm448, %v318, 0
    %v457 = vsel %vm448, %v441, 0
    %v459 = vsel %vm448, %v443, 0
    %v461 = vsel %vm448, %v445, 0
    %v463 = vsel %vm448, %v447, 0
    %465 = vmatprep.subr.mxu0 0.0
    %466 = vmatpush1.xpose.msra.mxu0 %v457
    %467 = vmatprep.subr.mxu0 0.0
    %468 = vmatpush1.xpose.msra.mxu0 %v459
    %469 = vmatprep.subr.mxu0 0.0
    %470 = vmatpush1.xpose.msra.mxu0 %v461
    %471 = vmatprep.subr.mxu0 0.0
    %472 = vmatpush1.xpose.msra.mxu0 %v463
    %473 = vmatprep.subr.mxu0 0.0
    %474 = vmatpush1.xpose.msra.mxu0 0.0
    %475 = vmatprep.subr.mxu0 0.0
    %476 = vmatpush1.xpose.msra.mxu0 0.0
    %477 = vmatprep.subr.mxu0 0.0
    %478 = vmatpush1.xpose.msra.mxu0 0.0
    %479 = vmatprep.subr.mxu0 0.0
    %480 = vmatpush1.xpose.msra.mxu0 0.0
    %481 = vmatprep.subr.mxu0 0.0
    %482 = vmatpush1.xpose.msra.mxu0 0.0
    %483 = vmatprep.subr.mxu0 0.0
    %484 = vmatpush1.xpose.msra.mxu0 0.0
    %485 = vmatprep.subr.mxu0 0.0
    %486 = vmatpush1.xpose.msra.mxu0 0.0
    %487 = vmatprep.subr.mxu0 0.0
    %488 = vmatpush1.xpose.msra.mxu0 0.0
    %489 = vmatprep.subr.mxu0 0.0
    %490 = vmatpush1.xpose.msra.mxu0 0.0
    %491 = vmatprep.subr.mxu0 0.0
    %492 = vmatpush1.xpose.msra.mxu0 0.0
    %493 = vmatprep.subr.mxu0 0.0
    %494 = vmatpush1.xpose.msra.mxu0 0.0
    %495 = vmatprep.subr.mxu0 0.0
    %496 = vmatpush1.xpose.msra.mxu0 0.0
    %497 = vmatprep.subr.mxu0 0.0
    %498 = vmatpush1.xpose.msra.mxu0 0.0
    %499 = vmatprep.subr.mxu0 0.0
    %500 = vmatpush1.xpose.msra.mxu0 0.0
    %501 = vmatprep.subr.mxu0 0.0
    %502 = vmatpush1.xpose.msra.mxu0 0.0
    %503 = vmatprep.subr.mxu0 0.0
    %504 = vmatpush1.xpose.msra.mxu0 0.0
    %505 = vmatprep.subr.mxu0 0.0
    %506 = vmatpush1.xpose.msra.mxu0 0.0
    %507 = vmatprep.subr.mxu0 0.0
    %508 = vmatpush1.xpose.msra.mxu0 0.0
    %509 = vmatprep.subr.mxu0 0.0
    %510 = vmatpush1.xpose.msra.mxu0 0.0
    %511 = vmatprep.subr.mxu0 0.0
    %512 = vmatpush1.xpose.msra.mxu0 0.0
    %513 = vmatprep.subr.mxu0 0.0
    %514 = vmatpush1.xpose.msra.mxu0 0.0
    %515 = vmatprep.subr.mxu0 0.0
    %516 = vmatpush1.xpose.msra.mxu0 0.0
    %517 = vmatprep.subr.mxu0 0.0
    %518 = vmatpush1.xpose.msra.mxu0 0.0
    %519 = vmatprep.subr.mxu0 0.0
    %520 = vmatpush1.xpose.msra.mxu0 0.0
    %521 = vmatprep.subr.mxu0 0.0
    %522 = vmatpush1.xpose.msra.mxu0 0.0
    %523 = vmatprep.subr.mxu0 0.0
    %524 = vmatpush1.xpose.msra.mxu0 0.0
    %525 = vmatprep.subr.mxu0 0.0
    %526 = vmatpush1.xpose.msra.mxu0 0.0
    %527 = vmatprep.subr.mxu0 0.0
    %528 = vmatpush1.xpose.msra.mxu0 0.0
    %529 = vmatprep.mubr.f32.mxu0 0.0
    %530 = vmatmul.mubr.f32.gmra.mrb[0].mxu0 %v449
    %v531 = vpop.f32.mrb[0].mxu0
    %v532 = vadd.f32 0.0, %v531
    %v533 = vpop.f32.mrb[0].mxu0
    %534 = vmatprep.mubr.f32.mxu0 0.0
    %535 = vmatmul.mubr.f32.gmra.mrb[0].mxu0 %v451
    %v536 = vpop.f32.mrb[0].mxu0
    %v537 = vadd.f32 0.0, %v536
    %v538 = vpop.f32.mrb[0].mxu0
    %539 = vmatprep.mubr.f32.mxu0 0.0
    %540 = vmatmul.mubr.f32.gmra.mrb[0].mxu0 %v453
    %v541 = vpop.f32.mrb[0].mxu0
    %v542 = vadd.f32 0.0, %v541
    %v543 = vpop.f32.mrb[0].mxu0
    %544 = vmatprep.mubr.f32.mxu0 0.0
    %545 = vmatmul.mubr.f32.gmra.mrb[0].mxu0 %v455
    %v546 = vpop.f32.mrb[0].mxu0
    %v547 = vadd.f32 0.0, %v546
    %v548 = vpop.f32.mrb[0].mxu0
    %549 = vdwg.mxu0
    %554 = vrot.lane.b32.xlu0 %v429, 64
    %v555 = vpop.permute.xlu0 %554
    %556 = vrot.lane.b32.xlu0 %v431, 64
    %v557 = vpop.permute.xlu0 %556
    %558 = vrot.lane.b32.xlu0 %v433, 64
    %v559 = vpop.permute.xlu0 %558
    %560 = vrot.lane.b32.xlu0 %v435, 64
    %v561 = vpop.permute.xlu0 %560
    %vm562 = vcmask 130048
    %v563 = vsel %vm562, %v429, 0
    %v565 = vsel %vm562, %v431, 0
    %v567 = vsel %vm562, %v433, 0
    %v569 = vsel %vm562, %v435, 0
    %v571 = vsel %vm562, %v555, 0
    %v573 = vsel %vm562, %v557, 0
    %v575 = vsel %vm562, %v559, 0
    %v577 = vsel %vm562, %v561, 0
    %579 = vmatprep.subr.mxu0 0.0
    %580 = vmatpush1.xpose.msra.mxu0 %v571
    %581 = vmatprep.subr.mxu0 0.0
    %582 = vmatpush1.xpose.msra.mxu0 %v573
    %583 = vmatprep.subr.mxu0 0.0
    %584 = vmatpush1.xpose.msra.mxu0 %v575
    %585 = vmatprep.subr.mxu0 0.0
    %586 = vmatpush1.xpose.msra.mxu0 %v577
    %587 = vmatprep.subr.mxu0 0.0
    %588 = vmatpush1.xpose.msra.mxu0 0.0
    %589 = vmatprep.subr.mxu0 0.0
    %590 = vmatpush1.xpose.msra.mxu0 0.0
    %591 = vmatprep.subr.mxu0 0.0
    %592 = vmatpush1.xpose.msra.mxu0 0.0
    %593 = vmatprep.subr.mxu0 0.0
    %594 = vmatpush1.xpose.msra.mxu0 0.0
    %595 = vmatprep.subr.mxu0 0.0
    %596 = vmatpush1.xpose.msra.mxu0 0.0
    %597 = vmatprep.subr.mxu0 0.0
    %598 = vmatpush1.xpose.msra.mxu0 0.0
    %599 = vmatprep.subr.mxu0 0.0
    %600 = vmatpush1.xpose.msra.mxu0 0.0
    %601 = vmatprep.subr.mxu0 0.0
    %602 = vmatpush1.xpose.msra.mxu0 0.0
    %603 = vmatprep.subr.mxu0 0.0
    %604 = vmatpush1.xpose.msra.mxu0 0.0
    %605 = vmatprep.subr.mxu0 0.0
    %606 = vmatpush1.xpose.msra.mxu0 0.0
    %607 = vmatprep.subr.mxu0 0.0
    %608 = vmatpush1.xpose.msra.mxu0 0.0
    %609 = vmatprep.subr.mxu0 0.0
    %610 = vmatpush1.xpose.msra.mxu0 0.0
    %611 = vmatprep.subr.mxu0 0.0
    %612 = vmatpush1.xpose.msra.mxu0 0.0
    %613 = vmatprep.subr.mxu0 0.0
    %614 = vmatpush1.xpose.msra.mxu0 0.0
    %615 = vmatprep.subr.mxu0 0.0
    %616 = vmatpush1.xpose.msra.mxu0 0.0
    %617 = vmatprep.subr.mxu0 0.0
    %618 = vmatpush1.xpose.msra.mxu0 0.0
    %619 = vmatprep.subr.mxu0 0.0
    %620 = vmatpush1.xpose.msra.mxu0 0.0
    %621 = vmatprep.subr.mxu0 0.0
    %622 = vmatpush1.xpose.msra.mxu0 0.0
    %623 = vmatprep.subr.mxu0 0.0
    %624 = vmatpush1.xpose.msra.mxu0 0.0
    %625 = vmatprep.subr.mxu0 0.0
    %626 = vmatpush1.xpose.msra.mxu0 0.0
    %627 = vmatprep.subr.mxu0 0.0
    %628 = vmatpush1.xpose.msra.mxu0 0.0
    %629 = vmatprep.subr.mxu0 0.0
    %630 = vmatpush1.xpose.msra.mxu0 0.0
    %631 = vmatprep.subr.mxu0 0.0
    %632 = vmatpush1.xpose.msra.mxu0 0.0
    %633 = vmatprep.subr.mxu0 0.0
    %634 = vmatpush1.xpose.msra.mxu0 0.0
    %635 = vmatprep.subr.mxu0 0.0
    %636 = vmatpush1.xpose.msra.mxu0 0.0
    %637 = vmatprep.subr.mxu0 0.0
    %638 = vmatpush1.xpose.msra.mxu0 0.0
    %639 = vmatprep.subr.mxu0 0.0
    %640 = vmatpush1.xpose.msra.mxu0 0.0
    %641 = vmatprep.subr.mxu0 0.0
    %642 = vmatpush1.xpose.msra.mxu0 0.0
    %643 = vmatprep.mubr.f32.mxu0 0.0
    %644 = vmatmul.mubr.f32.gmra.mrb[0].mxu0 %v563
    %v645 = vpop.f32.mrb[0].mxu0
    %v646 = vadd.f32 0.0, %v645
    %v647 = vpop.f32.mrb[0].mxu0
    %648 = vmatprep.mubr.f32.mxu0 0.0
    %649 = vmatmul.mubr.f32.gmra.mrb[0].mxu0 %v565
    %v650 = vpop.f32.mrb[0].mxu0
    %v651 = vadd.f32 0.0, %v650
    %v652 = vpop.f32.mrb[0].mxu0
    %653 = vmatprep.mubr.f32.mxu0 0.0
    %654 = vmatmul.mubr.f32.gmra.mrb[0].mxu0 %v567
    %v655 = vpop.f32.mrb[0].mxu0
    %v656 = vadd.f32 0.0, %v655
    %v657 = vpop.f32.mrb[0].mxu0
    %658 = vmatprep.mubr.f32.mxu0 0.0
    %659 = vmatmul.mubr.f32.gmra.mrb[0].mxu0 %v569
    %v660 = vpop.f32.mrb[0].mxu0
    %v661 = vadd.f32 0.0, %v660
    %v662 = vpop.f32.mrb[0].mxu0
    %663 = vdwg.mxu0
    %v664 = vmul.f32 %v532, 1.442695
    %v665 = vpow.pop %v664
    %v666 = vmul.f32 %v537, 1.442695
    %v667 = vpow.pop %v666
    %v668 = vmul.f32 %v542, 1.442695
    %v669 = vpow.pop %v668
    %v670 = vmul.f32 %v547, 1.442695
    %v671 = vpow.pop %v670
    %v672 = vmul.f32 %v646, %v188
    %v673 = vmul.f32 %v651, %v189
    %v674 = vmul.f32 %v656, %v190
    %v675 = vmul.f32 %v661, %v191
    %v676 = vsel %vm184, %v665, %v672
    %v677 = vsel %vm185, %v667, %v673
    %v678 = vsel %vm186, %v669, %v674
    %v679 = vsel %vm187, %v671, %v675
    %v680 = vsel %vm220, %v676, 0.0
    %681 = vadd.xlane.f32.xlu0 %v680
    %v682 = vpop.xlane.xlu0 %681
    %v683 = vsel %vm220, %v677, 0.0
    %684 = vadd.xlane.f32.xlu0 %v683
    %v685 = vpop.xlane.xlu0 %684
    %v686 = vsel %vm220, %v678, 0.0
    %687 = vadd.xlane.f32.xlu0 %v686
    %v688 = vpop.xlane.xlu0 %687
    %v689 = vsel %vm220, %v679, 0.0
    %690 = vadd.xlane.f32.xlu0 %v689
    %v691 = vpop.xlane.xlu0 %690
    %vm692 = vcmp.gt.f32.partialorder %v682, 0.0
    %vm693 = vcmp.gt.f32.partialorder %v685, 0.0
    %vm694 = vcmp.gt.f32.partialorder %v688, 0.0
    %vm695 = vcmp.gt.f32.partialorder %v691, 0.0
    %v696 = vsel %vm692, %v682, 1.0
    %v697 = vsel %vm693, %v685, 1.0
    %v698 = vsel %vm694, %v688, 1.0
    %v699 = vsel %vm695, %v691, 1.0
    %700 = vrot.lane.b32.xlu0 %v300, 64
    %v701 = vpop.permute.xlu0 %700
    %702 = vrot.lane.b32.xlu0 %v306, 64
    %v703 = vpop.permute.xlu0 %702
    %704 = vrot.lane.b32.xlu0 %v312, 64
    %v705 = vpop.permute.xlu0 %704
    %706 = vrot.lane.b32.xlu0 %v318, 64
    %v707 = vpop.permute.xlu0 %706
    %v713 = vsel %vm220, %v676, 0
    %v716 = vsel %vm220, %v677, 0
    %v719 = vsel %vm220, %v678, 0
    %v722 = vsel %vm220, %v679, 0
    %724 = vmatprep.subr.mxu0 0.0
    %725 = vmatpush1.msra.mxu0 %v701
    %726 = vmatprep.subr.mxu0 0.0
    %727 = vmatpush1.msra.mxu0 %v703
    %728 = vmatprep.subr.mxu0 0.0
    %729 = vmatpush1.msra.mxu0 %v705
    %730 = vmatprep.subr.mxu0 0.0
    %731 = vmatpush1.msra.mxu0 %v707
    %732 = vmatprep.subr.mxu0 0.0
    %733 = vmatpush1.msra.mxu0 0.0
    %734 = vmatprep.subr.mxu0 0.0
    %735 = vmatpush1.msra.mxu0 0.0
    %736 = vmatprep.subr.mxu0 0.0
    %737 = vmatpush1.msra.mxu0 0.0
    %738 = vmatprep.subr.mxu0 0.0
    %739 = vmatpush1.msra.mxu0 0.0
    %740 = vmatprep.subr.mxu0 0.0
    %741 = vmatpush1.msra.mxu0 0.0
    %742 = vmatprep.subr.mxu0 0.0
    %743 = vmatpush1.msra.mxu0 0.0
    %744 = vmatprep.subr.mxu0 0.0
    %745 = vmatpush1.msra.mxu0 0.0
    %746 = vmatprep.subr.mxu0 0.0
    %747 = vmatpush1.msra.mxu0 0.0
    %748 = vmatprep.subr.mxu0 0.0
    %749 = vmatpush1.msra.mxu0 0.0
    %750 = vmatprep.subr.mxu0 0.0
    %751 = vmatpush1.msra.mxu0 0.0
    %752 = vmatprep.subr.mxu0 0.0
    %753 = vmatpush1.msra.mxu0 0.0
    %754 = vmatprep.subr.mxu0 0.0
    %755 = vmatpush1.msra.mxu0 0.0
    %756 = vmatprep.subr.mxu0 0.0
    %757 = vmatpush1.msra.mxu0 0.0
    %758 = vmatprep.subr.mxu0 0.0
    %759 = vmatpush1.msra.mxu0 0.0
    %760 = vmatprep.subr.mxu0 0.0
    %761 = vmatpush1.msra.mxu0 0.0
    %762 = vmatprep.subr.mxu0 0.0
    %763 = vmatpush1.msra.mxu0 0.0
    %764 = vmatprep.subr.mxu0 0.0
    %765 = vmatpush1.msra.mxu0 0.0
    %766 = vmatprep.subr.mxu0 0.0
    %767 = vmatpush1.msra.mxu0 0.0
    %768 = vmatprep.subr.mxu0 0.0
    %769 = vmatpush1.msra.mxu0 0.0
    %770 = vmatprep.subr.mxu0 0.0
    %771 = vmatpush1.msra.mxu0 0.0
    %772 = vmatprep.subr.mxu0 0.0
    %773 = vmatpush1.msra.mxu0 0.0
    %774 = vmatprep.subr.mxu0 0.0
    %775 = vmatpush1.msra.mxu0 0.0
    %776 = vmatprep.subr.mxu0 0.0
    %777 = vmatpush1.msra.mxu0 0.0
    %778 = vmatprep.subr.mxu0 0.0
    %779 = vmatpush1.msra.mxu0 0.0
    %780 = vmatprep.subr.mxu0 0.0
    %781 = vmatpush1.msra.mxu0 0.0
    %782 = vmatprep.subr.mxu0 0.0
    %783 = vmatpush1.msra.mxu0 0.0
    %784 = vmatprep.subr.mxu0 0.0
    %785 = vmatpush1.msra.mxu0 0.0
    %786 = vmatprep.subr.mxu0 0.0
    %787 = vmatpush1.msra.mxu0 0.0
    %788 = vmatprep.mubr.f32.mxu0 0.0
    %789 = vmatmul.mubr.f32.gmra.mrb[0].mxu0 %v713
    %v790 = vpop.f32.mrb[0].mxu0
    %v791 = vadd.f32 0.0, %v790
    %v792 = vpop.f32.mrb[0].mxu0
    %793 = vmatprep.mubr.f32.mxu0 0.0
    %794 = vmatmul.mubr.f32.gmra.mrb[0].mxu0 %v716
    %v795 = vpop.f32.mrb[0].mxu0
    %v796 = vadd.f32 0.0, %v795
    %v797 = vpop.f32.mrb[0].mxu0
    %798 = vmatprep.mubr.f32.mxu0 0.0
    %799 = vmatmul.mubr.f32.gmra.mrb[0].mxu0 %v719
    %v800 = vpop.f32.mrb[0].mxu0
    %v801 = vadd.f32 0.0, %v800
    %v802 = vpop.f32.mrb[0].mxu0
    %803 = vmatprep.mubr.f32.mxu0 0.0
    %804 = vmatmul.mubr.f32.gmra.mrb[0].mxu0 %v722
    %v805 = vpop.f32.mrb[0].mxu0
    %v806 = vadd.f32 0.0, %v805
    %v807 = vpop.f32.mrb[0].mxu0
    %808 = vdwg.mxu0
    %v809 = vrcp.pop %v696
    %v810 = vrcp.pop %v697
    %v811 = vrcp.pop %v698
    %v812 = vrcp.pop %v699
    %v813 = vmul.f32 %v791, %v809
    %v814 = vmul.f32 %v796, %v810
    %v815 = vmul.f32 %v801, %v811
    %v816 = vmul.f32 %v806, %v812
    %817 = vrot.lane.b32.xlu0 %v300, 120
    %v818 = vpop.permute.xlu0 %817
    %819 = vrot.lane.b32.xlu0 %v306, 120
    %v820 = vpop.permute.xlu0 %819
    %821 = vrot.lane.b32.xlu0 %v312, 120
    %v822 = vpop.permute.xlu0 %821
    %823 = vrot.lane.b32.xlu0 %v318, 120
    %v824 = vpop.permute.xlu0 %823
    %825 = vrot.lane.b32.xlu0 %v300, 88
    %v826 = vpop.permute.xlu0 %825
    %827 = vrot.lane.b32.xlu0 %v306, 88
    %v828 = vpop.permute.xlu0 %827
    %829 = vrot.lane.b32.xlu0 %v312, 88
    %v830 = vpop.permute.xlu0 %829
    %831 = vrot.lane.b32.xlu0 %v318, 88
    %v832 = vpop.permute.xlu0 %831
    %v833 = vsel %vm448, %v818, 0
    %v835 = vsel %vm448, %v820, 0
    %v837 = vsel %vm448, %v822, 0
    %v839 = vsel %vm448, %v824, 0
    %v841 = vsel %vm448, %v826, 0
    %v843 = vsel %vm448, %v828, 0
    %v845 = vsel %vm448, %v830, 0
    %v847 = vsel %vm448, %v832, 0
    %849 = vmatprep.subr.mxu0 0.0
    %850 = vmatpush1.xpose.msra.mxu0 %v841
    %851 = vmatprep.subr.mxu0 0.0
    %852 = vmatpush1.xpose.msra.mxu0 %v843
    %853 = vmatprep.subr.mxu0 0.0
    %854 = vmatpush1.xpose.msra.mxu0 %v845
    %855 = vmatprep.subr.mxu0 0.0
    %856 = vmatpush1.xpose.msra.mxu0 %v847
    %857 = vmatprep.subr.mxu0 0.0
    %858 = vmatpush1.xpose.msra.mxu0 0.0
    %859 = vmatprep.subr.mxu0 0.0
    %860 = vmatpush1.xpose.msra.mxu0 0.0
    %861 = vmatprep.subr.mxu0 0.0
    %862 = vmatpush1.xpose.msra.mxu0 0.0
    %863 = vmatprep.subr.mxu0 0.0
    %864 = vmatpush1.xpose.msra.mxu0 0.0
    %865 = vmatprep.subr.mxu0 0.0
    %866 = vmatpush1.xpose.msra.mxu0 0.0
    %867 = vmatprep.subr.mxu0 0.0
    %868 = vmatpush1.xpose.msra.mxu0 0.0
    %869 = vmatprep.subr.mxu0 0.0
    %870 = vmatpush1.xpose.msra.mxu0 0.0
    %871 = vmatprep.subr.mxu0 0.0
    %872 = vmatpush1.xpose.msra.mxu0 0.0
    %873 = vmatprep.subr.mxu0 0.0
    %874 = vmatpush1.xpose.msra.mxu0 0.0
    %875 = vmatprep.subr.mxu0 0.0
    %876 = vmatpush1.xpose.msra.mxu0 0.0
    %877 = vmatprep.subr.mxu0 0.0
    %878 = vmatpush1.xpose.msra.mxu0 0.0
    %879 = vmatprep.subr.mxu0 0.0
    %880 = vmatpush1.xpose.msra.mxu0 0.0
    %881 = vmatprep.subr.mxu0 0.0
    %882 = vmatpush1.xpose.msra.mxu0 0.0
    %883 = vmatprep.subr.mxu0 0.0
    %884 = vmatpush1.xpose.msra.mxu0 0.0
    %885 = vmatprep.subr.mxu0 0.0
    %886 = vmatpush1.xpose.msra.mxu0 0.0
    %887 = vmatprep.subr.mxu0 0.0
    %888 = vmatpush1.xpose.msra.mxu0 0.0
    %889 = vmatprep.subr.mxu0 0.0
    %890 = vmatpush1.xpose.msra.mxu0 0.0
    %891 = vmatprep.subr.mxu0 0.0
    %892 = vmatpush1.xpose.msra.mxu0 0.0
    %893 = vmatprep.subr.mxu0 0.0
    %894 = vmatpush1.xpose.msra.mxu0 0.0
    %895 = vmatprep.subr.mxu0 0.0
    %896 = vmatpush1.xpose.msra.mxu0 0.0
    %897 = vmatprep.subr.mxu0 0.0
    %898 = vmatpush1.xpose.msra.mxu0 0.0
    %899 = vmatprep.subr.mxu0 0.0
    %900 = vmatpush1.xpose.msra.mxu0 0.0
    %901 = vmatprep.subr.mxu0 0.0
    %902 = vmatpush1.xpose.msra.mxu0 0.0
    %903 = vmatprep.subr.mxu0 0.0
    %904 = vmatpush1.xpose.msra.mxu0 0.0
    %905 = vmatprep.subr.mxu0 0.0
    %906 = vmatpush1.xpose.msra.mxu0 0.0
    %907 = vmatprep.subr.mxu0 0.0
    %908 = vmatpush1.xpose.msra.mxu0 0.0
    %909 = vmatprep.subr.mxu0 0.0
    %910 = vmatpush1.xpose.msra.mxu0 0.0
    %911 = vmatprep.subr.mxu0 0.0
    %912 = vmatpush1.xpose.msra.mxu0 0.0
    %913 = vmatprep.mubr.f32.mxu0 0.0
    %914 = vmatmul.mubr.f32.gmra.mrb[0].mxu0 %v833
    %v915 = vpop.f32.mrb[0].mxu0
    %v916 = vadd.f32 0.0, %v915
    %v917 = vpop.f32.mrb[0].mxu0
    %918 = vmatprep.mubr.f32.mxu0 0.0
    %919 = vmatmul.mubr.f32.gmra.mrb[0].mxu0 %v835
    %v920 = vpop.f32.mrb[0].mxu0
    %v921 = vadd.f32 0.0, %v920
    %v922 = vpop.f32.mrb[0].mxu0
    %923 = vmatprep.mubr.f32.mxu0 0.0
    %924 = vmatmul.mubr.f32.gmra.mrb[0].mxu0 %v837
    %v925 = vpop.f32.mrb[0].mxu0
    %v926 = vadd.f32 0.0, %v925
    %v927 = vpop.f32.mrb[0].mxu0
    %928 = vmatprep.mubr.f32.mxu0 0.0
    %929 = vmatmul.mubr.f32.gmra.mrb[0].mxu0 %v839
    %v930 = vpop.f32.mrb[0].mxu0
    %v931 = vadd.f32 0.0, %v930
    %v932 = vpop.f32.mrb[0].mxu0
    %933 = vdwg.mxu0
    %934 = vrot.lane.b32.xlu0 %v429, 112
    %v935 = vpop.permute.xlu0 %934
    %936 = vrot.lane.b32.xlu0 %v431, 112
    %v937 = vpop.permute.xlu0 %936
    %938 = vrot.lane.b32.xlu0 %v433, 112
    %v939 = vpop.permute.xlu0 %938
    %940 = vrot.lane.b32.xlu0 %v435, 112
    %v941 = vpop.permute.xlu0 %940
    %942 = vrot.lane.b32.xlu0 %v429, 48
    %v943 = vpop.permute.xlu0 %942
    %944 = vrot.lane.b32.xlu0 %v431, 48
    %v945 = vpop.permute.xlu0 %944
    %946 = vrot.lane.b32.xlu0 %v433, 48
    %v947 = vpop.permute.xlu0 %946
    %948 = vrot.lane.b32.xlu0 %v435, 48
    %v949 = vpop.permute.xlu0 %948
    %v950 = vsel %vm562, %v935, 0
    %v952 = vsel %vm562, %v937, 0
    %v954 = vsel %vm562, %v939, 0
    %v956 = vsel %vm562, %v941, 0
    %v958 = vsel %vm562, %v943, 0
    %v960 = vsel %vm562, %v945, 0
    %v962 = vsel %vm562, %v947, 0
    %v964 = vsel %vm562, %v949, 0
    %966 = vmatprep.subr.mxu0 0.0
    %967 = vmatpush1.xpose.msra.mxu0 %v958
    %968 = vmatprep.subr.mxu0 0.0
    %969 = vmatpush1.xpose.msra.mxu0 %v960
    %970 = vmatprep.subr.mxu0 0.0
    %971 = vmatpush1.xpose.msra.mxu0 %v962
    %972 = vmatprep.subr.mxu0 0.0
    %973 = vmatpush1.xpose.msra.mxu0 %v964
    %974 = vmatprep.subr.mxu0 0.0
    %975 = vmatpush1.xpose.msra.mxu0 0.0
    %976 = vmatprep.subr.mxu0 0.0
    %977 = vmatpush1.xpose.msra.mxu0 0.0
    %978 = vmatprep.subr.mxu0 0.0
    %979 = vmatpush1.xpose.msra.mxu0 0.0
    %980 = vmatprep.subr.mxu0 0.0
    %981 = vmatpush1.xpose.msra.mxu0 0.0
    %982 = vmatprep.subr.mxu0 0.0
    %983 = vmatpush1.xpose.msra.mxu0 0.0
    %984 = vmatprep.subr.mxu0 0.0
    %985 = vmatpush1.xpose.msra.mxu0 0.0
    %986 = vmatprep.subr.mxu0 0.0
    %987 = vmatpush1.xpose.msra.mxu0 0.0
    %988 = vmatprep.subr.mxu0 0.0
    %989 = vmatpush1.xpose.msra.mxu0 0.0
    %990 = vmatprep.subr.mxu0 0.0
    %991 = vmatpush1.xpose.msra.mxu0 0.0
    %992 = vmatprep.subr.mxu0 0.0
    %993 = vmatpush1.xpose.msra.mxu0 0.0
    %994 = vmatprep.subr.mxu0 0.0
    %995 = vmatpush1.xpose.msra.mxu0 0.0
    %996 = vmatprep.subr.mxu0 0.0
    %997 = vmatpush1.xpose.msra.mxu0 0.0
    %998 = vmatprep.subr.mxu0 0.0
    %999 = vmatpush1.xpose.msra.mxu0 0.0
    %1000 = vmatprep.subr.mxu0 0.0
    %1001 = vmatpush1.xpose.msra.mxu0 0.0
    %1002 = vmatprep.subr.mxu0 0.0
    %1003 = vmatpush1.xpose.msra.mxu0 0.0
    %1004 = vmatprep.subr.mxu0 0.0
    %1005 = vmatpush1.xpose.msra.mxu0 0.0
    %1006 = vmatprep.subr.mxu0 0.0
    %1007 = vmatpush1.xpose.msra.mxu0 0.0
    %1008 = vmatprep.subr.mxu0 0.0
    %1009 = vmatpush1.xpose.msra.mxu0 0.0
    %1010 = vmatprep.subr.mxu0 0.0
    %1011 = vmatpush1.xpose.msra.mxu0 0.0
    %1012 = vmatprep.subr.mxu0 0.0
    %1013 = vmatpush1.xpose.msra.mxu0 0.0
    %1014 = vmatprep.subr.mxu0 0.0
    %1015 = vmatpush1.xpose.msra.mxu0 0.0
    %1016 = vmatprep.subr.mxu0 0.0
    %1017 = vmatpush1.xpose.msra.mxu0 0.0
    %1018 = vmatprep.subr.mxu0 0.0
    %1019 = vmatpush1.xpose.msra.mxu0 0.0
    %1020 = vmatprep.subr.mxu0 0.0
    %1021 = vmatpush1.xpose.msra.mxu0 0.0
    %1022 = vmatprep.subr.mxu0 0.0
    %1023 = vmatpush1.xpose.msra.mxu0 0.0
    %1024 = vmatprep.subr.mxu0 0.0
    %1025 = vmatpush1.xpose.msra.mxu0 0.0
    %1026 = vmatprep.subr.mxu0 0.0
    %1027 = vmatpush1.xpose.msra.mxu0 0.0
    %1028 = vmatprep.subr.mxu0 0.0
    %1029 = vmatpush1.xpose.msra.mxu0 0.0
    %1030 = vmatprep.mubr.f32.mxu0 0.0
    %1031 = vmatmul.mubr.f32.gmra.mrb[0].mxu0 %v950
    %v1032 = vpop.f32.mrb[0].mxu0
    %v1033 = vadd.f32 0.0, %v1032
    %v1034 = vpop.f32.mrb[0].mxu0
    %1035 = vmatprep.mubr.f32.mxu0 0.0
    %1036 = vmatmul.mubr.f32.gmra.mrb[0].mxu0 %v952
    %v1037 = vpop.f32.mrb[0].mxu0
    %v1038 = vadd.f32 0.0, %v1037
    %v1039 = vpop.f32.mrb[0].mxu0
    %1040 = vmatprep.mubr.f32.mxu0 0.0
    %1041 = vmatmul.mubr.f32.gmra.mrb[0].mxu0 %v954
    %v1042 = vpop.f32.mrb[0].mxu0
    %v1043 = vadd.f32 0.0, %v1042
    %v1044 = vpop.f32.mrb[0].mxu0
    %1045 = vmatprep.mubr.f32.mxu0 0.0
    %1046 = vmatmul.mubr.f32.gmra.mrb[0].mxu0 %v956
    %v1047 = vpop.f32.mrb[0].mxu0
    %v1048 = vadd.f32 0.0, %v1047
    %v1049 = vpop.f32.mrb[0].mxu0
    %1050 = vdwg.mxu0
    %v1051 = vmul.f32 %v916, 1.442695
    %v1052 = vpow.pop %v1051
    %v1053 = vmul.f32 %v921, 1.442695
    %v1054 = vpow.pop %v1053
    %v1055 = vmul.f32 %v926, 1.442695
    %v1056 = vpow.pop %v1055
    %v1057 = vmul.f32 %v931, 1.442695
    %v1058 = vpow.pop %v1057
    %v1059 = vmul.f32 %v1033, %v188
    %v1060 = vmul.f32 %v1038, %v189
    %v1061 = vmul.f32 %v1043, %v190
    %v1062 = vmul.f32 %v1048, %v191
    %v1063 = vsel %vm184, %v1052, %v1059
    %v1064 = vsel %vm185, %v1054, %v1060
    %v1065 = vsel %vm186, %v1056, %v1061
    %v1066 = vsel %vm187, %v1058, %v1062
    %v1067 = vsel %vm220, %v1063, 0.0
    %1068 = vadd.xlane.f32.xlu0 %v1067
    %v1069 = vpop.xlane.xlu0 %1068
    %v1070 = vsel %vm220, %v1064, 0.0
    %1071 = vadd.xlane.f32.xlu0 %v1070
    %v1072 = vpop.xlane.xlu0 %1071
    %v1073 = vsel %vm220, %v1065, 0.0
    %1074 = vadd.xlane.f32.xlu0 %v1073
    %v1075 = vpop.xlane.xlu0 %1074
    %v1076 = vsel %vm220, %v1066, 0.0
    %1077 = vadd.xlane.f32.xlu0 %v1076
    %v1078 = vpop.xlane.xlu0 %1077
    %vm1079 = vcmp.gt.f32.partialorder %v1069, 0.0
    %vm1080 = vcmp.gt.f32.partialorder %v1072, 0.0
    %vm1081 = vcmp.gt.f32.partialorder %v1075, 0.0
    %vm1082 = vcmp.gt.f32.partialorder %v1078, 0.0
    %v1083 = vsel %vm1079, %v1069, 1.0
    %v1084 = vsel %vm1080, %v1072, 1.0
    %v1085 = vsel %vm1081, %v1075, 1.0
    %v1086 = vsel %vm1082, %v1078, 1.0
    %1087 = vrot.lane.b32.xlu0 %v300, 56
    %v1088 = vpop.permute.xlu0 %1087
    %1089 = vrot.lane.b32.xlu0 %v306, 56
    %v1090 = vpop.permute.xlu0 %1089
    %1091 = vrot.lane.b32.xlu0 %v312, 56
    %v1092 = vpop.permute.xlu0 %1091
    %1093 = vrot.lane.b32.xlu0 %v318, 56
    %v1094 = vpop.permute.xlu0 %1093
    %v1100 = vsel %vm220, %v1063, 0
    %v1103 = vsel %vm220, %v1064, 0
    %v1106 = vsel %vm220, %v1065, 0
    %v1109 = vsel %vm220, %v1066, 0
    %1111 = vmatprep.subr.mxu0 0.0
    %1112 = vmatpush1.msra.mxu0 %v1088
    %1113 = vmatprep.subr.mxu0 0.0
    %1114 = vmatpush1.msra.mxu0 %v1090
    %1115 = vmatprep.subr.mxu0 0.0
    %1116 = vmatpush1.msra.mxu0 %v1092
    %1117 = vmatprep.subr.mxu0 0.0
    %1118 = vmatpush1.msra.mxu0 %v1094
    %1119 = vmatprep.subr.mxu0 0.0
    %1120 = vmatpush1.msra.mxu0 0.0
    %1121 = vmatprep.subr.mxu0 0.0
    %1122 = vmatpush1.msra.mxu0 0.0
    %1123 = vmatprep.subr.mxu0 0.0
    %1124 = vmatpush1.msra.mxu0 0.0
    %1125 = vmatprep.subr.mxu0 0.0
    %1126 = vmatpush1.msra.mxu0 0.0
    %1127 = vmatprep.subr.mxu0 0.0
    %1128 = vmatpush1.msra.mxu0 0.0
    %1129 = vmatprep.subr.mxu0 0.0
    %1130 = vmatpush1.msra.mxu0 0.0
    %1131 = vmatprep.subr.mxu0 0.0
    %1132 = vmatpush1.msra.mxu0 0.0
    %1133 = vmatprep.subr.mxu0 0.0
    %1134 = vmatpush1.msra.mxu0 0.0
    %1135 = vmatprep.subr.mxu0 0.0
    %1136 = vmatpush1.msra.mxu0 0.0
    %1137 = vmatprep.subr.mxu0 0.0
    %1138 = vmatpush1.msra.mxu0 0.0
    %1139 = vmatprep.subr.mxu0 0.0
    %1140 = vmatpush1.msra.mxu0 0.0
    %1141 = vmatprep.subr.mxu0 0.0
    %1142 = vmatpush1.msra.mxu0 0.0
    %1143 = vmatprep.subr.mxu0 0.0
    %1144 = vmatpush1.msra.mxu0 0.0
    %1145 = vmatprep.subr.mxu0 0.0
    %1146 = vmatpush1.msra.mxu0 0.0
    %1147 = vmatprep.subr.mxu0 0.0
    %1148 = vmatpush1.msra.mxu0 0.0
    %1149 = vmatprep.subr.mxu0 0.0
    %1150 = vmatpush1.msra.mxu0 0.0
    %1151 = vmatprep.subr.mxu0 0.0
    %1152 = vmatpush1.msra.mxu0 0.0
    %1153 = vmatprep.subr.mxu0 0.0
    %1154 = vmatpush1.msra.mxu0 0.0
    %1155 = vmatprep.subr.mxu0 0.0
    %1156 = vmatpush1.msra.mxu0 0.0
    %1157 = vmatprep.subr.mxu0 0.0
    %1158 = vmatpush1.msra.mxu0 0.0
    %1159 = vmatprep.subr.mxu0 0.0
    %1160 = vmatpush1.msra.mxu0 0.0
    %1161 = vmatprep.subr.mxu0 0.0
    %1162 = vmatpush1.msra.mxu0 0.0
    %1163 = vmatprep.subr.mxu0 0.0
    %1164 = vmatpush1.msra.mxu0 0.0
    %1165 = vmatprep.subr.mxu0 0.0
    %1166 = vmatpush1.msra.mxu0 0.0
    %1167 = vmatprep.subr.mxu0 0.0
    %1168 = vmatpush1.msra.mxu0 0.0
    %1169 = vmatprep.subr.mxu0 0.0
    %1170 = vmatpush1.msra.mxu0 0.0
    %1171 = vmatprep.subr.mxu0 0.0
    %1172 = vmatpush1.msra.mxu0 0.0
    %1173 = vmatprep.subr.mxu0 0.0
    %1174 = vmatpush1.msra.mxu0 0.0
    %1175 = vmatprep.mubr.f32.mxu0 0.0
    %1176 = vmatmul.mubr.f32.gmra.mrb[0].mxu0 %v1100
    %v1177 = vpop.f32.mrb[0].mxu0
    %v1178 = vadd.f32 0.0, %v1177
    %v1179 = vpop.f32.mrb[0].mxu0
    %1180 = vmatprep.mubr.f32.mxu0 0.0
    %1181 = vmatmul.mubr.f32.gmra.mrb[0].mxu0 %v1103
    %v1182 = vpop.f32.mrb[0].mxu0
    %v1183 = vadd.f32 0.0, %v1182
    %v1184 = vpop.f32.mrb[0].mxu0
    %1185 = vmatprep.mubr.f32.mxu0 0.0
    %1186 = vmatmul.mubr.f32.gmra.mrb[0].mxu0 %v1106
    %v1187 = vpop.f32.mrb[0].mxu0
    %v1188 = vadd.f32 0.0, %v1187
    %v1189 = vpop.f32.mrb[0].mxu0
    %1190 = vmatprep.mubr.f32.mxu0 0.0
    %1191 = vmatmul.mubr.f32.gmra.mrb[0].mxu0 %v1109
    %v1192 = vpop.f32.mrb[0].mxu0
    %v1193 = vadd.f32 0.0, %v1192
    %v1194 = vpop.f32.mrb[0].mxu0
    %1195 = vdwg.mxu0
    %v1196 = vrcp.pop %v1083
    %v1197 = vrcp.pop %v1084
    %v1198 = vrcp.pop %v1085
    %v1199 = vrcp.pop %v1086
    %v1200 = vmul.f32 %v1178, %v1196
    %v1201 = vmul.f32 %v1183, %v1197
    %v1202 = vmul.f32 %v1188, %v1198
    %v1203 = vmul.f32 %v1193, %v1199
    %1204 = vrot.lane.b32.xlu0 %v300, 112
    %v1205 = vpop.permute.xlu0 %1204
    %1206 = vrot.lane.b32.xlu0 %v306, 112
    %v1207 = vpop.permute.xlu0 %1206
    %1208 = vrot.lane.b32.xlu0 %v312, 112
    %v1209 = vpop.permute.xlu0 %1208
    %1210 = vrot.lane.b32.xlu0 %v318, 112
    %v1211 = vpop.permute.xlu0 %1210
    %1212 = vrot.lane.b32.xlu0 %v300, 80
    %v1213 = vpop.permute.xlu0 %1212
    %1214 = vrot.lane.b32.xlu0 %v306, 80
    %v1215 = vpop.permute.xlu0 %1214
    %1216 = vrot.lane.b32.xlu0 %v312, 80
    %v1217 = vpop.permute.xlu0 %1216
    %1218 = vrot.lane.b32.xlu0 %v318, 80
    %v1219 = vpop.permute.xlu0 %1218
    %v1220 = vsel %vm448, %v1205, 0
    %v1222 = vsel %vm448, %v1207, 0
    %v1224 = vsel %vm448, %v1209, 0
    %v1226 = vsel %vm448, %v1211, 0
    %v1228 = vsel %vm448, %v1213, 0
    %v1230 = vsel %vm448, %v1215, 0
    %v1232 = vsel %vm448, %v1217, 0
    %v1234 = vsel %vm448, %v1219, 0
    %1236 = vmatprep.subr.mxu0 0.0
    %1237 = vmatpush1.xpose.msra.mxu0 %v1228
    %1238 = vmatprep.subr.mxu0 0.0
    %1239 = vmatpush1.xpose.msra.mxu0 %v1230
    %1240 = vmatprep.subr.mxu0 0.0
    %1241 = vmatpush1.xpose.msra.mxu0 %v1232
    %1242 = vmatprep.subr.mxu0 0.0
    %1243 = vmatpush1.xpose.msra.mxu0 %v1234
    %1244 = vmatprep.subr.mxu0 0.0
    %1245 = vmatpush1.xpose.msra.mxu0 0.0
    %1246 = vmatprep.subr.mxu0 0.0
    %1247 = vmatpush1.xpose.msra.mxu0 0.0
    %1248 = vmatprep.subr.mxu0 0.0
    %1249 = vmatpush1.xpose.msra.mxu0 0.0
    %1250 = vmatprep.subr.mxu0 0.0
    %1251 = vmatpush1.xpose.msra.mxu0 0.0
    %1252 = vmatprep.subr.mxu0 0.0
    %1253 = vmatpush1.xpose.msra.mxu0 0.0
    %1254 = vmatprep.subr.mxu0 0.0
    %1255 = vmatpush1.xpose.msra.mxu0 0.0
    %1256 = vmatprep.subr.mxu0 0.0
    %1257 = vmatpush1.xpose.msra.mxu0 0.0
    %1258 = vmatprep.subr.mxu0 0.0
    %1259 = vmatpush1.xpose.msra.mxu0 0.0
    %1260 = vmatprep.subr.mxu0 0.0
    %1261 = vmatpush1.xpose.msra.mxu0 0.0
    %1262 = vmatprep.subr.mxu0 0.0
    %1263 = vmatpush1.xpose.msra.mxu0 0.0
    %1264 = vmatprep.subr.mxu0 0.0
    %1265 = vmatpush1.xpose.msra.mxu0 0.0
    %1266 = vmatprep.subr.mxu0 0.0
    %1267 = vmatpush1.xpose.msra.mxu0 0.0
    %1268 = vmatprep.subr.mxu0 0.0
    %1269 = vmatpush1.xpose.msra.mxu0 0.0
    %1270 = vmatprep.subr.mxu0 0.0
    %1271 = vmatpush1.xpose.msra.mxu0 0.0
    %1272 = vmatprep.subr.mxu0 0.0
    %1273 = vmatpush1.xpose.msra.mxu0 0.0
    %1274 = vmatprep.subr.mxu0 0.0
    %1275 = vmatpush1.xpose.msra.mxu0 0.0
    %1276 = vmatprep.subr.mxu0 0.0
    %1277 = vmatpush1.xpose.msra.mxu0 0.0
    %1278 = vmatprep.subr.mxu0 0.0
    %1279 = vmatpush1.xpose.msra.mxu0 0.0
    %1280 = vmatprep.subr.mxu0 0.0
    %1281 = vmatpush1.xpose.msra.mxu0 0.0
    %1282 = vmatprep.subr.mxu0 0.0
    %1283 = vmatpush1.xpose.msra.mxu0 0.0
    %1284 = vmatprep.subr.mxu0 0.0
    %1285 = vmatpush1.xpose.msra.mxu0 0.0
    %1286 = vmatprep.subr.mxu0 0.0
    %1287 = vmatpush1.xpose.msra.mxu0 0.0
    %1288 = vmatprep.subr.mxu0 0.0
    %1289 = vmatpush1.xpose.msra.mxu0 0.0
    %1290 = vmatprep.subr.mxu0 0.0
    %1291 = vmatpush1.xpose.msra.mxu0 0.0
    %1292 = vmatprep.subr.mxu0 0.0
    %1293 = vmatpush1.xpose.msra.mxu0 0.0
    %1294 = vmatprep.subr.mxu0 0.0
    %1295 = vmatpush1.xpose.msra.mxu0 0.0
    %1296 = vmatprep.subr.mxu0 0.0
    %1297 = vmatpush1.xpose.msra.mxu0 0.0
    %1298 = vmatprep.subr.mxu0 0.0
    %1299 = vmatpush1.xpose.msra.mxu0 0.0
    %1300 = vmatprep.mubr.f32.mxu0 0.0
    %1301 = vmatmul.mubr.f32.gmra.mrb[0].mxu0 %v1220
    %v1302 = vpop.f32.mrb[0].mxu0
    %v1303 = vadd.f32 0.0, %v1302
    %v1304 = vpop.f32.mrb[0].mxu0
    %1305 = vmatprep.mubr.f32.mxu0 0.0
    %1306 = vmatmul.mubr.f32.gmra.mrb[0].mxu0 %v1222
    %v1307 = vpop.f32.mrb[0].mxu0
    %v1308 = vadd.f32 0.0, %v1307
    %v1309 = vpop.f32.mrb[0].mxu0
    %1310 = vmatprep.mubr.f32.mxu0 0.0
    %1311 = vmatmul.mubr.f32.gmra.mrb[0].mxu0 %v1224
    %v1312 = vpop.f32.mrb[0].mxu0
    %v1313 = vadd.f32 0.0, %v1312
    %v1314 = vpop.f32.mrb[0].mxu0
    %1315 = vmatprep.mubr.f32.mxu0 0.0
    %1316 = vmatmul.mubr.f32.gmra.mrb[0].mxu0 %v1226
    %v1317 = vpop.f32.mrb[0].mxu0
    %v1318 = vadd.f32 0.0, %v1317
    %v1319 = vpop.f32.mrb[0].mxu0
    %1320 = vdwg.mxu0
    %1321 = vrot.lane.b32.xlu0 %v429, 96
    %v1322 = vpop.permute.xlu0 %1321
    %1323 = vrot.lane.b32.xlu0 %v431, 96
    %v1324 = vpop.permute.xlu0 %1323
    %1325 = vrot.lane.b32.xlu0 %v433, 96
    %v1326 = vpop.permute.xlu0 %1325
    %1327 = vrot.lane.b32.xlu0 %v435, 96
    %v1328 = vpop.permute.xlu0 %1327
    %1329 = vrot.lane.b32.xlu0 %v429, 32
    %v1330 = vpop.permute.xlu0 %1329
    %1331 = vrot.lane.b32.xlu0 %v431, 32
    %v1332 = vpop.permute.xlu0 %1331
    %1333 = vrot.lane.b32.xlu0 %v433, 32
    %v1334 = vpop.permute.xlu0 %1333
    %1335 = vrot.lane.b32.xlu0 %v435, 32
    %v1336 = vpop.permute.xlu0 %1335
    %v1337 = vsel %vm562, %v1322, 0
    %v1339 = vsel %vm562, %v1324, 0
    %v1341 = vsel %vm562, %v1326, 0
    %v1343 = vsel %vm562, %v1328, 0
    %v1345 = vsel %vm562, %v1330, 0
    %v1347 = vsel %vm562, %v1332, 0
    %v1349 = vsel %vm562, %v1334, 0
    %v1351 = vsel %vm562, %v1336, 0
    %1353 = vmatprep.subr.mxu0 0.0
    %1354 = vmatpush1.xpose.msra.mxu0 %v1345
    %1355 = vmatprep.subr.mxu0 0.0
    %1356 = vmatpush1.xpose.msra.mxu0 %v1347
    %1357 = vmatprep.subr.mxu0 0.0
    %1358 = vmatpush1.xpose.msra.mxu0 %v1349
    %1359 = vmatprep.subr.mxu0 0.0
    %1360 = vmatpush1.xpose.msra.mxu0 %v1351
    %1361 = vmatprep.subr.mxu0 0.0
    %1362 = vmatpush1.xpose.msra.mxu0 0.0
    %1363 = vmatprep.subr.mxu0 0.0
    %1364 = vmatpush1.xpose.msra.mxu0 0.0
    %1365 = vmatprep.subr.mxu0 0.0
    %1366 = vmatpush1.xpose.msra.mxu0 0.0
    %1367 = vmatprep.subr.mxu0 0.0
    %1368 = vmatpush1.xpose.msra.mxu0 0.0
    %1369 = vmatprep.subr.mxu0 0.0
    %1370 = vmatpush1.xpose.msra.mxu0 0.0
    %1371 = vmatprep.subr.mxu0 0.0
    %1372 = vmatpush1.xpose.msra.mxu0 0.0
    %1373 = vmatprep.subr.mxu0 0.0
    %1374 = vmatpush1.xpose.msra.mxu0 0.0
    %1375 = vmatprep.subr.mxu0 0.0
    %1376 = vmatpush1.xpose.msra.mxu0 0.0
    %1377 = vmatprep.subr.mxu0 0.0
    %1378 = vmatpush1.xpose.msra.mxu0 0.0
    %1379 = vmatprep.subr.mxu0 0.0
    %1380 = vmatpush1.xpose.msra.mxu0 0.0
    %1381 = vmatprep.subr.mxu0 0.0
    %1382 = vmatpush1.xpose.msra.mxu0 0.0
    %1383 = vmatprep.subr.mxu0 0.0
    %1384 = vmatpush1.xpose.msra.mxu0 0.0
    %1385 = vmatprep.subr.mxu0 0.0
    %1386 = vmatpush1.xpose.msra.mxu0 0.0
    %1387 = vmatprep.subr.mxu0 0.0
    %1388 = vmatpush1.xpose.msra.mxu0 0.0
    %1389 = vmatprep.subr.mxu0 0.0
    %1390 = vmatpush1.xpose.msra.mxu0 0.0
    %1391 = vmatprep.subr.mxu0 0.0
    %1392 = vmatpush1.xpose.msra.mxu0 0.0
    %1393 = vmatprep.subr.mxu0 0.0
    %1394 = vmatpush1.xpose.msra.mxu0 0.0
    %1395 = vmatprep.subr.mxu0 0.0
    %1396 = vmatpush1.xpose.msra.mxu0 0.0
    %1397 = vmatprep.subr.mxu0 0.0
    %1398 = vmatpush1.xpose.msra.mxu0 0.0
    %1399 = vmatprep.subr.mxu0 0.0
    %1400 = vmatpush1.xpose.msra.mxu0 0.0
    %1401 = vmatprep.subr.mxu0 0.0
    %1402 = vmatpush1.xpose.msra.mxu0 0.0
    %1403 = vmatprep.subr.mxu0 0.0
    %1404 = vmatpush1.xpose.msra.mxu0 0.0
    %1405 = vmatprep.subr.mxu0 0.0
    %1406 = vmatpush1.xpose.msra.mxu0 0.0
    %1407 = vmatprep.subr.mxu0 0.0
    %1408 = vmatpush1.xpose.msra.mxu0 0.0
    %1409 = vmatprep.subr.mxu0 0.0
    %1410 = vmatpush1.xpose.msra.mxu0 0.0
    %1411 = vmatprep.subr.mxu0 0.0
    %1412 = vmatpush1.xpose.msra.mxu0 0.0
    %1413 = vmatprep.subr.mxu0 0.0
    %1414 = vmatpush1.xpose.msra.mxu0 0.0
    %1415 = vmatprep.subr.mxu0 0.0
    %1416 = vmatpush1.xpose.msra.mxu0 0.0
    %1417 = vmatprep.mubr.f32.mxu0 0.0
    %1418 = vmatmul.mubr.f32.gmra.mrb[0].mxu0 %v1337
    %v1419 = vpop.f32.mrb[0].mxu0
    %v1420 = vadd.f32 0.0, %v1419
    %v1421 = vpop.f32.mrb[0].mxu0
    %1422 = vmatprep.mubr.f32.mxu0 0.0
    %1423 = vmatmul.mubr.f32.gmra.mrb[0].mxu0 %v1339
    %v1424 = vpop.f32.mrb[0].mxu0
    %v1425 = vadd.f32 0.0, %v1424
    %v1426 = vpop.f32.mrb[0].mxu0
    %1427 = vmatprep.mubr.f32.mxu0 0.0
    %1428 = vmatmul.mubr.f32.gmra.mrb[0].mxu0 %v1341
    %v1429 = vpop.f32.mrb[0].mxu0
    %v1430 = vadd.f32 0.0, %v1429
    %v1431 = vpop.f32.mrb[0].mxu0
    %1432 = vmatprep.mubr.f32.mxu0 0.0
    %1433 = vmatmul.mubr.f32.gmra.mrb[0].mxu0 %v1343
    %v1434 = vpop.f32.mrb[0].mxu0
    %v1435 = vadd.f32 0.0, %v1434
    %v1436 = vpop.f32.mrb[0].mxu0
    %1437 = vdwg.mxu0
    %v1438 = vmul.f32 %v1303, 1.442695
    %v1439 = vpow.pop %v1438
    %v1440 = vmul.f32 %v1308, 1.442695
    %v1441 = vpow.pop %v1440
    %v1442 = vmul.f32 %v1313, 1.442695
    %v1443 = vpow.pop %v1442
    %v1444 = vmul.f32 %v1318, 1.442695
    %v1445 = vpow.pop %v1444
    %v1446 = vmul.f32 %v1420, %v188
    %v1447 = vmul.f32 %v1425, %v189
    %v1448 = vmul.f32 %v1430, %v190
    %v1449 = vmul.f32 %v1435, %v191
    %v1450 = vsel %vm184, %v1439, %v1446
    %v1451 = vsel %vm185, %v1441, %v1447
    %v1452 = vsel %vm186, %v1443, %v1448
    %v1453 = vsel %vm187, %v1445, %v1449
    %v1454 = vsel %vm220, %v1450, 0.0
    %1455 = vadd.xlane.f32.xlu0 %v1454
    %v1456 = vpop.xlane.xlu0 %1455
    %v1457 = vsel %vm220, %v1451, 0.0
    %1458 = vadd.xlane.f32.xlu0 %v1457
    %v1459 = vpop.xlane.xlu0 %1458
    %v1460 = vsel %vm220, %v1452, 0.0
    %1461 = vadd.xlane.f32.xlu0 %v1460
    %v1462 = vpop.xlane.xlu0 %1461
    %v1463 = vsel %vm220, %v1453, 0.0
    %1464 = vadd.xlane.f32.xlu0 %v1463
    %v1465 = vpop.xlane.xlu0 %1464
    %vm1466 = vcmp.gt.f32.partialorder %v1456, 0.0
    %vm1467 = vcmp.gt.f32.partialorder %v1459, 0.0
    %vm1468 = vcmp.gt.f32.partialorder %v1462, 0.0
    %vm1469 = vcmp.gt.f32.partialorder %v1465, 0.0
    %v1470 = vsel %vm1466, %v1456, 1.0
    %v1471 = vsel %vm1467, %v1459, 1.0
    %v1472 = vsel %vm1468, %v1462, 1.0
    %v1473 = vsel %vm1469, %v1465, 1.0
    %1474 = vrot.lane.b32.xlu0 %v300, 48
    %v1475 = vpop.permute.xlu0 %1474
    %1476 = vrot.lane.b32.xlu0 %v306, 48
    %v1477 = vpop.permute.xlu0 %1476
    %1478 = vrot.lane.b32.xlu0 %v312, 48
    %v1479 = vpop.permute.xlu0 %1478
    %1480 = vrot.lane.b32.xlu0 %v318, 48
    %v1481 = vpop.permute.xlu0 %1480
    %v1487 = vsel %vm220, %v1450, 0
    %v1490 = vsel %vm220, %v1451, 0
    %v1493 = vsel %vm220, %v1452, 0
    %v1496 = vsel %vm220, %v1453, 0
    %1498 = vmatprep.subr.mxu0 0.0
    %1499 = vmatpush1.msra.mxu0 %v1475
    %1500 = vmatprep.subr.mxu0 0.0
    %1501 = vmatpush1.msra.mxu0 %v1477
    %1502 = vmatprep.subr.mxu0 0.0
    %1503 = vmatpush1.msra.mxu0 %v1479
    %1504 = vmatprep.subr.mxu0 0.0
    %1505 = vmatpush1.msra.mxu0 %v1481
    %1506 = vmatprep.subr.mxu0 0.0
    %1507 = vmatpush1.msra.mxu0 0.0
    %1508 = vmatprep.subr.mxu0 0.0
    %1509 = vmatpush1.msra.mxu0 0.0
    %1510 = vmatprep.subr.mxu0 0.0
    %1511 = vmatpush1.msra.mxu0 0.0
    %1512 = vmatprep.subr.mxu0 0.0
    %1513 = vmatpush1.msra.mxu0 0.0
    %1514 = vmatprep.subr.mxu0 0.0
    %1515 = vmatpush1.msra.mxu0 0.0
    %1516 = vmatprep.subr.mxu0 0.0
    %1517 = vmatpush1.msra.mxu0 0.0
    %1518 = vmatprep.subr.mxu0 0.0
    %1519 = vmatpush1.msra.mxu0 0.0
    %1520 = vmatprep.subr.mxu0 0.0
    %1521 = vmatpush1.msra.mxu0 0.0
    %1522 = vmatprep.subr.mxu0 0.0
    %1523 = vmatpush1.msra.mxu0 0.0
    %1524 = vmatprep.subr.mxu0 0.0
    %1525 = vmatpush1.msra.mxu0 0.0
    %1526 = vmatprep.subr.mxu0 0.0
    %1527 = vmatpush1.msra.mxu0 0.0
    %1528 = vmatprep.subr.mxu0 0.0
    %1529 = vmatpush1.msra.mxu0 0.0
    %1530 = vmatprep.subr.mxu0 0.0
    %1531 = vmatpush1.msra.mxu0 0.0
    %1532 = vmatprep.subr.mxu0 0.0
    %1533 = vmatpush1.msra.mxu0 0.0
    %1534 = vmatprep.subr.mxu0 0.0
    %1535 = vmatpush1.msra.mxu0 0.0
    %1536 = vmatprep.subr.mxu0 0.0
    %1537 = vmatpush1.msra.mxu0 0.0
    %1538 = vmatprep.subr.mxu0 0.0
    %1539 = vmatpush1.msra.mxu0 0.0
    %1540 = vmatprep.subr.mxu0 0.0
    %1541 = vmatpush1.msra.mxu0 0.0
    %1542 = vmatprep.subr.mxu0 0.0
    %1543 = vmatpush1.msra.mxu0 0.0
    %1544 = vmatprep.subr.mxu0 0.0
    %1545 = vmatpush1.msra.mxu0 0.0
    %1546 = vmatprep.subr.mxu0 0.0
    %1547 = vmatpush1.msra.mxu0 0.0
    %1548 = vmatprep.subr.mxu0 0.0
    %1549 = vmatpush1.msra.mxu0 0.0
    %1550 = vmatprep.subr.mxu0 0.0
    %1551 = vmatpush1.msra.mxu0 0.0
    %1552 = vmatprep.subr.mxu0 0.0
    %1553 = vmatpush1.msra.mxu0 0.0
    %1554 = vmatprep.subr.mxu0 0.0
    %1555 = vmatpush1.msra.mxu0 0.0
    %1556 = vmatprep.subr.mxu0 0.0
    %1557 = vmatpush1.msra.mxu0 0.0
    %1558 = vmatprep.subr.mxu0 0.0
    %1559 = vmatpush1.msra.mxu0 0.0
    %1560 = vmatprep.subr.mxu0 0.0
    %1561 = vmatpush1.msra.mxu0 0.0
    %1562 = vmatprep.mubr.f32.mxu0 0.0
    %1563 = vmatmul.mubr.f32.gmra.mrb[0].mxu0 %v1487
    %v1564 = vpop.f32.mrb[0].mxu0
    %v1565 = vadd.f32 0.0, %v1564
    %v1566 = vpop.f32.mrb[0].mxu0
    %1567 = vmatprep.mubr.f32.mxu0 0.0
    %1568 = vmatmul.mubr.f32.gmra.mrb[0].mxu0 %v1490
    %v1569 = vpop.f32.mrb[0].mxu0
    %v1570 = vadd.f32 0.0, %v1569
    %v1571 = vpop.f32.mrb[0].mxu0
    %1572 = vmatprep.mubr.f32.mxu0 0.0
    %1573 = vmatmul.mubr.f32.gmra.mrb[0].mxu0 %v1493
    %v1574 = vpop.f32.mrb[0].mxu0
    %v1575 = vadd.f32 0.0, %v1574
    %v1576 = vpop.f32.mrb[0].mxu0
    %1577 = vmatprep.mubr.f32.mxu0 0.0
    %1578 = vmatmul.mubr.f32.gmra.mrb[0].mxu0 %v1496
    %v1579 = vpop.f32.mrb[0].mxu0
    %v1580 = vadd.f32 0.0, %v1579
    %v1581 = vpop.f32.mrb[0].mxu0
    %1582 = vdwg.mxu0
    %v1583 = vrcp.pop %v1470
    %v1584 = vrcp.pop %v1471
    %v1585 = vrcp.pop %v1472
    %v1586 = vrcp.pop %v1473
    %v1587 = vmul.f32 %v1565, %v1583
    %v1588 = vmul.f32 %v1570, %v1584
    %v1589 = vmul.f32 %v1575, %v1585
    %v1590 = vmul.f32 %v1580, %v1586
    %1591 = vrot.lane.b32.xlu0 %v300, 104
    %v1592 = vpop.permute.xlu0 %1591
    %1593 = vrot.lane.b32.xlu0 %v306, 104
    %v1594 = vpop.permute.xlu0 %1593
    %1595 = vrot.lane.b32.xlu0 %v312, 104
    %v1596 = vpop.permute.xlu0 %1595
    %1597 = vrot.lane.b32.xlu0 %v318, 104
    %v1598 = vpop.permute.xlu0 %1597
    %1599 = vrot.lane.b32.xlu0 %v300, 72
    %v1600 = vpop.permute.xlu0 %1599
    %1601 = vrot.lane.b32.xlu0 %v306, 72
    %v1602 = vpop.permute.xlu0 %1601
    %1603 = vrot.lane.b32.xlu0 %v312, 72
    %v1604 = vpop.permute.xlu0 %1603
    %1605 = vrot.lane.b32.xlu0 %v318, 72
    %v1606 = vpop.permute.xlu0 %1605
    %v1607 = vsel %vm448, %v1592, 0
    %v1609 = vsel %vm448, %v1594, 0
    %v1611 = vsel %vm448, %v1596, 0
    %v1613 = vsel %vm448, %v1598, 0
    %v1615 = vsel %vm448, %v1600, 0
    %v1617 = vsel %vm448, %v1602, 0
    %v1619 = vsel %vm448, %v1604, 0
    %v1621 = vsel %vm448, %v1606, 0
    %1623 = vmatprep.subr.mxu0 0.0
    %1624 = vmatpush1.xpose.msra.mxu0 %v1615
    %1625 = vmatprep.subr.mxu0 0.0
    %1626 = vmatpush1.xpose.msra.mxu0 %v1617
    %1627 = vmatprep.subr.mxu0 0.0
    %1628 = vmatpush1.xpose.msra.mxu0 %v1619
    %1629 = vmatprep.subr.mxu0 0.0
    %1630 = vmatpush1.xpose.msra.mxu0 %v1621
    %1631 = vmatprep.subr.mxu0 0.0
    %1632 = vmatpush1.xpose.msra.mxu0 0.0
    %1633 = vmatprep.subr.mxu0 0.0
    %1634 = vmatpush1.xpose.msra.mxu0 0.0
    %1635 = vmatprep.subr.mxu0 0.0
    %1636 = vmatpush1.xpose.msra.mxu0 0.0
    %1637 = vmatprep.subr.mxu0 0.0
    %1638 = vmatpush1.xpose.msra.mxu0 0.0
    %1639 = vmatprep.subr.mxu0 0.0
    %1640 = vmatpush1.xpose.msra.mxu0 0.0
    %1641 = vmatprep.subr.mxu0 0.0
    %1642 = vmatpush1.xpose.msra.mxu0 0.0
    %1643 = vmatprep.subr.mxu0 0.0
    %1644 = vmatpush1.xpose.msra.mxu0 0.0
    %1645 = vmatprep.subr.mxu0 0.0
    %1646 = vmatpush1.xpose.msra.mxu0 0.0
    %1647 = vmatprep.subr.mxu0 0.0
    %1648 = vmatpush1.xpose.msra.mxu0 0.0
    %1649 = vmatprep.subr.mxu0 0.0
    %1650 = vmatpush1.xpose.msra.mxu0 0.0
    %1651 = vmatprep.subr.mxu0 0.0
    %1652 = vmatpush1.xpose.msra.mxu0 0.0
    %1653 = vmatprep.subr.mxu0 0.0
    %1654 = vmatpush1.xpose.msra.mxu0 0.0
    %1655 = vmatprep.subr.mxu0 0.0
    %1656 = vmatpush1.xpose.msra.mxu0 0.0
    %1657 = vmatprep.subr.mxu0 0.0
    %1658 = vmatpush1.xpose.msra.mxu0 0.0
    %1659 = vmatprep.subr.mxu0 0.0
    %1660 = vmatpush1.xpose.msra.mxu0 0.0
    %1661 = vmatprep.subr.mxu0 0.0
    %1662 = vmatpush1.xpose.msra.mxu0 0.0
    %1663 = vmatprep.subr.mxu0 0.0
    %1664 = vmatpush1.xpose.msra.mxu0 0.0
    %1665 = vmatprep.subr.mxu0 0.0
    %1666 = vmatpush1.xpose.msra.mxu0 0.0
    %1667 = vmatprep.subr.mxu0 0.0
    %1668 = vmatpush1.xpose.msra.mxu0 0.0
    %1669 = vmatprep.subr.mxu0 0.0
    %1670 = vmatpush1.xpose.msra.mxu0 0.0
    %1671 = vmatprep.subr.mxu0 0.0
    %1672 = vmatpush1.xpose.msra.mxu0 0.0
    %1673 = vmatprep.subr.mxu0 0.0
    %1674 = vmatpush1.xpose.msra.mxu0 0.0
    %1675 = vmatprep.subr.mxu0 0.0
    %1676 = vmatpush1.xpose.msra.mxu0 0.0
    %1677 = vmatprep.subr.mxu0 0.0
    %1678 = vmatpush1.xpose.msra.mxu0 0.0
    %1679 = vmatprep.subr.mxu0 0.0
    %1680 = vmatpush1.xpose.msra.mxu0 0.0
    %1681 = vmatprep.subr.mxu0 0.0
    %1682 = vmatpush1.xpose.msra.mxu0 0.0
    %1683 = vmatprep.subr.mxu0 0.0
    %1684 = vmatpush1.xpose.msra.mxu0 0.0
    %1685 = vmatprep.subr.mxu0 0.0
    %1686 = vmatpush1.xpose.msra.mxu0 0.0
    %1687 = vmatprep.mubr.f32.mxu0 0.0
    %1688 = vmatmul.mubr.f32.gmra.mrb[0].mxu0 %v1607
    %v1689 = vpop.f32.mrb[0].mxu0
    %v1690 = vadd.f32 0.0, %v1689
    %v1691 = vpop.f32.mrb[0].mxu0
    %1692 = vmatprep.mubr.f32.mxu0 0.0
    %1693 = vmatmul.mubr.f32.gmra.mrb[0].mxu0 %v1609
    %v1694 = vpop.f32.mrb[0].mxu0
    %v1695 = vadd.f32 0.0, %v1694
    %v1696 = vpop.f32.mrb[0].mxu0
    %1697 = vmatprep.mubr.f32.mxu0 0.0
    %1698 = vmatmul.mubr.f32.gmra.mrb[0].mxu0 %v1611
    %v1699 = vpop.f32.mrb[0].mxu0
    %v1700 = vadd.f32 0.0, %v1699
    %v1701 = vpop.f32.mrb[0].mxu0
    %1702 = vmatprep.mubr.f32.mxu0 0.0
    %1703 = vmatmul.mubr.f32.gmra.mrb[0].mxu0 %v1613
    %v1704 = vpop.f32.mrb[0].mxu0
    %v1705 = vadd.f32 0.0, %v1704
    %v1706 = vpop.f32.mrb[0].mxu0
    %1707 = vdwg.mxu0
    %1708 = vrot.lane.b32.xlu0 %v429, 80
    %v1709 = vpop.permute.xlu0 %1708
    %1710 = vrot.lane.b32.xlu0 %v431, 80
    %v1711 = vpop.permute.xlu0 %1710
    %1712 = vrot.lane.b32.xlu0 %v433, 80
    %v1713 = vpop.permute.xlu0 %1712
    %1714 = vrot.lane.b32.xlu0 %v435, 80
    %v1715 = vpop.permute.xlu0 %1714
    %1716 = vrot.lane.b32.xlu0 %v429, 16
    %v1717 = vpop.permute.xlu0 %1716
    %1718 = vrot.lane.b32.xlu0 %v431, 16
    %v1719 = vpop.permute.xlu0 %1718
    %1720 = vrot.lane.b32.xlu0 %v433, 16
    %v1721 = vpop.permute.xlu0 %1720
    %1722 = vrot.lane.b32.xlu0 %v435, 16
    %v1723 = vpop.permute.xlu0 %1722
    %v1724 = vsel %vm562, %v1709, 0
    %v1726 = vsel %vm562, %v1711, 0
    %v1728 = vsel %vm562, %v1713, 0
    %v1730 = vsel %vm562, %v1715, 0
    %v1732 = vsel %vm562, %v1717, 0
    %v1734 = vsel %vm562, %v1719, 0
    %v1736 = vsel %vm562, %v1721, 0
    %v1738 = vsel %vm562, %v1723, 0
    %1740 = vmatprep.subr.mxu0 0.0
    %1741 = vmatpush1.xpose.msra.mxu0 %v1732
    %1742 = vmatprep.subr.mxu0 0.0
    %1743 = vmatpush1.xpose.msra.mxu0 %v1734
    %1744 = vmatprep.subr.mxu0 0.0
    %1745 = vmatpush1.xpose.msra.mxu0 %v1736
    %1746 = vmatprep.subr.mxu0 0.0
    %1747 = vmatpush1.xpose.msra.mxu0 %v1738
    %1748 = vmatprep.subr.mxu0 0.0
    %1749 = vmatpush1.xpose.msra.mxu0 0.0
    %1750 = vmatprep.subr.mxu0 0.0
    %1751 = vmatpush1.xpose.msra.mxu0 0.0
    %1752 = vmatprep.subr.mxu0 0.0
    %1753 = vmatpush1.xpose.msra.mxu0 0.0
    %1754 = vmatprep.subr.mxu0 0.0
    %1755 = vmatpush1.xpose.msra.mxu0 0.0
    %1756 = vmatprep.subr.mxu0 0.0
    %1757 = vmatpush1.xpose.msra.mxu0 0.0
    %1758 = vmatprep.subr.mxu0 0.0
    %1759 = vmatpush1.xpose.msra.mxu0 0.0
    %1760 = vmatprep.subr.mxu0 0.0
    %1761 = vmatpush1.xpose.msra.mxu0 0.0
    %1762 = vmatprep.subr.mxu0 0.0
    %1763 = vmatpush1.xpose.msra.mxu0 0.0
    %1764 = vmatprep.subr.mxu0 0.0
    %1765 = vmatpush1.xpose.msra.mxu0 0.0
    %1766 = vmatprep.subr.mxu0 0.0
    %1767 = vmatpush1.xpose.msra.mxu0 0.0
    %1768 = vmatprep.subr.mxu0 0.0
    %1769 = vmatpush1.xpose.msra.mxu0 0.0
    %1770 = vmatprep.subr.mxu0 0.0
    %1771 = vmatpush1.xpose.msra.mxu0 0.0
    %1772 = vmatprep.subr.mxu0 0.0
    %1773 = vmatpush1.xpose.msra.mxu0 0.0
    %1774 = vmatprep.subr.mxu0 0.0
    %1775 = vmatpush1.xpose.msra.mxu0 0.0
    %1776 = vmatprep.subr.mxu0 0.0
    %1777 = vmatpush1.xpose.msra.mxu0 0.0
    %1778 = vmatprep.subr.mxu0 0.0
    %1779 = vmatpush1.xpose.msra.mxu0 0.0
    %1780 = vmatprep.subr.mxu0 0.0
    %1781 = vmatpush1.xpose.msra.mxu0 0.0
    %1782 = vmatprep.subr.mxu0 0.0
    %1783 = vmatpush1.xpose.msra.mxu0 0.0
    %1784 = vmatprep.subr.mxu0 0.0
    %1785 = vmatpush1.xpose.msra.mxu0 0.0
    %1786 = vmatprep.subr.mxu0 0.0
    %1787 = vmatpush1.xpose.msra.mxu0 0.0
    %1788 = vmatprep.subr.mxu0 0.0
    %1789 = vmatpush1.xpose.msra.mxu0 0.0
    %1790 = vmatprep.subr.mxu0 0.0
    %1791 = vmatpush1.xpose.msra.mxu0 0.0
    %1792 = vmatprep.subr.mxu0 0.0
    %1793 = vmatpush1.xpose.msra.mxu0 0.0
    %1794 = vmatprep.subr.mxu0 0.0
    %1795 = vmatpush1.xpose.msra.mxu0 0.0
    %1796 = vmatprep.subr.mxu0 0.0
    %1797 = vmatpush1.xpose.msra.mxu0 0.0
    %1798 = vmatprep.subr.mxu0 0.0
    %1799 = vmatpush1.xpose.msra.mxu0 0.0
    %1800 = vmatprep.subr.mxu0 0.0
    %1801 = vmatpush1.xpose.msra.mxu0 0.0
    %1802 = vmatprep.subr.mxu0 0.0
    %1803 = vmatpush1.xpose.msra.mxu0 0.0
    %1804 = vmatprep.mubr.f32.mxu0 0.0
    %1805 = vmatmul.mubr.f32.gmra.mrb[0].mxu0 %v1724
    %v1806 = vpop.f32.mrb[0].mxu0
    %v1807 = vadd.f32 0.0, %v1806
    %v1808 = vpop.f32.mrb[0].mxu0
    %1809 = vmatprep.mubr.f32.mxu0 0.0
    %1810 = vmatmul.mubr.f32.gmra.mrb[0].mxu0 %v1726
    %v1811 = vpop.f32.mrb[0].mxu0
    %v1812 = vadd.f32 0.0, %v1811
    %v1813 = vpop.f32.mrb[0].mxu0
    %1814 = vmatprep.mubr.f32.mxu0 0.0
    %1815 = vmatmul.mubr.f32.gmra.mrb[0].mxu0 %v1728
    %v1816 = vpop.f32.mrb[0].mxu0
    %v1817 = vadd.f32 0.0, %v1816
    %v1818 = vpop.f32.mrb[0].mxu0
    %1819 = vmatprep.mubr.f32.mxu0 0.0
    %1820 = vmatmul.mubr.f32.gmra.mrb[0].mxu0 %v1730
    %v1821 = vpop.f32.mrb[0].mxu0
    %v1822 = vadd.f32 0.0, %v1821
    %v1823 = vpop.f32.mrb[0].mxu0
    %1824 = vdwg.mxu0
    %v1825 = vmul.f32 %v1690, 1.442695
    %v1826 = vpow.pop %v1825
    %v1827 = vmul.f32 %v1695, 1.442695
    %v1828 = vpow.pop %v1827
    %v1829 = vmul.f32 %v1700, 1.442695
    %v1830 = vpow.pop %v1829
    %v1831 = vmul.f32 %v1705, 1.442695
    %v1832 = vpow.pop %v1831
    %v1833 = vmul.f32 %v1807, %v188
    %v1834 = vmul.f32 %v1812, %v189
    %v1835 = vmul.f32 %v1817, %v190
    %v1836 = vmul.f32 %v1822, %v191
    %v1837 = vsel %vm184, %v1826, %v1833
    %v1838 = vsel %vm185, %v1828, %v1834
    %v1839 = vsel %vm186, %v1830, %v1835
    %v1840 = vsel %vm187, %v1832, %v1836
    %v1841 = vsel %vm220, %v1837, 0.0
    %1842 = vadd.xlane.f32.xlu0 %v1841
    %v1843 = vpop.xlane.xlu0 %1842
    %v1844 = vsel %vm220, %v1838, 0.0
    %1845 = vadd.xlane.f32.xlu0 %v1844
    %v1846 = vpop.xlane.xlu0 %1845
    %v1847 = vsel %vm220, %v1839, 0.0
    %1848 = vadd.xlane.f32.xlu0 %v1847
    %v1849 = vpop.xlane.xlu0 %1848
    %v1850 = vsel %vm220, %v1840, 0.0
    %1851 = vadd.xlane.f32.xlu0 %v1850
    %v1852 = vpop.xlane.xlu0 %1851
    %vm1853 = vcmp.gt.f32.partialorder %v1843, 0.0
    %vm1854 = vcmp.gt.f32.partialorder %v1846, 0.0
    %vm1855 = vcmp.gt.f32.partialorder %v1849, 0.0
    %vm1856 = vcmp.gt.f32.partialorder %v1852, 0.0
    %v1857 = vsel %vm1853, %v1843, 1.0
    %v1858 = vsel %vm1854, %v1846, 1.0
    %v1859 = vsel %vm1855, %v1849, 1.0
    %v1860 = vsel %vm1856, %v1852, 1.0
    %1861 = vrot.lane.b32.xlu0 %v300, 40
    %v1862 = vpop.permute.xlu0 %1861
    %1863 = vrot.lane.b32.xlu0 %v306, 40
    %v1864 = vpop.permute.xlu0 %1863
    %1865 = vrot.lane.b32.xlu0 %v312, 40
    %v1866 = vpop.permute.xlu0 %1865
    %1867 = vrot.lane.b32.xlu0 %v318, 40
    %v1868 = vpop.permute.xlu0 %1867
    %v1874 = vsel %vm220, %v1837, 0
    %v1877 = vsel %vm220, %v1838, 0
    %v1880 = vsel %vm220, %v1839, 0
    %v1883 = vsel %vm220, %v1840, 0
    %1885 = vmatprep.subr.mxu0 0.0
    %1886 = vmatpush1.msra.mxu0 %v1862
    %1887 = vmatprep.subr.mxu0 0.0
    %1888 = vmatpush1.msra.mxu0 %v1864
    %1889 = vmatprep.subr.mxu0 0.0
    %1890 = vmatpush1.msra.mxu0 %v1866
    %1891 = vmatprep.subr.mxu0 0.0
    %1892 = vmatpush1.msra.mxu0 %v1868
    %1893 = vmatprep.subr.mxu0 0.0
    %1894 = vmatpush1.msra.mxu0 0.0
    %1895 = vmatprep.subr.mxu0 0.0
    %1896 = vmatpush1.msra.mxu0 0.0
    %1897 = vmatprep.subr.mxu0 0.0
    %1898 = vmatpush1.msra.mxu0 0.0
    %1899 = vmatprep.subr.mxu0 0.0
    %1900 = vmatpush1.msra.mxu0 0.0
    %1901 = vmatprep.subr.mxu0 0.0
    %1902 = vmatpush1.msra.mxu0 0.0
    %1903 = vmatprep.subr.mxu0 0.0
    %1904 = vmatpush1.msra.mxu0 0.0
    %1905 = vmatprep.subr.mxu0 0.0
    %1906 = vmatpush1.msra.mxu0 0.0
    %1907 = vmatprep.subr.mxu0 0.0
    %1908 = vmatpush1.msra.mxu0 0.0
    %1909 = vmatprep.subr.mxu0 0.0
    %1910 = vmatpush1.msra.mxu0 0.0
    %1911 = vmatprep.subr.mxu0 0.0
    %1912 = vmatpush1.msra.mxu0 0.0
    %1913 = vmatprep.subr.mxu0 0.0
    %1914 = vmatpush1.msra.mxu0 0.0
    %1915 = vmatprep.subr.mxu0 0.0
    %1916 = vmatpush1.msra.mxu0 0.0
    %1917 = vmatprep.subr.mxu0 0.0
    %1918 = vmatpush1.msra.mxu0 0.0
    %1919 = vmatprep.subr.mxu0 0.0
    %1920 = vmatpush1.msra.mxu0 0.0
    %1921 = vmatprep.subr.mxu0 0.0
    %1922 = vmatpush1.msra.mxu0 0.0
    %1923 = vmatprep.subr.mxu0 0.0
    %1924 = vmatpush1.msra.mxu0 0.0
    %1925 = vmatprep.subr.mxu0 0.0
    %1926 = vmatpush1.msra.mxu0 0.0
    %1927 = vmatprep.subr.mxu0 0.0
    %1928 = vmatpush1.msra.mxu0 0.0
    %1929 = vmatprep.subr.mxu0 0.0
    %1930 = vmatpush1.msra.mxu0 0.0
    %1931 = vmatprep.subr.mxu0 0.0
    %1932 = vmatpush1.msra.mxu0 0.0
    %1933 = vmatprep.subr.mxu0 0.0
    %1934 = vmatpush1.msra.mxu0 0.0
    %1935 = vmatprep.subr.mxu0 0.0
    %1936 = vmatpush1.msra.mxu0 0.0
    %1937 = vmatprep.subr.mxu0 0.0
    %1938 = vmatpush1.msra.mxu0 0.0
    %1939 = vmatprep.subr.mxu0 0.0
    %1940 = vmatpush1.msra.mxu0 0.0
    %1941 = vmatprep.subr.mxu0 0.0
    %1942 = vmatpush1.msra.mxu0 0.0
    %1943 = vmatprep.subr.mxu0 0.0
    %1944 = vmatpush1.msra.mxu0 0.0
    %1945 = vmatprep.subr.mxu0 0.0
    %1946 = vmatpush1.msra.mxu0 0.0
    %1947 = vmatprep.subr.mxu0 0.0
    %1948 = vmatpush1.msra.mxu0 0.0
    %1949 = vmatprep.mubr.f32.mxu0 0.0
    %1950 = vmatmul.mubr.f32.gmra.mrb[0].mxu0 %v1874
    %v1951 = vpop.f32.mrb[0].mxu0
    %v1952 = vadd.f32 0.0, %v1951
    %v1953 = vpop.f32.mrb[0].mxu0
    %1954 = vmatprep.mubr.f32.mxu0 0.0
    %1955 = vmatmul.mubr.f32.gmra.mrb[0].mxu0 %v1877
    %v1956 = vpop.f32.mrb[0].mxu0
    %v1957 = vadd.f32 0.0, %v1956
    %v1958 = vpop.f32.mrb[0].mxu0
    %1959 = vmatprep.mubr.f32.mxu0 0.0
    %1960 = vmatmul.mubr.f32.gmra.mrb[0].mxu0 %v1880
    %v1961 = vpop.f32.mrb[0].mxu0
    %v1962 = vadd.f32 0.0, %v1961
    %v1963 = vpop.f32.mrb[0].mxu0
    %1964 = vmatprep.mubr.f32.mxu0 0.0
    %1965 = vmatmul.mubr.f32.gmra.mrb[0].mxu0 %v1883
    %v1966 = vpop.f32.mrb[0].mxu0
    %v1967 = vadd.f32 0.0, %v1966
    %v1968 = vpop.f32.mrb[0].mxu0
    %1969 = vdwg.mxu0
    %v1970 = vrcp.pop %v1857
    %v1971 = vrcp.pop %v1858
    %v1972 = vrcp.pop %v1859
    %v1973 = vrcp.pop %v1860
    %v1974 = vmul.f32 %v1952, %v1970
    %v1975 = vmul.f32 %v1957, %v1971
    %v1976 = vmul.f32 %v1962, %v1972
    %v1977 = vmul.f32 %v1967, %v1973
    %1982 = vrot.lane.b32.xlu0 %v1200, 8
    %v1983 = vpop.permute.xlu0 %1982
    %1984 = vrot.lane.b32.xlu0 %v1201, 8
    %v1985 = vpop.permute.xlu0 %1984
    %1986 = vrot.lane.b32.xlu0 %v1202, 8
    %v1987 = vpop.permute.xlu0 %1986
    %1988 = vrot.lane.b32.xlu0 %v1203, 8
    %v1989 = vpop.permute.xlu0 %1988
    %1998 = vrot.lane.b32.xlu0 %v1587, 16
    %v1999 = vpop.permute.xlu0 %1998
    %2000 = vrot.lane.b32.xlu0 %v1588, 16
    %v2001 = vpop.permute.xlu0 %2000
    %2002 = vrot.lane.b32.xlu0 %v1589, 16
    %v2003 = vpop.permute.xlu0 %2002
    %2004 = vrot.lane.b32.xlu0 %v1590, 16
    %v2005 = vpop.permute.xlu0 %2004
    %2014 = vrot.lane.b32.xlu0 %v1974, 24
    %v2015 = vpop.permute.xlu0 %2014
    %2016 = vrot.lane.b32.xlu0 %v1975, 24
    %v2017 = vpop.permute.xlu0 %2016
    %2018 = vrot.lane.b32.xlu0 %v1976, 24
    %v2019 = vpop.permute.xlu0 %2018
    %2020 = vrot.lane.b32.xlu0 %v1977, 24
    %v2021 = vpop.permute.xlu0 %2020
    %v2026 = vsel %vm448, %v813, %v1983
    %v2027 = vsel %vm448, %v814, %v1985
    %v2028 = vsel %vm448, %v815, %v1987
    %v2029 = vsel %vm448, %v816, %v1989
    %v2030 = vsel %vm562, %v2026, %v1999
    %v2031 = vsel %vm562, %v2027, %v2001
    %v2032 = vsel %vm562, %v2028, %v2003
    %v2033 = vsel %vm562, %v2029, %v2005
    %vm2034 = vcmask 195584
    %v2035 = vsel %vm2034, %v2030, %v2015
    %v2036 = vsel %vm2034, %v2031, %v2017
    %v2037 = vsel %vm2034, %v2032, %v2019
    %v2038 = vsel %vm2034, %v2033, %v2021
    %v2039 = vld [vmem:[%s6] sm:$0xff]
    %v2040 = vld [vmem:[%s6 + $0x8] sm:$0xff]
    %v2041 = vld [vmem:[%s6 + $0x10] sm:$0xff]
    %v2042 = vld [vmem:[%s6 + $0x18] sm:$0xff]
    %v2043 = vld [vmem:[#allocation5] sm:$0x1]
    %v2045 = vlaneseq
    %v2046 = vshrl.u32 %v2045, 7
    %v2047 = vsub.s32 0, %v2046
    %v2048 = vrot.slane %v2043, %v2047
    %v2051 = vsel %vm220, %v2035, 0
    %v2054 = vsel %vm220, %v2036, 0
    %v2057 = vsel %vm220, %v2037, 0
    %v2060 = vsel %vm220, %v2038, 0
    %2062 = vmatprep.subr.mxu0 0.0
    %2063 = vmatpush1.msra.mxu0 %v2039
    %2064 = vmatprep.subr.mxu0 0.0
    %2065 = vmatpush1.msra.mxu0 %v2040
    %2066 = vmatprep.subr.mxu0 0.0
    %2067 = vmatpush1.msra.mxu0 %v2041
    %2068 = vmatprep.subr.mxu0 0.0
    %2069 = vmatpush1.msra.mxu0 %v2042
    %2070 = vmatprep.subr.mxu0 0.0
    %2071 = vmatpush1.msra.mxu0 0.0
    %2072 = vmatprep.subr.mxu0 0.0
    %2073 = vmatpush1.msra.mxu0 0.0
    %2074 = vmatprep.subr.mxu0 0.0
    %2075 = vmatpush1.msra.mxu0 0.0
    %2076 = vmatprep.subr.mxu0 0.0
    %2077 = vmatpush1.msra.mxu0 0.0
    %2078 = vmatprep.subr.mxu0 0.0
    %2079 = vmatpush1.msra.mxu0 0.0
    %2080 = vmatprep.subr.mxu0 0.0
    %2081 = vmatpush1.msra.mxu0 0.0
    %2082 = vmatprep.subr.mxu0 0.0
    %2083 = vmatpush1.msra.mxu0 0.0
    %2084 = vmatprep.subr.mxu0 0.0
    %2085 = vmatpush1.msra.mxu0 0.0
    %2086 = vmatprep.subr.mxu0 0.0
    %2087 = vmatpush1.msra.mxu0 0.0
    %2088 = vmatprep.subr.mxu0 0.0
    %2089 = vmatpush1.msra.mxu0 0.0
    %2090 = vmatprep.subr.mxu0 0.0
    %2091 = vmatpush1.msra.mxu0 0.0
    %2092 = vmatprep.subr.mxu0 0.0
    %2093 = vmatpush1.msra.mxu0 0.0
    %2094 = vmatprep.subr.mxu0 0.0
    %2095 = vmatpush1.msra.mxu0 0.0
    %2096 = vmatprep.subr.mxu0 0.0
    %2097 = vmatpush1.msra.mxu0 0.0
    %2098 = vmatprep.subr.mxu0 0.0
    %2099 = vmatpush1.msra.mxu0 0.0
    %2100 = vmatprep.subr.mxu0 0.0
    %2101 = vmatpush1.msra.mxu0 0.0
    %2102 = vmatprep.subr.mxu0 0.0
    %2103 = vmatpush1.msra.mxu0 0.0
    %2104 = vmatprep.subr.mxu0 0.0
    %2105 = vmatpush1.msra.mxu0 0.0
    %2106 = vmatprep.subr.mxu0 0.0
    %2107 = vmatpush1.msra.mxu0 0.0
    %2108 = vmatprep.subr.mxu0 0.0
    %2109 = vmatpush1.msra.mxu0 0.0
    %2110 = vmatprep.subr.mxu0 0.0
    %2111 = vmatpush1.msra.mxu0 0.0
    %2112 = vmatprep.subr.mxu0 0.0
    %2113 = vmatpush1.msra.mxu0 0.0
    %2114 = vmatprep.subr.mxu0 0.0
    %2115 = vmatpush1.msra.mxu0 0.0
    %2116 = vmatprep.subr.mxu0 0.0
    %2117 = vmatpush1.msra.mxu0 0.0
    %2118 = vmatprep.subr.mxu0 0.0
    %2119 = vmatpush1.msra.mxu0 0.0
    %2120 = vmatprep.subr.mxu0 0.0
    %2121 = vmatpush1.msra.mxu0 0.0
    %2122 = vmatprep.subr.mxu0 0.0
    %2123 = vmatpush1.msra.mxu0 0.0
    %2124 = vmatprep.subr.mxu0 0.0
    %2125 = vmatpush1.msra.mxu0 0.0
    %2126 = vmatprep.mubr.f32.mxu0 0.0
    %2127 = vmatmul.mubr.f32.gmra.mrb[0].mxu0 %v2051
    %v2128 = vpop.f32.mrb[0].mxu0
    %v2129 = vadd.f32 %v2048, %v2128
    %v2130 = vpop.f32.mrb[0].mxu0
    %2131 = vmatprep.mubr.f32.mxu0 0.0
    %2132 = vmatmul.mubr.f32.gmra.mrb[0].mxu0 %v2054
    %v2133 = vpop.f32.mrb[0].mxu0
    %v2134 = vadd.f32 %v2048, %v2133
    %v2135 = vpop.f32.mrb[0].mxu0
    %2136 = vmatprep.mubr.f32.mxu0 0.0
    %2137 = vmatmul.mubr.f32.gmra.mrb[0].mxu0 %v2057
    %v2138 = vpop.f32.mrb[0].mxu0
    %v2139 = vadd.f32 %v2048, %v2138
    %v2140 = vpop.f32.mrb[0].mxu0
    %2141 = vmatprep.mubr.f32.mxu0 0.0
    %2142 = vmatmul.mubr.f32.gmra.mrb[0].mxu0 %v2060
    %v2143 = vpop.f32.mrb[0].mxu0
    %v2144 = vadd.f32 %v2048, %v2143
    %v2145 = vpop.f32.mrb[0].mxu0
    %2146 = vdwg.mxu0
    %v2147 = vadd.f32 %v176, %v2129
    %v2148 = vadd.f32 %v177, %v2134
    %v2149 = vadd.f32 %v178, %v2139
    %v2150 = vadd.f32 %v179, %v2144
    %v2151 = vld [vmem:[#allocation7] sm:$0x1]
    %v2152 = vld [vmem:[#allocation8] sm:$0x1]
    %v2153 = vsel %vm220, %v2147, 0.0
    %2154 = vadd.xlane.f32.xlu0 %v2153
    %v2155 = vpop.xlane.xlu0 %2154
    %v2156 = vsel %vm220, %v2148, 0.0
    %2157 = vadd.xlane.f32.xlu0 %v2156
    %v2158 = vpop.xlane.xlu0 %2157
    %v2159 = vsel %vm220, %v2149, 0.0
    %2160 = vadd.xlane.f32.xlu0 %v2159
    %v2161 = vpop.xlane.xlu0 %2160
    %v2162 = vsel %vm220, %v2150, 0.0
    %2163 = vadd.xlane.f32.xlu0 %v2162
    %v2164 = vpop.xlane.xlu0 %2163
    %v2165 = vrcp.pop 32.0
    %v2166 = vmul.f32 %v2155, %v2165
    %v2167 = vmul.f32 %v2158, %v2165
    %v2168 = vmul.f32 %v2161, %v2165
    %v2169 = vmul.f32 %v2164, %v2165
    %v2170 = vsub.f32 %v2147, %v2166
    %v2171 = vsub.f32 %v2148, %v2167
    %v2172 = vsub.f32 %v2149, %v2168
    %v2173 = vsub.f32 %v2150, %v2169
    %v2174 = vmul.f32 %v2170, %v2170
    %v2175 = vmul.f32 %v2171, %v2171
    %v2176 = vmul.f32 %v2172, %v2172
    %v2177 = vmul.f32 %v2173, %v2173
    %v2178 = vsel %vm220, %v2174, 0.0
    %2179 = vadd.xlane.f32.xlu0 %v2178
    %v2180 = vpop.xlane.xlu0 %2179
    %v2181 = vsel %vm220, %v2175, 0.0
    %2182 = vadd.xlane.f32.xlu0 %v2181
    %v2183 = vpop.xlane.xlu0 %2182
    %v2184 = vsel %vm220, %v2176, 0.0
    %2185 = vadd.xlane.f32.xlu0 %v2184
    %v2186 = vpop.xlane.xlu0 %2185
    %v2187 = vsel %vm220, %v2177, 0.0
    %2188 = vadd.xlane.f32.xlu0 %v2187
    %v2189 = vpop.xlane.xlu0 %2188
    %v2190 = vmul.f32 %v2180, %v2165
    %v2191 = vmul.f32 %v2183, %v2165
    %v2192 = vmul.f32 %v2186, %v2165
    %v2193 = vmul.f32 %v2189, %v2165
    %v2194 = vadd.f32 %v2190, 1e-05
    %v2195 = vadd.f32 %v2191, 1e-05
    %v2196 = vadd.f32 %v2192, 1e-05
    %v2197 = vadd.f32 %v2193, 1e-05
    %v2198 = vrsqrt.pop %v2194
    %v2199 = vrsqrt.pop %v2195
    %v2200 = vrsqrt.pop %v2196
    %v2201 = vrsqrt.pop %v2197
    %v2202 = vmul.f32 %v2170, %v2198
    %v2203 = vmul.f32 %v2171, %v2199
    %v2204 = vmul.f32 %v2172, %v2200
    %v2205 = vmul.f32 %v2173, %v2201
    %v2207 = vlaneseq
    %v2208 = vshrl.u32 %v2207, 7
    %v2209 = vsub.s32 0, %v2208
    %v2210 = vrot.slane %v2151, %v2209
    %v2212 = vmul.f32 %v2202, %v2210
    %v2213 = vmul.f32 %v2203, %v2210
    %v2214 = vmul.f32 %v2204, %v2210
    %v2215 = vmul.f32 %v2205, %v2210
    %v2217 = vlaneseq
    %v2218 = vshrl.u32 %v2217, 7
    %v2219 = vsub.s32 0, %v2218
    %v2220 = vrot.slane %v2152, %v2219
    %v2222 = vadd.f32 %v2212, %v2220
    %v2223 = vadd.f32 %v2213, %v2220
    %v2224 = vadd.f32 %v2214, %v2220
    %v2225 = vadd.f32 %v2215, %v2220
    %v2226 = vld [vmem:[#allocation10] sm:$0xff]
    %v2227 = vld [vmem:[#allocation10 + $0x8] sm:$0xff]
    %v2228 = vld [vmem:[#allocation10 + $0x10] sm:$0xff]
    %v2229 = vld [vmem:[#allocation10 + $0x18] sm:$0xff]
    %v2230 = vld [vmem:[#allocation11] sm:$0x1]
    %v2232 = vlaneseq
    %v2233 = vshrl.u32 %v2232, 7
    %v2234 = vsub.s32 0, %v2233
    %v2235 = vrot.slane %v2230, %v2234
    %v2238 = vsel %vm220, %v2222, 0
    %v2241 = vsel %vm220, %v2223, 0
    %v2244 = vsel %vm220, %v2224, 0
    %v2247 = vsel %vm220, %v2225, 0
    %2249 = vmatprep.subr.mxu0 0.0
    %2250 = vmatpush1.msra.mxu0 %v2226
    %2251 = vmatprep.subr.mxu0 0.0
    %2252 = vmatpush1.msra.mxu0 %v2227
    %2253 = vmatprep.subr.mxu0 0.0
    %2254 = vmatpush1.msra.mxu0 %v2228
    %2255 = vmatprep.subr.mxu0 0.0
    %2256 = vmatpush1.msra.mxu0 %v2229
    %2257 = vmatprep.subr.mxu0 0.0
    %2258 = vmatpush1.msra.mxu0 0.0
    %2259 = vmatprep.subr.mxu0 0.0
    %2260 = vmatpush1.msra.mxu0 0.0
    %2261 = vmatprep.subr.mxu0 0.0
    %2262 = vmatpush1.msra.mxu0 0.0
    %2263 = vmatprep.subr.mxu0 0.0
    %2264 = vmatpush1.msra.mxu0 0.0
    %2265 = vmatprep.subr.mxu0 0.0
    %2266 = vmatpush1.msra.mxu0 0.0
    %2267 = vmatprep.subr.mxu0 0.0
    %2268 = vmatpush1.msra.mxu0 0.0
    %2269 = vmatprep.subr.mxu0 0.0
    %2270 = vmatpush1.msra.mxu0 0.0
    %2271 = vmatprep.subr.mxu0 0.0
    %2272 = vmatpush1.msra.mxu0 0.0
    %2273 = vmatprep.subr.mxu0 0.0
    %2274 = vmatpush1.msra.mxu0 0.0
    %2275 = vmatprep.subr.mxu0 0.0
    %2276 = vmatpush1.msra.mxu0 0.0
    %2277 = vmatprep.subr.mxu0 0.0
    %2278 = vmatpush1.msra.mxu0 0.0
    %2279 = vmatprep.subr.mxu0 0.0
    %2280 = vmatpush1.msra.mxu0 0.0
    %2281 = vmatprep.subr.mxu0 0.0
    %2282 = vmatpush1.msra.mxu0 0.0
    %2283 = vmatprep.subr.mxu0 0.0
    %2284 = vmatpush1.msra.mxu0 0.0
    %2285 = vmatprep.subr.mxu0 0.0
    %2286 = vmatpush1.msra.mxu0 0.0
    %2287 = vmatprep.subr.mxu0 0.0
    %2288 = vmatpush1.msra.mxu0 0.0
    %2289 = vmatprep.subr.mxu0 0.0
    %2290 = vmatpush1.msra.mxu0 0.0
    %2291 = vmatprep.subr.mxu0 0.0
    %2292 = vmatpush1.msra.mxu0 0.0
    %2293 = vmatprep.subr.mxu0 0.0
    %2294 = vmatpush1.msra.mxu0 0.0
    %2295 = vmatprep.subr.mxu0 0.0
    %2296 = vmatpush1.msra.mxu0 0.0
    %2297 = vmatprep.subr.mxu0 0.0
    %2298 = vmatpush1.msra.mxu0 0.0
    %2299 = vmatprep.subr.mxu0 0.0
    %2300 = vmatpush1.msra.mxu0 0.0
    %2301 = vmatprep.subr.mxu0 0.0
    %2302 = vmatpush1.msra.mxu0 0.0
    %2303 = vmatprep.subr.mxu0 0.0
    %2304 = vmatpush1.msra.mxu0 0.0
    %2305 = vmatprep.subr.mxu0 0.0
    %2306 = vmatpush1.msra.mxu0 0.0
    %2307 = vmatprep.subr.mxu0 0.0
    %2308 = vmatpush1.msra.mxu0 0.0
    %2309 = vmatprep.subr.mxu0 0.0
    %2310 = vmatpush1.msra.mxu0 0.0
    %2311 = vmatprep.subr.mxu0 0.0
    %2312 = vmatpush1.msra.mxu0 0.0
    %2313 = vmatprep.mubr.f32.mxu0 0.0
    %2314 = vmatmul.mubr.f32.gmra.mrb[0].mxu0 %v2238
    %v2315 = vpop.f32.mrb[0].mxu0
    %v2316 = vadd.f32 %v2235, %v2315
    %v2317 = vpop.f32.mrb[0].mxu0
    %2318 = vmatprep.mubr.f32.mxu0 0.0
    %2319 = vmatmul.mubr.f32.gmra.mrb[0].mxu0 %v2241
    %v2320 = vpop.f32.mrb[0].mxu0
    %v2321 = vadd.f32 %v2235, %v2320
    %v2322 = vpop.f32.mrb[0].mxu0
    %2323 = vmatprep.mubr.f32.mxu0 0.0
    %2324 = vmatmul.mubr.f32.gmra.mrb[0].mxu0 %v2244
    %v2325 = vpop.f32.mrb[0].mxu0
    %v2326 = vadd.f32 %v2235, %v2325
    %v2327 = vpop.f32.mrb[0].mxu0
    %2328 = vmatprep.mubr.f32.mxu0 0.0
    %2329 = vmatmul.mubr.f32.gmra.mrb[0].mxu0 %v2247
    %v2330 = vpop.f32.mrb[0].mxu0
    %v2331 = vadd.f32 %v2235, %v2330
    %v2332 = vpop.f32.mrb[0].mxu0
    %2333 = vdwg.mxu0
    %v2334 = vmul.f32 %v2316, 0.5
    %v2335 = vmul.f32 %v2321, 0.5
    %v2336 = vmul.f32 %v2326, 0.5
    %v2337 = vmul.f32 %v2331, 0.5
    %v2338 = vmul.f32 %v2316, 0.70710677
    %v2339 = vmul.f32 %v2321, 0.70710677
    %v2340 = vmul.f32 %v2326, 0.70710677
    %v2341 = vmul.f32 %v2331, 0.70710677
    %vm2342 = vcmp.ge.f32.partialorder %v2338, 0.0
    %vm2343 = vcmp.ge.f32.partialorder %v2339, 0.0
    %vm2344 = vcmp.ge.f32.partialorder %v2340, 0.0
    %vm2345 = vcmp.ge.f32.partialorder %v2341, 0.0
    %v2346 = vsel %vm2342, 1.0, -1.0
    %v2347 = vsel %vm2343, 1.0, -1.0
    %v2348 = vsel %vm2344, 1.0, -1.0
    %v2349 = vsel %vm2345, 1.0, -1.0
    %v2350 = vand.u32 2147483647, %v2338
    %v2351 = vand.u32 2147483647, %v2339
    %v2352 = vand.u32 2147483647, %v2340
    %v2353 = vand.u32 2147483647, %v2341
    %v2354 = vmul.f32 %v2350, 0.3275911
    %v2355 = vmul.f32 %v2351, 0.3275911
    %v2356 = vmul.f32 %v2352, 0.3275911
    %v2357 = vmul.f32 %v2353, 0.3275911
    %v2358 = vadd.f32 %v2354, 1.0
    %v2359 = vadd.f32 %v2355, 1.0
    %v2360 = vadd.f32 %v2356, 1.0
    %v2361 = vadd.f32 %v2357, 1.0
    %v2362 = vrcp.pop %v2358
    %v2363 = vrcp.pop %v2359
    %v2364 = vrcp.pop %v2360
    %v2365 = vrcp.pop %v2361
    %v2366 = vmul.f32 %v2362, 1.0614054
    %v2367 = vmul.f32 %v2363, 1.0614054
    %v2368 = vmul.f32 %v2364, 1.0614054
    %v2369 = vmul.f32 %v2365, 1.0614054
    %v2370 = vadd.f32 %v2366, -1.4531521
    %v2371 = vadd.f32 %v2367, -1.4531521
    %v2372 = vadd.f32 %v2368, -1.4531521
    %v2373 = vadd.f32 %v2369, -1.4531521
    %v2374 = vmul.f32 %v2370, %v2362
    %v2375 = vmul.f32 %v2371, %v2363
    %v2376 = vmul.f32 %v2372, %v2364
    %v2377 = vmul.f32 %v2373, %v2365
    %v2378 = vadd.f32 %v2374, 1.4214138
    %v2379 = vadd.f32 %v2375, 1.4214138
    %v2380 = vadd.f32 %v2376, 1.4214138
    %v2381 = vadd.f32 %v2377, 1.4214138
    %v2382 = vmul.f32 %v2378, %v2362
    %v2383 = vmul.f32 %v2379, %v2363
    %v2384 = vmul.f32 %v2380, %v2364
    %v2385 = vmul.f32 %v2381, %v2365
    %v2386 = vadd.f32 %v2382, -0.28449672
    %v2387 = vadd.f32 %v2383, -0.28449672
    %v2388 = vadd.f32 %v2384, -0.28449672
    %v2389 = vadd.f32 %v2385, -0.28449672
    %v2390 = vmul.f32 %v2386, %v2362
    %v2391 = vmul.f32 %v2387, %v2363
    %v2392 = vmul.f32 %v2388, %v2364
    %v2393 = vmul.f32 %v2389, %v2365
    %v2394 = vadd.f32 %v2390, 0.2548296
    %v2395 = vadd.f32 %v2391, 0.2548296
    %v2396 = vadd.f32 %v2392, 0.2548296
    %v2397 = vadd.f32 %v2393, 0.2548296
    %v2398 = vmul.f32 %v2394, %v2362
    %v2399 = vmul.f32 %v2395, %v2363
    %v2400 = vmul.f32 %v2396, %v2364
    %v2401 = vmul.f32 %v2397, %v2365
    %v2402 = vsub.f32 0.0, %v2350
    %v2403 = vsub.f32 0.0, %v2351
    %v2404 = vsub.f32 0.0, %v2352
    %v2405 = vsub.f32 0.0, %v2353
    %v2406 = vmul.f32 %v2402, %v2350
    %v2407 = vmul.f32 %v2403, %v2351
    %v2408 = vmul.f32 %v2404, %v2352
    %v2409 = vmul.f32 %v2405, %v2353
    %v2410 = vmul.f32 %v2406, 1.442695
    %v2411 = vpow.pop %v2410
    %v2412 = vmul.f32 %v2407, 1.442695
    %v2413 = vpow.pop %v2412
    %v2414 = vmul.f32 %v2408, 1.442695
    %v2415 = vpow.pop %v2414
    %v2416 = vmul.f32 %v2409, 1.442695
    %v2417 = vpow.pop %v2416
    %v2418 = vmul.f32 %v2398, %v2411
    %v2419 = vmul.f32 %v2399, %v2413
    %v2420 = vmul.f32 %v2400, %v2415
    %v2421 = vmul.f32 %v2401, %v2417
    %v2422 = vsub.f32 1.0, %v2418
    %v2423 = vsub.f32 1.0, %v2419
    %v2424 = vsub.f32 1.0, %v2420
    %v2425 = vsub.f32 1.0, %v2421
    %v2426 = vmul.f32 %v2346, %v2422
    %v2427 = vmul.f32 %v2347, %v2423
    %v2428 = vmul.f32 %v2348, %v2424
    %v2429 = vmul.f32 %v2349, %v2425
    %v2430 = vadd.f32 %v2426, 1.0
    %v2431 = vadd.f32 %v2427, 1.0
    %v2432 = vadd.f32 %v2428, 1.0
    %v2433 = vadd.f32 %v2429, 1.0
    %v2434 = vmul.f32 %v2334, %v2430
    %v2435 = vmul.f32 %v2335, %v2431
    %v2436 = vmul.f32 %v2336, %v2432
    %v2437 = vmul.f32 %v2337, %v2433
    %v2438 = vld [vmem:[%s12] sm:$0xff]
    %v2439 = vld [vmem:[%s12 + $0x8] sm:$0xff]
    %v2440 = vld [vmem:[%s12 + $0x10] sm:$0xff]
    %v2441 = vld [vmem:[%s12 + $0x18] sm:$0xff]
    %v2442 = vld [vmem:[%s12 + $0x20] sm:$0xff]
    %v2443 = vld [vmem:[%s12 + $0x28] sm:$0xff]
    %v2444 = vld [vmem:[%s12 + $0x30] sm:$0xff]
    %v2445 = vld [vmem:[%s12 + $0x38] sm:$0xff]
    %v2446 = vld [vmem:[#allocation13] sm:$0x1]
    %v2448 = vlaneseq
    %v2449 = vshrl.u32 %v2448, 7
    %v2450 = vsub.s32 0, %v2449
    %v2451 = vrot.slane %v2446, %v2450
    %v2454 = vsel %vm326, %v2434, 0
    %v2457 = vsel %vm326, %v2435, 0
    %v2460 = vsel %vm326, %v2436, 0
    %v2463 = vsel %vm326, %v2437, 0
    %2465 = vmatprep.subr.mxu0 0.0
    %2466 = vmatpush1.msra.mxu0 %v2438
    %2467 = vmatprep.subr.mxu0 0.0
    %2468 = vmatpush1.msra.mxu0 %v2439
    %2469 = vmatprep.subr.mxu0 0.0
    %2470 = vmatpush1.msra.mxu0 %v2440
    %2471 = vmatprep.subr.mxu0 0.0
    %2472 = vmatpush1.msra.mxu0 %v2441
    %2473 = vmatprep.subr.mxu0 0.0
    %2474 = vmatpush1.msra.mxu0 %v2442
    %2475 = vmatprep.subr.mxu0 0.0
    %2476 = vmatpush1.msra.mxu0 %v2443
    %2477 = vmatprep.subr.mxu0 0.0
    %2478 = vmatpush1.msra.mxu0 %v2444
    %2479 = vmatprep.subr.mxu0 0.0
    %2480 = vmatpush1.msra.mxu0 %v2445
    %2481 = vmatprep.subr.mxu0 0.0
    %2482 = vmatpush1.msra.mxu0 0.0
    %2483 = vmatprep.subr.mxu0 0.0
    %2484 = vmatpush1.msra.mxu0 0.0
    %2485 = vmatprep.subr.mxu0 0.0
    %2486 = vmatpush1.msra.mxu0 0.0
    %2487 = vmatprep.subr.mxu0 0.0
    %2488 = vmatpush1.msra.mxu0 0.0
    %2489 = vmatprep.subr.mxu0 0.0
    %2490 = vmatpush1.msra.mxu0 0.0
    %2491 = vmatprep.subr.mxu0 0.0
    %2492 = vmatpush1.msra.mxu0 0.0
    %2493 = vmatprep.subr.mxu0 0.0
    %2494 = vmatpush1.msra.mxu0 0.0
    %2495 = vmatprep.subr.mxu0 0.0
    %2496 = vmatpush1.msra.mxu0 0.0
    %2497 = vmatprep.subr.mxu0 0.0
    %2498 = vmatpush1.msra.mxu0 0.0
    %2499 = vmatprep.subr.mxu0 0.0
    %2500 = vmatpush1.msra.mxu0 0.0
    %2501 = vmatprep.subr.mxu0 0.0
    %2502 = vmatpush1.msra.mxu0 0.0
    %2503 = vmatprep.subr.mxu0 0.0
    %2504 = vmatpush1.msra.mxu0 0.0
    %2505 = vmatprep.subr.mxu0 0.0
    %2506 = vmatpush1.msra.mxu0 0.0
    %2507 = vmatprep.subr.mxu0 0.0
    %2508 = vmatpush1.msra.mxu0 0.0
    %2509 = vmatprep.subr.mxu0 0.0
    %2510 = vmatpush1.msra.mxu0 0.0
    %2511 = vmatprep.subr.mxu0 0.0
    %2512 = vmatpush1.msra.mxu0 0.0
    %2513 = vmatprep.subr.mxu0 0.0
    %2514 = vmatpush1.msra.mxu0 0.0
    %2515 = vmatprep.subr.mxu0 0.0
    %2516 = vmatpush1.msra.mxu0 0.0
    %2517 = vmatprep.subr.mxu0 0.0
    %2518 = vmatpush1.msra.mxu0 0.0
    %2519 = vmatprep.subr.mxu0 0.0
    %2520 = vmatpush1.msra.mxu0 0.0
    %2521 = vmatprep.subr.mxu0 0.0
    %2522 = vmatpush1.msra.mxu0 0.0
    %2523 = vmatprep.subr.mxu0 0.0
    %2524 = vmatpush1.msra.mxu0 0.0
    %2525 = vmatprep.subr.mxu0 0.0
    %2526 = vmatpush1.msra.mxu0 0.0
    %2527 = vmatprep.subr.mxu0 0.0
    %2528 = vmatpush1.msra.mxu0 0.0
    %2529 = vmatprep.mubr.f32.mxu0 0.0
    %2530 = vmatmul.mubr.f32.gmra.mrb[0].mxu0 %v2454
    %v2531 = vpop.f32.mrb[0].mxu0
    %v2532 = vadd.f32 %v2451, %v2531
    %v2533 = vpop.f32.mrb[0].mxu0
    %2534 = vmatprep.mubr.f32.mxu0 0.0
    %2535 = vmatmul.mubr.f32.gmra.mrb[0].mxu0 %v2457
    %v2536 = vpop.f32.mrb[0].mxu0
    %v2537 = vadd.f32 %v2451, %v2536
    %v2538 = vpop.f32.mrb[0].mxu0
    %2539 = vmatprep.mubr.f32.mxu0 0.0
    %2540 = vmatmul.mubr.f32.gmra.mrb[0].mxu0 %v2460
    %v2541 = vpop.f32.mrb[0].mxu0
    %v2542 = vadd.f32 %v2451, %v2541
    %v2543 = vpop.f32.mrb[0].mxu0
    %2544 = vmatprep.mubr.f32.mxu0 0.0
    %2545 = vmatmul.mubr.f32.gmra.mrb[0].mxu0 %v2463
    %v2546 = vpop.f32.mrb[0].mxu0
    %v2547 = vadd.f32 %v2451, %v2546
    %v2548 = vpop.f32.mrb[0].mxu0
    %2549 = vdwg.mxu0
    %v2550 = vadd.f32 %v2222, %v2532
    %v2551 = vadd.f32 %v2223, %v2537
    %v2552 = vadd.f32 %v2224, %v2542
    %v2553 = vadd.f32 %v2225, %v2547
    %v2554 = vld [vmem:[#allocation14] sm:$0x1]
    %v2555 = vld [vmem:[#allocation16] sm:$0x1]
    %v2556 = vsel %vm220, %v2550, 0.0
    %2557 = vadd.xlane.f32.xlu0 %v2556
    %v2558 = vpop.xlane.xlu0 %2557
    %v2559 = vsel %vm220, %v2551, 0.0
    %2560 = vadd.xlane.f32.xlu0 %v2559
    %v2561 = vpop.xlane.xlu0 %2560
    %v2562 = vsel %vm220, %v2552, 0.0
    %2563 = vadd.xlane.f32.xlu0 %v2562
    %v2564 = vpop.xlane.xlu0 %2563
    %v2565 = vsel %vm220, %v2553, 0.0
    %2566 = vadd.xlane.f32.xlu0 %v2565
    %v2567 = vpop.xlane.xlu0 %2566
    %v2568 = vmul.f32 %v2558, %v2165
    %v2569 = vmul.f32 %v2561, %v2165
    %v2570 = vmul.f32 %v2564, %v2165
    %v2571 = vmul.f32 %v2567, %v2165
    %v2572 = vsub.f32 %v2550, %v2568
    %v2573 = vsub.f32 %v2551, %v2569
    %v2574 = vsub.f32 %v2552, %v2570
    %v2575 = vsub.f32 %v2553, %v2571
    %v2576 = vmul.f32 %v2572, %v2572
    %v2577 = vmul.f32 %v2573, %v2573
    %v2578 = vmul.f32 %v2574, %v2574
    %v2579 = vmul.f32 %v2575, %v2575
    %v2580 = vsel %vm220, %v2576, 0.0
    %2581 = vadd.xlane.f32.xlu0 %v2580
    %v2582 = vpop.xlane.xlu0 %2581
    %v2583 = vsel %vm220, %v2577, 0.0
    %2584 = vadd.xlane.f32.xlu0 %v2583
    %v2585 = vpop.xlane.xlu0 %2584
    %v2586 = vsel %vm220, %v2578, 0.0
    %2587 = vadd.xlane.f32.xlu0 %v2586
    %v2588 = vpop.xlane.xlu0 %2587
    %v2589 = vsel %vm220, %v2579, 0.0
    %2590 = vadd.xlane.f32.xlu0 %v2589
    %v2591 = vpop.xlane.xlu0 %2590
    %v2592 = vmul.f32 %v2582, %v2165
    %v2593 = vmul.f32 %v2585, %v2165
    %v2594 = vmul.f32 %v2588, %v2165
    %v2595 = vmul.f32 %v2591, %v2165
    %v2596 = vadd.f32 %v2592, 1e-05
    %v2597 = vadd.f32 %v2593, 1e-05
    %v2598 = vadd.f32 %v2594, 1e-05
    %v2599 = vadd.f32 %v2595, 1e-05
    %v2600 = vrsqrt.pop %v2596
    %v2601 = vrsqrt.pop %v2597
    %v2602 = vrsqrt.pop %v2598
    %v2603 = vrsqrt.pop %v2599
    %v2604 = vmul.f32 %v2572, %v2600
    %v2605 = vmul.f32 %v2573, %v2601
    %v2606 = vmul.f32 %v2574, %v2602
    %v2607 = vmul.f32 %v2575, %v2603
    %v2609 = vlaneseq
    %v2610 = vshrl.u32 %v2609, 7
    %v2611 = vsub.s32 0, %v2610
    %v2612 = vrot.slane %v2554, %v2611
    %v2614 = vmul.f32 %v2604, %v2612
    %v2615 = vmul.f32 %v2605, %v2612
    %v2616 = vmul.f32 %v2606, %v2612
    %v2617 = vmul.f32 %v2607, %v2612
    %v2619 = vlaneseq
    %v2620 = vshrl.u32 %v2619, 7
    %v2621 = vsub.s32 0, %v2620
    %v2622 = vrot.slane %v2555, %v2621
    %v2624 = vadd.f32 %v2614, %v2622
    %v2625 = vadd.f32 %v2615, %v2622
    %v2626 = vadd.f32 %v2616, %v2622
    %v2627 = vadd.f32 %v2617, %v2622
    %s2628 = scalar_lea.vmem %s4, 64
    %v2629 = vld [vmem:[%s2628] sm:$0xff]
    %v2630 = vld [vmem:[%s2628 + $0x8] sm:$0xff]
    %v2631 = vld [vmem:[%s2628 + $0x10] sm:$0xff]
    %v2632 = vld [vmem:[%s2628 + $0x18] sm:$0xff]
    %v2633 = vld [vmem:[%s2628 + $0x20] sm:$0xff]
    %v2634 = vld [vmem:[%s2628 + $0x28] sm:$0xff]
    %v2635 = vld [vmem:[%s2628 + $0x30] sm:$0xff]
    %v2636 = vld [vmem:[%s2628 + $0x38] sm:$0xff]
    %s2637 = scalar_lea.vmem [#allocation2], 2
    %v2638 = vld [vmem:[%s2637] sm:$0x3]
    %v2640 = vlaneseq
    %v2641 = vshrl.u32 %v2640, 7
    %v2642 = vsub.s32 0, %v2641
    %v2643 = vrot.slane %v2638, %v2642
    %v2644 = vlaneseq
    %v2645 = vshrl.u32 %v2644, 7
    %v2646 = vsub.s32 1, %v2645
    %v2647 = vrot.slane %v2638, %v2646
    %v2651 = vsel %vm220, %v2624, 0
    %v2654 = vsel %vm220, %v2625, 0
    %v2657 = vsel %vm220, %v2626, 0
    %v2660 = vsel %vm220, %v2627, 0
    %2662 = vmatprep.subr.mxu0 %v2630
    %2663 = vmatpush1.msra.mxu0 %v2629
    %2664 = vmatprep.subr.mxu0 %v2632
    %2665 = vmatpush1.msra.mxu0 %v2631
    %2666 = vmatprep.subr.mxu0 %v2634
    %2667 = vmatpush1.msra.mxu0 %v2633
    %2668 = vmatprep.subr.mxu0 %v2636
    %2669 = vmatpush1.msra.mxu0 %v2635
    %2670 = vmatprep.subr.mxu0 0.0
    %2671 = vmatpush1.msra.mxu0 0.0
    %2672 = vmatprep.subr.mxu0 0.0
    %2673 = vmatpush1.msra.mxu0 0.0
    %2674 = vmatprep.subr.mxu0 0.0
    %2675 = vmatpush1.msra.mxu0 0.0
    %2676 = vmatprep.subr.mxu0 0.0
    %2677 = vmatpush1.msra.mxu0 0.0
    %2678 = vmatprep.subr.mxu0 0.0
    %2679 = vmatpush1.msra.mxu0 0.0
    %2680 = vmatprep.subr.mxu0 0.0
    %2681 = vmatpush1.msra.mxu0 0.0
    %2682 = vmatprep.subr.mxu0 0.0
    %2683 = vmatpush1.msra.mxu0 0.0
    %2684 = vmatprep.subr.mxu0 0.0
    %2685 = vmatpush1.msra.mxu0 0.0
    %2686 = vmatprep.subr.mxu0 0.0
    %2687 = vmatpush1.msra.mxu0 0.0
    %2688 = vmatprep.subr.mxu0 0.0
    %2689 = vmatpush1.msra.mxu0 0.0
    %2690 = vmatprep.subr.mxu0 0.0
    %2691 = vmatpush1.msra.mxu0 0.0
    %2692 = vmatprep.subr.mxu0 0.0
    %2693 = vmatpush1.msra.mxu0 0.0
    %2694 = vmatprep.subr.mxu0 0.0
    %2695 = vmatpush1.msra.mxu0 0.0
    %2696 = vmatprep.subr.mxu0 0.0
    %2697 = vmatpush1.msra.mxu0 0.0
    %2698 = vmatprep.subr.mxu0 0.0
    %2699 = vmatpush1.msra.mxu0 0.0
    %2700 = vmatprep.subr.mxu0 0.0
    %2701 = vmatpush1.msra.mxu0 0.0
    %2702 = vmatprep.subr.mxu0 0.0
    %2703 = vmatpush1.msra.mxu0 0.0
    %2704 = vmatprep.subr.mxu0 0.0
    %2705 = vmatpush1.msra.mxu0 0.0
    %2706 = vmatprep.subr.mxu0 0.0
    %2707 = vmatpush1.msra.mxu0 0.0
    %2708 = vmatprep.subr.mxu0 0.0
    %2709 = vmatpush1.msra.mxu0 0.0
    %2710 = vmatprep.subr.mxu0 0.0
    %2711 = vmatpush1.msra.mxu0 0.0
    %2712 = vmatprep.subr.mxu0 0.0
    %2713 = vmatpush1.msra.mxu0 0.0
    %2714 = vmatprep.subr.mxu0 0.0
    %2715 = vmatpush1.msra.mxu0 0.0
    %2716 = vmatprep.subr.mxu0 0.0
    %2717 = vmatpush1.msra.mxu0 0.0
    %2718 = vmatprep.subr.mxu0 0.0
    %2719 = vmatpush1.msra.mxu0 0.0
    %2720 = vmatprep.subr.mxu0 0.0
    %2721 = vmatpush1.msra.mxu0 0.0
    %2722 = vmatprep.subr.mxu0 0.0
    %2723 = vmatpush1.msra.mxu0 0.0
    %2724 = vmatprep.subr.mxu0 0.0
    %2725 = vmatpush1.msra.mxu0 0.0
    %2726 = vmatprep.mubr.f32.mxu0 0.0
    %2727 = vmatmul.mubr.f32.gmra.mrb[0].mxu0 %v2651
    %v2728 = vpop.f32.mrb[0].mxu0
    %v2729 = vadd.f32 %v2643, %v2728
    %v2730 = vpop.f32.mrb[0].mxu0
    %v2731 = vadd.f32 %v2647, %v2730
    %2732 = vmatprep.mubr.f32.mxu0 0.0
    %2733 = vmatmul.mubr.f32.gmra.mrb[0].mxu0 %v2654
    %v2734 = vpop.f32.mrb[0].mxu0
    %v2735 = vadd.f32 %v2643, %v2734
    %v2736 = vpop.f32.mrb[0].mxu0
    %v2737 = vadd.f32 %v2647, %v2736
    %2738 = vmatprep.mubr.f32.mxu0 0.0
    %2739 = vmatmul.mubr.f32.gmra.mrb[0].mxu0 %v2657
    %v2740 = vpop.f32.mrb[0].mxu0
    %v2741 = vadd.f32 %v2643, %v2740
    %v2742 = vpop.f32.mrb[0].mxu0
    %v2743 = vadd.f32 %v2647, %v2742
    %2744 = vmatprep.mubr.f32.mxu0 0.0
    %2745 = vmatmul.mubr.f32.gmra.mrb[0].mxu0 %v2660
    %v2746 = vpop.f32.mrb[0].mxu0
    %v2747 = vadd.f32 %v2643, %v2746
    %v2748 = vpop.f32.mrb[0].mxu0
    %v2749 = vadd.f32 %v2647, %v2748
    %2750 = vdwg.mxu0
    %v2751 = vmul.f32 %v2729, %v2729
    %v2752 = vmul.f32 %v2735, %v2735
    %v2753 = vmul.f32 %v2741, %v2741
    %v2754 = vmul.f32 %v2747, %v2747
    %v2756 = vsel %vm326, %v2751, 0
    %v2759 = vsel %vm326, %v2752, 0
    %v2762 = vsel %vm326, %v2753, 0
    %v2765 = vsel %vm326, %v2754, 0
    %2767 = vmatprep.subr.mxu0 0.0
    %2768 = vmatpush1.msra.mxu0 %v192
    %2769 = vmatprep.subr.mxu0 0.0
    %2770 = vmatpush1.msra.mxu0 %v193
    %2771 = vmatprep.subr.mxu0 0.0
    %2772 = vmatpush1.msra.mxu0 %v194
    %2773 = vmatprep.subr.mxu0 0.0
    %2774 = vmatpush1.msra.mxu0 %v195
    %2775 = vmatprep.subr.mxu0 0.0
    %2776 = vmatpush1.msra.mxu0 %v196
    %2777 = vmatprep.subr.mxu0 0.0
    %2778 = vmatpush1.msra.mxu0 %v197
    %2779 = vmatprep.subr.mxu0 0.0
    %2780 = vmatpush1.msra.mxu0 %v198
    %2781 = vmatprep.subr.mxu0 0.0
    %2782 = vmatpush1.msra.mxu0 %v199
    %2783 = vmatprep.subr.mxu0 0.0
    %2784 = vmatpush1.msra.mxu0 0.0
    %2785 = vmatprep.subr.mxu0 0.0
    %2786 = vmatpush1.msra.mxu0 0.0
    %2787 = vmatprep.subr.mxu0 0.0
    %2788 = vmatpush1.msra.mxu0 0.0
    %2789 = vmatprep.subr.mxu0 0.0
    %2790 = vmatpush1.msra.mxu0 0.0
    %2791 = vmatprep.subr.mxu0 0.0
    %2792 = vmatpush1.msra.mxu0 0.0
    %2793 = vmatprep.subr.mxu0 0.0
    %2794 = vmatpush1.msra.mxu0 0.0
    %2795 = vmatprep.subr.mxu0 0.0
    %2796 = vmatpush1.msra.mxu0 0.0
    %2797 = vmatprep.subr.mxu0 0.0
    %2798 = vmatpush1.msra.mxu0 0.0
    %2799 = vmatprep.subr.mxu0 0.0
    %2800 = vmatpush1.msra.mxu0 0.0
    %2801 = vmatprep.subr.mxu0 0.0
    %2802 = vmatpush1.msra.mxu0 0.0
    %2803 = vmatprep.subr.mxu0 0.0
    %2804 = vmatpush1.msra.mxu0 0.0
    %2805 = vmatprep.subr.mxu0 0.0
    %2806 = vmatpush1.msra.mxu0 0.0
    %2807 = vmatprep.subr.mxu0 0.0
    %2808 = vmatpush1.msra.mxu0 0.0
    %2809 = vmatprep.subr.mxu0 0.0
    %2810 = vmatpush1.msra.mxu0 0.0
    %2811 = vmatprep.subr.mxu0 0.0
    %2812 = vmatpush1.msra.mxu0 0.0
    %2813 = vmatprep.subr.mxu0 0.0
    %2814 = vmatpush1.msra.mxu0 0.0
    %2815 = vmatprep.subr.mxu0 0.0
    %2816 = vmatpush1.msra.mxu0 0.0
    %2817 = vmatprep.subr.mxu0 0.0
    %2818 = vmatpush1.msra.mxu0 0.0
    %2819 = vmatprep.subr.mxu0 0.0
    %2820 = vmatpush1.msra.mxu0 0.0
    %2821 = vmatprep.subr.mxu0 0.0
    %2822 = vmatpush1.msra.mxu0 0.0
    %2823 = vmatprep.subr.mxu0 0.0
    %2824 = vmatpush1.msra.mxu0 0.0
    %2825 = vmatprep.subr.mxu0 0.0
    %2826 = vmatpush1.msra.mxu0 0.0
    %2827 = vmatprep.subr.mxu0 0.0
    %2828 = vmatpush1.msra.mxu0 0.0
    %2829 = vmatprep.subr.mxu0 0.0
    %2830 = vmatpush1.msra.mxu0 0.0
    %2831 = vmatprep.mubr.f32.mxu0 0.0
    %2832 = vmatmul.mubr.f32.gmra.mrb[0].mxu0 %v2756
    %v2833 = vpop.f32.mrb[0].mxu0
    %v2834 = vadd.f32 0.0, %v2833
    %v2835 = vpop.f32.mrb[0].mxu0
    %2836 = vmatprep.mubr.f32.mxu0 0.0
    %2837 = vmatmul.mubr.f32.gmra.mrb[0].mxu0 %v2759
    %v2838 = vpop.f32.mrb[0].mxu0
    %v2839 = vadd.f32 0.0, %v2838
    %v2840 = vpop.f32.mrb[0].mxu0
    %2841 = vmatprep.mubr.f32.mxu0 0.0
    %2842 = vmatmul.mubr.f32.gmra.mrb[0].mxu0 %v2762
    %v2843 = vpop.f32.mrb[0].mxu0
    %v2844 = vadd.f32 0.0, %v2843
    %v2845 = vpop.f32.mrb[0].mxu0
    %2846 = vmatprep.mubr.f32.mxu0 0.0
    %2847 = vmatmul.mubr.f32.gmra.mrb[0].mxu0 %v2765
    %v2848 = vpop.f32.mrb[0].mxu0
    %v2849 = vadd.f32 0.0, %v2848
    %v2850 = vpop.f32.mrb[0].mxu0
    %2851 = vdwg.mxu0
    %v2852 = vadd.f32 %v2731, %v2834
    %v2853 = vadd.f32 %v2737, %v2839
    %v2854 = vadd.f32 %v2743, %v2844
    %v2855 = vadd.f32 %v2749, %v2849
    %v2856 = vmul.f32 %v2852, 1.442695
    %v2857 = vpow.pop %v2856
    %v2858 = vmul.f32 %v2853, 1.442695
    %v2859 = vpow.pop %v2858
    %v2860 = vmul.f32 %v2854, 1.442695
    %v2861 = vpow.pop %v2860
    %v2862 = vmul.f32 %v2855, 1.442695
    %v2863 = vpow.pop %v2862
    %2868 = vrot.lane.b32.xlu0 %v2729, 96
    %v2869 = vpop.permute.xlu0 %2868
    %2870 = vrot.lane.b32.xlu0 %v2735, 96
    %v2871 = vpop.permute.xlu0 %2870
    %2872 = vrot.lane.b32.xlu0 %v2741, 96
    %v2873 = vpop.permute.xlu0 %2872
    %2874 = vrot.lane.b32.xlu0 %v2747, 96
    %v2875 = vpop.permute.xlu0 %2874
    %v2876 = vsel %vm448, %v2729, 0
    %v2878 = vsel %vm448, %v2735, 0
    %v2880 = vsel %vm448, %v2741, 0
    %v2882 = vsel %vm448, %v2747, 0
    %v2884 = vsel %vm448, %v2869, 0
    %v2886 = vsel %vm448, %v2871, 0
    %v2888 = vsel %vm448, %v2873, 0
    %v2890 = vsel %vm448, %v2875, 0
    %2892 = vmatprep.subr.mxu0 0.0
    %2893 = vmatpush1.xpose.msra.mxu0 %v2884
    %2894 = vmatprep.subr.mxu0 0.0
    %2895 = vmatpush1.xpose.msra.mxu0 %v2886
    %2896 = vmatprep.subr.mxu0 0.0
    %2897 = vmatpush1.xpose.msra.mxu0 %v2888
    %2898 = vmatprep.subr.mxu0 0.0
    %2899 = vmatpush1.xpose.msra.mxu0 %v2890
    %2900 = vmatprep.subr.mxu0 0.0
    %2901 = vmatpush1.xpose.msra.mxu0 0.0
    %2902 = vmatprep.subr.mxu0 0.0
    %2903 = vmatpush1.xpose.msra.mxu0 0.0
    %2904 = vmatprep.subr.mxu0 0.0
    %2905 = vmatpush1.xpose.msra.mxu0 0.0
    %2906 = vmatprep.subr.mxu0 0.0
    %2907 = vmatpush1.xpose.msra.mxu0 0.0
    %2908 = vmatprep.subr.mxu0 0.0
    %2909 = vmatpush1.xpose.msra.mxu0 0.0
    %2910 = vmatprep.subr.mxu0 0.0
    %2911 = vmatpush1.xpose.msra.mxu0 0.0
    %2912 = vmatprep.subr.mxu0 0.0
    %2913 = vmatpush1.xpose.msra.mxu0 0.0
    %2914 = vmatprep.subr.mxu0 0.0
    %2915 = vmatpush1.xpose.msra.mxu0 0.0
    %2916 = vmatprep.subr.mxu0 0.0
    %2917 = vmatpush1.xpose.msra.mxu0 0.0
    %2918 = vmatprep.subr.mxu0 0.0
    %2919 = vmatpush1.xpose.msra.mxu0 0.0
    %2920 = vmatprep.subr.mxu0 0.0
    %2921 = vmatpush1.xpose.msra.mxu0 0.0
    %2922 = vmatprep.subr.mxu0 0.0
    %2923 = vmatpush1.xpose.msra.mxu0 0.0
    %2924 = vmatprep.subr.mxu0 0.0
    %2925 = vmatpush1.xpose.msra.mxu0 0.0
    %2926 = vmatprep.subr.mxu0 0.0
    %2927 = vmatpush1.xpose.msra.mxu0 0.0
    %2928 = vmatprep.subr.mxu0 0.0
    %2929 = vmatpush1.xpose.msra.mxu0 0.0
    %2930 = vmatprep.subr.mxu0 0.0
    %2931 = vmatpush1.xpose.msra.mxu0 0.0
    %2932 = vmatprep.subr.mxu0 0.0
    %2933 = vmatpush1.xpose.msra.mxu0 0.0
    %2934 = vmatprep.subr.mxu0 0.0
    %2935 = vmatpush1.xpose.msra.mxu0 0.0
    %2936 = vmatprep.subr.mxu0 0.0
    %2937 = vmatpush1.xpose.msra.mxu0 0.0
    %2938 = vmatprep.subr.mxu0 0.0
    %2939 = vmatpush1.xpose.msra.mxu0 0.0
    %2940 = vmatprep.subr.mxu0 0.0
    %2941 = vmatpush1.xpose.msra.mxu0 0.0
    %2942 = vmatprep.subr.mxu0 0.0
    %2943 = vmatpush1.xpose.msra.mxu0 0.0
    %2944 = vmatprep.subr.mxu0 0.0
    %2945 = vmatpush1.xpose.msra.mxu0 0.0
    %2946 = vmatprep.subr.mxu0 0.0
    %2947 = vmatpush1.xpose.msra.mxu0 0.0
    %2948 = vmatprep.subr.mxu0 0.0
    %2949 = vmatpush1.xpose.msra.mxu0 0.0
    %2950 = vmatprep.subr.mxu0 0.0
    %2951 = vmatpush1.xpose.msra.mxu0 0.0
    %2952 = vmatprep.subr.mxu0 0.0
    %2953 = vmatpush1.xpose.msra.mxu0 0.0
    %2954 = vmatprep.subr.mxu0 0.0
    %2955 = vmatpush1.xpose.msra.mxu0 0.0
    %2956 = vmatprep.mubr.f32.mxu0 0.0
    %2957 = vmatmul.mubr.f32.gmra.mrb[0].mxu0 %v2876
    %v2958 = vpop.f32.mrb[0].mxu0
    %v2959 = vadd.f32 0.0, %v2958
    %v2960 = vpop.f32.mrb[0].mxu0
    %2961 = vmatprep.mubr.f32.mxu0 0.0
    %2962 = vmatmul.mubr.f32.gmra.mrb[0].mxu0 %v2878
    %v2963 = vpop.f32.mrb[0].mxu0
    %v2964 = vadd.f32 0.0, %v2963
    %v2965 = vpop.f32.mrb[0].mxu0
    %2966 = vmatprep.mubr.f32.mxu0 0.0
    %2967 = vmatmul.mubr.f32.gmra.mrb[0].mxu0 %v2880
    %v2968 = vpop.f32.mrb[0].mxu0
    %v2969 = vadd.f32 0.0, %v2968
    %v2970 = vpop.f32.mrb[0].mxu0
    %2971 = vmatprep.mubr.f32.mxu0 0.0
    %2972 = vmatmul.mubr.f32.gmra.mrb[0].mxu0 %v2882
    %v2973 = vpop.f32.mrb[0].mxu0
    %v2974 = vadd.f32 0.0, %v2973
    %v2975 = vpop.f32.mrb[0].mxu0
    %2976 = vdwg.mxu0
    %2981 = vrot.lane.b32.xlu0 %v2857, 64
    %v2982 = vpop.permute.xlu0 %2981
    %2983 = vrot.lane.b32.xlu0 %v2859, 64
    %v2984 = vpop.permute.xlu0 %2983
    %2985 = vrot.lane.b32.xlu0 %v2861, 64
    %v2986 = vpop.permute.xlu0 %2985
    %2987 = vrot.lane.b32.xlu0 %v2863, 64
    %v2988 = vpop.permute.xlu0 %2987
    %v2989 = vsel %vm562, %v2857, 0
    %v2991 = vsel %vm562, %v2859, 0
    %v2993 = vsel %vm562, %v2861, 0
    %v2995 = vsel %vm562, %v2863, 0
    %v2997 = vsel %vm562, %v2982, 0
    %v2999 = vsel %vm562, %v2984, 0
    %v3001 = vsel %vm562, %v2986, 0
    %v3003 = vsel %vm562, %v2988, 0
    %3005 = vmatprep.subr.mxu0 0.0
    %3006 = vmatpush1.xpose.msra.mxu0 %v2997
    %3007 = vmatprep.subr.mxu0 0.0
    %3008 = vmatpush1.xpose.msra.mxu0 %v2999
    %3009 = vmatprep.subr.mxu0 0.0
    %3010 = vmatpush1.xpose.msra.mxu0 %v3001
    %3011 = vmatprep.subr.mxu0 0.0
    %3012 = vmatpush1.xpose.msra.mxu0 %v3003
    %3013 = vmatprep.subr.mxu0 0.0
    %3014 = vmatpush1.xpose.msra.mxu0 0.0
    %3015 = vmatprep.subr.mxu0 0.0
    %3016 = vmatpush1.xpose.msra.mxu0 0.0
    %3017 = vmatprep.subr.mxu0 0.0
    %3018 = vmatpush1.xpose.msra.mxu0 0.0
    %3019 = vmatprep.subr.mxu0 0.0
    %3020 = vmatpush1.xpose.msra.mxu0 0.0
    %3021 = vmatprep.subr.mxu0 0.0
    %3022 = vmatpush1.xpose.msra.mxu0 0.0
    %3023 = vmatprep.subr.mxu0 0.0
    %3024 = vmatpush1.xpose.msra.mxu0 0.0
    %3025 = vmatprep.subr.mxu0 0.0
    %3026 = vmatpush1.xpose.msra.mxu0 0.0
    %3027 = vmatprep.subr.mxu0 0.0
    %3028 = vmatpush1.xpose.msra.mxu0 0.0
    %3029 = vmatprep.subr.mxu0 0.0
    %3030 = vmatpush1.xpose.msra.mxu0 0.0
    %3031 = vmatprep.subr.mxu0 0.0
    %3032 = vmatpush1.xpose.msra.mxu0 0.0
    %3033 = vmatprep.subr.mxu0 0.0
    %3034 = vmatpush1.xpose.msra.mxu0 0.0
    %3035 = vmatprep.subr.mxu0 0.0
    %3036 = vmatpush1.xpose.msra.mxu0 0.0
    %3037 = vmatprep.subr.mxu0 0.0
    %3038 = vmatpush1.xpose.msra.mxu0 0.0
    %3039 = vmatprep.subr.mxu0 0.0
    %3040 = vmatpush1.xpose.msra.mxu0 0.0
    %3041 = vmatprep.subr.mxu0 0.0
    %3042 = vmatpush1.xpose.msra.mxu0 0.0
    %3043 = vmatprep.subr.mxu0 0.0
    %3044 = vmatpush1.xpose.msra.mxu0 0.0
    %3045 = vmatprep.subr.mxu0 0.0
    %3046 = vmatpush1.xpose.msra.mxu0 0.0
    %3047 = vmatprep.subr.mxu0 0.0
    %3048 = vmatpush1.xpose.msra.mxu0 0.0
    %3049 = vmatprep.subr.mxu0 0.0
    %3050 = vmatpush1.xpose.msra.mxu0 0.0
    %3051 = vmatprep.subr.mxu0 0.0
    %3052 = vmatpush1.xpose.msra.mxu0 0.0
    %3053 = vmatprep.subr.mxu0 0.0
    %3054 = vmatpush1.xpose.msra.mxu0 0.0
    %3055 = vmatprep.subr.mxu0 0.0
    %3056 = vmatpush1.xpose.msra.mxu0 0.0
    %3057 = vmatprep.subr.mxu0 0.0
    %3058 = vmatpush1.xpose.msra.mxu0 0.0
    %3059 = vmatprep.subr.mxu0 0.0
    %3060 = vmatpush1.xpose.msra.mxu0 0.0
    %3061 = vmatprep.subr.mxu0 0.0
    %3062 = vmatpush1.xpose.msra.mxu0 0.0
    %3063 = vmatprep.subr.mxu0 0.0
    %3064 = vmatpush1.xpose.msra.mxu0 0.0
    %3065 = vmatprep.subr.mxu0 0.0
    %3066 = vmatpush1.xpose.msra.mxu0 0.0
    %3067 = vmatprep.subr.mxu0 0.0
    %3068 = vmatpush1.xpose.msra.mxu0 0.0
    %3069 = vmatprep.mubr.f32.mxu0 0.0
    %3070 = vmatmul.mubr.f32.gmra.mrb[0].mxu0 %v2989
    %v3071 = vpop.f32.mrb[0].mxu0
    %v3072 = vadd.f32 0.0, %v3071
    %v3073 = vpop.f32.mrb[0].mxu0
    %3074 = vmatprep.mubr.f32.mxu0 0.0
    %3075 = vmatmul.mubr.f32.gmra.mrb[0].mxu0 %v2991
    %v3076 = vpop.f32.mrb[0].mxu0
    %v3077 = vadd.f32 0.0, %v3076
    %v3078 = vpop.f32.mrb[0].mxu0
    %3079 = vmatprep.mubr.f32.mxu0 0.0
    %3080 = vmatmul.mubr.f32.gmra.mrb[0].mxu0 %v2993
    %v3081 = vpop.f32.mrb[0].mxu0
    %v3082 = vadd.f32 0.0, %v3081
    %v3083 = vpop.f32.mrb[0].mxu0
    %3084 = vmatprep.mubr.f32.mxu0 0.0
    %3085 = vmatmul.mubr.f32.gmra.mrb[0].mxu0 %v2995
    %v3086 = vpop.f32.mrb[0].mxu0
    %v3087 = vadd.f32 0.0, %v3086
    %v3088 = vpop.f32.mrb[0].mxu0
    %3089 = vdwg.mxu0
    %v3090 = vmul.f32 %v2959, 1.442695
    %v3091 = vpow.pop %v3090
    %v3092 = vmul.f32 %v2964, 1.442695
    %v3093 = vpow.pop %v3092
    %v3094 = vmul.f32 %v2969, 1.442695
    %v3095 = vpow.pop %v3094
    %v3096 = vmul.f32 %v2974, 1.442695
    %v3097 = vpow.pop %v3096
    %v3098 = vmul.f32 %v3072, %v188
    %v3099 = vmul.f32 %v3077, %v189
    %v3100 = vmul.f32 %v3082, %v190
    %v3101 = vmul.f32 %v3087, %v191
    %v3102 = vsel %vm184, %v3091, %v3098
    %v3103 = vsel %vm185, %v3093, %v3099
    %v3104 = vsel %vm186, %v3095, %v3100
    %v3105 = vsel %vm187, %v3097, %v3101
    %v3106 = vsel %vm220, %v3102, 0.0
    %3107 = vadd.xlane.f32.xlu0 %v3106
    %v3108 = vpop.xlane.xlu0 %3107
    %v3109 = vsel %vm220, %v3103, 0.0
    %3110 = vadd.xlane.f32.xlu0 %v3109
    %v3111 = vpop.xlane.xlu0 %3110
    %v3112 = vsel %vm220, %v3104, 0.0
    %3113 = vadd.xlane.f32.xlu0 %v3112
    %v3114 = vpop.xlane.xlu0 %3113
    %v3115 = vsel %vm220, %v3105, 0.0
    %3116 = vadd.xlane.f32.xlu0 %v3115
    %v3117 = vpop.xlane.xlu0 %3116
    %vm3118 = vcmp.gt.f32.partialorder %v3108, 0.0
    %vm3119 = vcmp.gt.f32.partialorder %v3111, 0.0
    %vm3120 = vcmp.gt.f32.partialorder %v3114, 0.0
    %vm3121 = vcmp.gt.f32.partialorder %v3117, 0.0
    %v3122 = vsel %vm3118, %v3108, 1.0
    %v3123 = vsel %vm3119, %v3111, 1.0
    %v3124 = vsel %vm3120, %v3114, 1.0
    %v3125 = vsel %vm3121, %v3117, 1.0
    %3126 = vrot.lane.b32.xlu0 %v2729, 64
    %v3127 = vpop.permute.xlu0 %3126
    %3128 = vrot.lane.b32.xlu0 %v2735, 64
    %v3129 = vpop.permute.xlu0 %3128
    %3130 = vrot.lane.b32.xlu0 %v2741, 64
    %v3131 = vpop.permute.xlu0 %3130
    %3132 = vrot.lane.b32.xlu0 %v2747, 64
    %v3133 = vpop.permute.xlu0 %3132
    %v3139 = vsel %vm220, %v3102, 0
    %v3142 = vsel %vm220, %v3103, 0
    %v3145 = vsel %vm220, %v3104, 0
    %v3148 = vsel %vm220, %v3105, 0
    %3150 = vmatprep.subr.mxu0 0.0
    %3151 = vmatpush1.msra.mxu0 %v3127
    %3152 = vmatprep.subr.mxu0 0.0
    %3153 = vmatpush1.msra.mxu0 %v3129
    %3154 = vmatprep.subr.mxu0 0.0
    %3155 = vmatpush1.msra.mxu0 %v3131
    %3156 = vmatprep.subr.mxu0 0.0
    %3157 = vmatpush1.msra.mxu0 %v3133
    %3158 = vmatprep.subr.mxu0 0.0
    %3159 = vmatpush1.msra.mxu0 0.0
    %3160 = vmatprep.subr.mxu0 0.0
    %3161 = vmatpush1.msra.mxu0 0.0
    %3162 = vmatprep.subr.mxu0 0.0
    %3163 = vmatpush1.msra.mxu0 0.0
    %3164 = vmatprep.subr.mxu0 0.0
    %3165 = vmatpush1.msra.mxu0 0.0
    %3166 = vmatprep.subr.mxu0 0.0
    %3167 = vmatpush1.msra.mxu0 0.0
    %3168 = vmatprep.subr.mxu0 0.0
    %3169 = vmatpush1.msra.mxu0 0.0
    %3170 = vmatprep.subr.mxu0 0.0
    %3171 = vmatpush1.msra.mxu0 0.0
    %3172 = vmatprep.subr.mxu0 0.0
    %3173 = vmatpush1.msra.mxu0 0.0
    %3174 = vmatprep.subr.mxu0 0.0
    %3175 = vmatpush1.msra.mxu0 0.0
    %3176 = vmatprep.subr.mxu0 0.0
    %3177 = vmatpush1.msra.mxu0 0.0
    %3178 = vmatprep.subr.mxu0 0.0
    %3179 = vmatpush1.msra.mxu0 0.0
    %3180 = vmatprep.subr.mxu0 0.0
    %3181 = vmatpush1.msra.mxu0 0.0
    %3182 = vmatprep.subr.mxu0 0.0
    %3183 = vmatpush1.msra.mxu0 0.0
    %3184 = vmatprep.subr.mxu0 0.0
    %3185 = vmatpush1.msra.mxu0 0.0
    %3186 = vmatprep.subr.mxu0 0.0
    %3187 = vmatpush1.msra.mxu0 0.0
    %3188 = vmatprep.subr.mxu0 0.0
    %3189 = vmatpush1.msra.mxu0 0.0
    %3190 = vmatprep.subr.mxu0 0.0
    %3191 = vmatpush1.msra.mxu0 0.0
    %3192 = vmatprep.subr.mxu0 0.0
    %3193 = vmatpush1.msra.mxu0 0.0
    %3194 = vmatprep.subr.mxu0 0.0
    %3195 = vmatpush1.msra.mxu0 0.0
    %3196 = vmatprep.subr.mxu0 0.0
    %3197 = vmatpush1.msra.mxu0 0.0
    %3198 = vmatprep.subr.mxu0 0.0
    %3199 = vmatpush1.msra.mxu0 0.0
    %3200 = vmatprep.subr.mxu0 0.0
    %3201 = vmatpush1.msra.mxu0 0.0
    %3202 = vmatprep.subr.mxu0 0.0
    %3203 = vmatpush1.msra.mxu0 0.0
    %3204 = vmatprep.subr.mxu0 0.0
    %3205 = vmatpush1.msra.mxu0 0.0
    %3206 = vmatprep.subr.mxu0 0.0
    %3207 = vmatpush1.msra.mxu0 0.0
    %3208 = vmatprep.subr.mxu0 0.0
    %3209 = vmatpush1.msra.mxu0 0.0
    %3210 = vmatprep.subr.mxu0 0.0
    %3211 = vmatpush1.msra.mxu0 0.0
    %3212 = vmatprep.subr.mxu0 0.0
    %3213 = vmatpush1.msra.mxu0 0.0
    %3214 = vmatprep.mubr.f32.mxu0 0.0
    %3215 = vmatmul.mubr.f32.gmra.mrb[0].mxu0 %v3139
    %v3216 = vpop.f32.mrb[0].mxu0
    %v3217 = vadd.f32 0.0, %v3216
    %v3218 = vpop.f32.mrb[0].mxu0
    %3219 = vmatprep.mubr.f32.mxu0 0.0
    %3220 = vmatmul.mubr.f32.gmra.mrb[0].mxu0 %v3142
    %v3221 = vpop.f32.mrb[0].mxu0
    %v3222 = vadd.f32 0.0, %v3221
    %v3223 = vpop.f32.mrb[0].mxu0
    %3224 = vmatprep.mubr.f32.mxu0 0.0
    %3225 = vmatmul.mubr.f32.gmra.mrb[0].mxu0 %v3145
    %v3226 = vpop.f32.mrb[0].mxu0
    %v3227 = vadd.f32 0.0, %v3226
    %v3228 = vpop.f32.mrb[0].mxu0
    %3229 = vmatprep.mubr.f32.mxu0 0.0
    %3230 = vmatmul.mubr.f32.gmra.mrb[0].mxu0 %v3148
    %v3231 = vpop.f32.mrb[0].mxu0
    %v3232 = vadd.f32 0.0, %v3231
    %v3233 = vpop.f32.mrb[0].mxu0
    %3234 = vdwg.mxu0
    %v3235 = vrcp.pop %v3122
    %v3236 = vrcp.pop %v3123
    %v3237 = vrcp.pop %v3124
    %v3238 = vrcp.pop %v3125
    %v3239 = vmul.f32 %v3217, %v3235
    %v3240 = vmul.f32 %v3222, %v3236
    %v3241 = vmul.f32 %v3227, %v3237
    %v3242 = vmul.f32 %v3232, %v3238
    %3243 = vrot.lane.b32.xlu0 %v2729, 120
    %v3244 = vpop.permute.xlu0 %3243
    %3245 = vrot.lane.b32.xlu0 %v2735, 120
    %v3246 = vpop.permute.xlu0 %3245
    %3247 = vrot.lane.b32.xlu0 %v2741, 120
    %v3248 = vpop.permute.xlu0 %3247
    %3249 = vrot.lane.b32.xlu0 %v2747, 120
    %v3250 = vpop.permute.xlu0 %3249
    %3251 = vrot.lane.b32.xlu0 %v2729, 88
    %v3252 = vpop.permute.xlu0 %3251
    %3253 = vrot.lane.b32.xlu0 %v2735, 88
    %v3254 = vpop.permute.xlu0 %3253
    %3255 = vrot.lane.b32.xlu0 %v2741, 88
    %v3256 = vpop.permute.xlu0 %3255
    %3257 = vrot.lane.b32.xlu0 %v2747, 88
    %v3258 = vpop.permute.xlu0 %3257
    %v3259 = vsel %vm448, %v3244, 0
    %v3261 = vsel %vm448, %v3246, 0
    %v3263 = vsel %vm448, %v3248, 0
    %v3265 = vsel %vm448, %v3250, 0
    %v3267 = vsel %vm448, %v3252, 0
    %v3269 = vsel %vm448, %v3254, 0
    %v3271 = vsel %vm448, %v3256, 0
    %v3273 = vsel %vm448, %v3258, 0
    %3275 = vmatprep.subr.mxu0 0.0
    %3276 = vmatpush1.xpose.msra.mxu0 %v3267
    %3277 = vmatprep.subr.mxu0 0.0
    %3278 = vmatpush1.xpose.msra.mxu0 %v3269
    %3279 = vmatprep.subr.mxu0 0.0
    %3280 = vmatpush1.xpose.msra.mxu0 %v3271
    %3281 = vmatprep.subr.mxu0 0.0
    %3282 = vmatpush1.xpose.msra.mxu0 %v3273
    %3283 = vmatprep.subr.mxu0 0.0
    %3284 = vmatpush1.xpose.msra.mxu0 0.0
    %3285 = vmatprep.subr.mxu0 0.0
    %3286 = vmatpush1.xpose.msra.mxu0 0.0
    %3287 = vmatprep.subr.mxu0 0.0
    %3288 = vmatpush1.xpose.msra.mxu0 0.0
    %3289 = vmatprep.subr.mxu0 0.0
    %3290 = vmatpush1.xpose.msra.mxu0 0.0
    %3291 = vmatprep.subr.mxu0 0.0
    %3292 = vmatpush1.xpose.msra.mxu0 0.0
    %3293 = vmatprep.subr.mxu0 0.0
    %3294 = vmatpush1.xpose.msra.mxu0 0.0
    %3295 = vmatprep.subr.mxu0 0.0
    %3296 = vmatpush1.xpose.msra.mxu0 0.0
    %3297 = vmatprep.subr.mxu0 0.0
    %3298 = vmatpush1.xpose.msra.mxu0 0.0
    %3299 = vmatprep.subr.mxu0 0.0
    %3300 = vmatpush1.xpose.msra.mxu0 0.0
    %3301 = vmatprep.subr.mxu0 0.0
    %3302 = vmatpush1.xpose.msra.mxu0 0.0
    %3303 = vmatprep.subr.mxu0 0.0
    %3304 = vmatpush1.xpose.msra.mxu0 0.0
    %3305 = vmatprep.subr.mxu0 0.0
    %3306 = vmatpush1.xpose.msra.mxu0 0.0
    %3307 = vmatprep.subr.mxu0 0.0
    %3308 = vmatpush1.xpose.msra.mxu0 0.0
    %3309 = vmatprep.subr.mxu0 0.0
    %3310 = vmatpush1.xpose.msra.mxu0 0.0
    %3311 = vmatprep.subr.mxu0 0.0
    %3312 = vmatpush1.xpose.msra.mxu0 0.0
    %3313 = vmatprep.subr.mxu0 0.0
    %3314 = vmatpush1.xpose.msra.mxu0 0.0
    %3315 = vmatprep.subr.mxu0 0.0
    %3316 = vmatpush1.xpose.msra.mxu0 0.0
    %3317 = vmatprep.subr.mxu0 0.0
    %3318 = vmatpush1.xpose.msra.mxu0 0.0
    %3319 = vmatprep.subr.mxu0 0.0
    %3320 = vmatpush1.xpose.msra.mxu0 0.0
    %3321 = vmatprep.subr.mxu0 0.0
    %3322 = vmatpush1.xpose.msra.mxu0 0.0
    %3323 = vmatprep.subr.mxu0 0.0
    %3324 = vmatpush1.xpose.msra.mxu0 0.0
    %3325 = vmatprep.subr.mxu0 0.0
    %3326 = vmatpush1.xpose.msra.mxu0 0.0
    %3327 = vmatprep.subr.mxu0 0.0
    %3328 = vmatpush1.xpose.msra.mxu0 0.0
    %3329 = vmatprep.subr.mxu0 0.0
    %3330 = vmatpush1.xpose.msra.mxu0 0.0
    %3331 = vmatprep.subr.mxu0 0.0
    %3332 = vmatpush1.xpose.msra.mxu0 0.0
    %3333 = vmatprep.subr.mxu0 0.0
    %3334 = vmatpush1.xpose.msra.mxu0 0.0
    %3335 = vmatprep.subr.mxu0 0.0
    %3336 = vmatpush1.xpose.msra.mxu0 0.0
    %3337 = vmatprep.subr.mxu0 0.0
    %3338 = vmatpush1.xpose.msra.mxu0 0.0
    %3339 = vmatprep.mubr.f32.mxu0 0.0
    %3340 = vmatmul.mubr.f32.gmra.mrb[0].mxu0 %v3259
    %v3341 = vpop.f32.mrb[0].mxu0
    %v3342 = vadd.f32 0.0, %v3341
    %v3343 = vpop.f32.mrb[0].mxu0
    %3344 = vmatprep.mubr.f32.mxu0 0.0
    %3345 = vmatmul.mubr.f32.gmra.mrb[0].mxu0 %v3261
    %v3346 = vpop.f32.mrb[0].mxu0
    %v3347 = vadd.f32 0.0, %v3346
    %v3348 = vpop.f32.mrb[0].mxu0
    %3349 = vmatprep.mubr.f32.mxu0 0.0
    %3350 = vmatmul.mubr.f32.gmra.mrb[0].mxu0 %v3263
    %v3351 = vpop.f32.mrb[0].mxu0
    %v3352 = vadd.f32 0.0, %v3351
    %v3353 = vpop.f32.mrb[0].mxu0
    %3354 = vmatprep.mubr.f32.mxu0 0.0
    %3355 = vmatmul.mubr.f32.gmra.mrb[0].mxu0 %v3265
    %v3356 = vpop.f32.mrb[0].mxu0
    %v3357 = vadd.f32 0.0, %v3356
    %v3358 = vpop.f32.mrb[0].mxu0
    %3359 = vdwg.mxu0
    %3360 = vrot.lane.b32.xlu0 %v2857, 112
    %v3361 = vpop.permute.xlu0 %3360
    %3362 = vrot.lane.b32.xlu0 %v2859, 112
    %v3363 = vpop.permute.xlu0 %3362
    %3364 = vrot.lane.b32.xlu0 %v2861, 112
    %v3365 = vpop.permute.xlu0 %3364
    %3366 = vrot.lane.b32.xlu0 %v2863, 112
    %v3367 = vpop.permute.xlu0 %3366
    %3368 = vrot.lane.b32.xlu0 %v2857, 48
    %v3369 = vpop.permute.xlu0 %3368
    %3370 = vrot.lane.b32.xlu0 %v2859, 48
    %v3371 = vpop.permute.xlu0 %3370
    %3372 = vrot.lane.b32.xlu0 %v2861, 48
    %v3373 = vpop.permute.xlu0 %3372
    %3374 = vrot.lane.b32.xlu0 %v2863, 48
    %v3375 = vpop.permute.xlu0 %3374
    %v3376 = vsel %vm562, %v3361, 0
    %v3378 = vsel %vm562, %v3363, 0
    %v3380 = vsel %vm562, %v3365, 0
    %v3382 = vsel %vm562, %v3367, 0
    %v3384 = vsel %vm562, %v3369, 0
    %v3386 = vsel %vm562, %v3371, 0
    %v3388 = vsel %vm562, %v3373, 0
    %v3390 = vsel %vm562, %v3375, 0
    %3392 = vmatprep.subr.mxu0 0.0
    %3393 = vmatpush1.xpose.msra.mxu0 %v3384
    %3394 = vmatprep.subr.mxu0 0.0
    %3395 = vmatpush1.xpose.msra.mxu0 %v3386
    %3396 = vmatprep.subr.mxu0 0.0
    %3397 = vmatpush1.xpose.msra.mxu0 %v3388
    %3398 = vmatprep.subr.mxu0 0.0
    %3399 = vmatpush1.xpose.msra.mxu0 %v3390
    %3400 = vmatprep.subr.mxu0 0.0
    %3401 = vmatpush1.xpose.msra.mxu0 0.0
    %3402 = vmatprep.subr.mxu0 0.0
    %3403 = vmatpush1.xpose.msra.mxu0 0.0
    %3404 = vmatprep.subr.mxu0 0.0
    %3405 = vmatpush1.xpose.msra.mxu0 0.0
    %3406 = vmatprep.subr.mxu0 0.0
    %3407 = vmatpush1.xpose.msra.mxu0 0.0
    %3408 = vmatprep.subr.mxu0 0.0
    %3409 = vmatpush1.xpose.msra.mxu0 0.0
    %3410 = vmatprep.subr.mxu0 0.0
    %3411 = vmatpush1.xpose.msra.mxu0 0.0
    %3412 = vmatprep.subr.mxu0 0.0
    %3413 = vmatpush1.xpose.msra.mxu0 0.0
    %3414 = vmatprep.subr.mxu0 0.0
    %3415 = vmatpush1.xpose.msra.mxu0 0.0
    %3416 = vmatprep.subr.mxu0 0.0
    %3417 = vmatpush1.xpose.msra.mxu0 0.0
    %3418 = vmatprep.subr.mxu0 0.0
    %3419 = vmatpush1.xpose.msra.mxu0 0.0
    %3420 = vmatprep.subr.mxu0 0.0
    %3421 = vmatpush1.xpose.msra.mxu0 0.0
    %3422 = vmatprep.subr.mxu0 0.0
    %3423 = vmatpush1.xpose.msra.mxu0 0.0
    %3424 = vmatprep.subr.mxu0 0.0
    %3425 = vmatpush1.xpose.msra.mxu0 0.0
    %3426 = vmatprep.subr.mxu0 0.0
    %3427 = vmatpush1.xpose.msra.mxu0 0.0
    %3428 = vmatprep.subr.mxu0 0.0
    %3429 = vmatpush1.xpose.msra.mxu0 0.0
    %3430 = vmatprep.subr.mxu0 0.0
    %3431 = vmatpush1.xpose.msra.mxu0 0.0
    %3432 = vmatprep.subr.mxu0 0.0
    %3433 = vmatpush1.xpose.msra.mxu0 0.0
    %3434 = vmatprep.subr.mxu0 0.0
    %3435 = vmatpush1.xpose.msra.mxu0 0.0
    %3436 = vmatprep.subr.mxu0 0.0
    %3437 = vmatpush1.xpose.msra.mxu0 0.0
    %3438 = vmatprep.subr.mxu0 0.0
    %3439 = vmatpush1.xpose.msra.mxu0 0.0
    %3440 = vmatprep.subr.mxu0 0.0
    %3441 = vmatpush1.xpose.msra.mxu0 0.0
    %3442 = vmatprep.subr.mxu0 0.0
    %3443 = vmatpush1.xpose.msra.mxu0 0.0
    %3444 = vmatprep.subr.mxu0 0.0
    %3445 = vmatpush1.xpose.msra.mxu0 0.0
    %3446 = vmatprep.subr.mxu0 0.0
    %3447 = vmatpush1.xpose.msra.mxu0 0.0
    %3448 = vmatprep.subr.mxu0 0.0
    %3449 = vmatpush1.xpose.msra.mxu0 0.0
    %3450 = vmatprep.subr.mxu0 0.0
    %3451 = vmatpush1.xpose.msra.mxu0 0.0
    %3452 = vmatprep.subr.mxu0 0.0
    %3453 = vmatpush1.xpose.msra.mxu0 0.0
    %3454 = vmatprep.subr.mxu0 0.0
    %3455 = vmatpush1.xpose.msra.mxu0 0.0
    %3456 = vmatprep.mubr.f32.mxu0 0.0
    %3457 = vmatmul.mubr.f32.gmra.mrb[0].mxu0 %v3376
    %v3458 = vpop.f32.mrb[0].mxu0
    %v3459 = vadd.f32 0.0, %v3458
    %v3460 = vpop.f32.mrb[0].mxu0
    %3461 = vmatprep.mubr.f32.mxu0 0.0
    %3462 = vmatmul.mubr.f32.gmra.mrb[0].mxu0 %v3378
    %v3463 = vpop.f32.mrb[0].mxu0
    %v3464 = vadd.f32 0.0, %v3463
    %v3465 = vpop.f32.mrb[0].mxu0
    %3466 = vmatprep.mubr.f32.mxu0 0.0
    %3467 = vmatmul.mubr.f32.gmra.mrb[0].mxu0 %v3380
    %v3468 = vpop.f32.mrb[0].mxu0
    %v3469 = vadd.f32 0.0, %v3468
    %v3470 = vpop.f32.mrb[0].mxu0
    %3471 = vmatprep.mubr.f32.mxu0 0.0
    %3472 = vmatmul.mubr.f32.gmra.mrb[0].mxu0 %v3382
    %v3473 = vpop.f32.mrb[0].mxu0
    %v3474 = vadd.f32 0.0, %v3473
    %v3475 = vpop.f32.mrb[0].mxu0
    %3476 = vdwg.mxu0
    %v3477 = vmul.f32 %v3342, 1.442695
    %v3478 = vpow.pop %v3477
    %v3479 = vmul.f32 %v3347, 1.442695
    %v3480 = vpow.pop %v3479
    %v3481 = vmul.f32 %v3352, 1.442695
    %v3482 = vpow.pop %v3481
    %v3483 = vmul.f32 %v3357, 1.442695
    %v3484 = vpow.pop %v3483
    %v3485 = vmul.f32 %v3459, %v188
    %v3486 = vmul.f32 %v3464, %v189
    %v3487 = vmul.f32 %v3469, %v190
    %v3488 = vmul.f32 %v3474, %v191
    %v3489 = vsel %vm184, %v3478, %v3485
    %v3490 = vsel %vm185, %v3480, %v3486
    %v3491 = vsel %vm186, %v3482, %v3487
    %v3492 = vsel %vm187, %v3484, %v3488
    %v3493 = vsel %vm220, %v3489, 0.0
    %3494 = vadd.xlane.f32.xlu0 %v3493
    %v3495 = vpop.xlane.xlu0 %3494
    %v3496 = vsel %vm220, %v3490, 0.0
    %3497 = vadd.xlane.f32.xlu0 %v3496
    %v3498 = vpop.xlane.xlu0 %3497
    %v3499 = vsel %vm220, %v3491, 0.0
    %3500 = vadd.xlane.f32.xlu0 %v3499
    %v3501 = vpop.xlane.xlu0 %3500
    %v3502 = vsel %vm220, %v3492, 0.0
    %3503 = vadd.xlane.f32.xlu0 %v3502
    %v3504 = vpop.xlane.xlu0 %3503
    %vm3505 = vcmp.gt.f32.partialorder %v3495, 0.0
    %vm3506 = vcmp.gt.f32.partialorder %v3498, 0.0
    %vm3507 = vcmp.gt.f32.partialorder %v3501, 0.0
    %vm3508 = vcmp.gt.f32.partialorder %v3504, 0.0
    %v3509 = vsel %vm3505, %v3495, 1.0
    %v3510 = vsel %vm3506, %v3498, 1.0
    %v3511 = vsel %vm3507, %v3501, 1.0
    %v3512 = vsel %vm3508, %v3504, 1.0
    %3513 = vrot.lane.b32.xlu0 %v2729, 56
    %v3514 = vpop.permute.xlu0 %3513
    %3515 = vrot.lane.b32.xlu0 %v2735, 56
    %v3516 = vpop.permute.xlu0 %3515
    %3517 = vrot.lane.b32.xlu0 %v2741, 56
    %v3518 = vpop.permute.xlu0 %3517
    %3519 = vrot.lane.b32.xlu0 %v2747, 56
    %v3520 = vpop.permute.xlu0 %3519
    %v3526 = vsel %vm220, %v3489, 0
    %v3529 = vsel %vm220, %v3490, 0
    %v3532 = vsel %vm220, %v3491, 0
    %v3535 = vsel %vm220, %v3492, 0
    %3537 = vmatprep.subr.mxu0 0.0
    %3538 = vmatpush1.msra.mxu0 %v3514
    %3539 = vmatprep.subr.mxu0 0.0
    %3540 = vmatpush1.msra.mxu0 %v3516
    %3541 = vmatprep.subr.mxu0 0.0
    %3542 = vmatpush1.msra.mxu0 %v3518
    %3543 = vmatprep.subr.mxu0 0.0
    %3544 = vmatpush1.msra.mxu0 %v3520
    %3545 = vmatprep.subr.mxu0 0.0
    %3546 = vmatpush1.msra.mxu0 0.0
    %3547 = vmatprep.subr.mxu0 0.0
    %3548 = vmatpush1.msra.mxu0 0.0
    %3549 = vmatprep.subr.mxu0 0.0
    %3550 = vmatpush1.msra.mxu0 0.0
    %3551 = vmatprep.subr.mxu0 0.0
    %3552 = vmatpush1.msra.mxu0 0.0
    %3553 = vmatprep.subr.mxu0 0.0
    %3554 = vmatpush1.msra.mxu0 0.0
    %3555 = vmatprep.subr.mxu0 0.0
    %3556 = vmatpush1.msra.mxu0 0.0
    %3557 = vmatprep.subr.mxu0 0.0
    %3558 = vmatpush1.msra.mxu0 0.0
    %3559 = vmatprep.subr.mxu0 0.0
    %3560 = vmatpush1.msra.mxu0 0.0
    %3561 = vmatprep.subr.mxu0 0.0
    %3562 = vmatpush1.msra.mxu0 0.0
    %3563 = vmatprep.subr.mxu0 0.0
    %3564 = vmatpush1.msra.mxu0 0.0
    %3565 = vmatprep.subr.mxu0 0.0
    %3566 = vmatpush1.msra.mxu0 0.0
    %3567 = vmatprep.subr.mxu0 0.0
    %3568 = vmatpush1.msra.mxu0 0.0
    %3569 = vmatprep.subr.mxu0 0.0
    %3570 = vmatpush1.msra.mxu0 0.0
    %3571 = vmatprep.subr.mxu0 0.0
    %3572 = vmatpush1.msra.mxu0 0.0
    %3573 = vmatprep.subr.mxu0 0.0
    %3574 = vmatpush1.msra.mxu0 0.0
    %3575 = vmatprep.subr.mxu0 0.0
    %3576 = vmatpush1.msra.mxu0 0.0
    %3577 = vmatprep.subr.mxu0 0.0
    %3578 = vmatpush1.msra.mxu0 0.0
    %3579 = vmatprep.subr.mxu0 0.0
    %3580 = vmatpush1.msra.mxu0 0.0
    %3581 = vmatprep.subr.mxu0 0.0
    %3582 = vmatpush1.msra.mxu0 0.0
    %3583 = vmatprep.subr.mxu0 0.0
    %3584 = vmatpush1.msra.mxu0 0.0
    %3585 = vmatprep.subr.mxu0 0.0
    %3586 = vmatpush1.msra.mxu0 0.0
    %3587 = vmatprep.subr.mxu0 0.0
    %3588 = vmatpush1.msra.mxu0 0.0
    %3589 = vmatprep.subr.mxu0 0.0
    %3590 = vmatpush1.msra.mxu0 0.0
    %3591 = vmatprep.subr.mxu0 0.0
    %3592 = vmatpush1.msra.mxu0 0.0
    %3593 = vmatprep.subr.mxu0 0.0
    %3594 = vmatpush1.msra.mxu0 0.0
    %3595 = vmatprep.subr.mxu0 0.0
    %3596 = vmatpush1.msra.mxu0 0.0
    %3597 = vmatprep.subr.mxu0 0.0
    %3598 = vmatpush1.msra.mxu0 0.0
    %3599 = vmatprep.subr.mxu0 0.0
    %3600 = vmatpush1.msra.mxu0 0.0
    %3601 = vmatprep.mubr.f32.mxu0 0.0
    %3602 = vmatmul.mubr.f32.gmra.mrb[0].mxu0 %v3526
    %v3603 = vpop.f32.mrb[0].mxu0
    %v3604 = vadd.f32 0.0, %v3603
    %v3605 = vpop.f32.mrb[0].mxu0
    %3606 = vmatprep.mubr.f32.mxu0 0.0
    %3607 = vmatmul.mubr.f32.gmra.mrb[0].mxu0 %v3529
    %v3608 = vpop.f32.mrb[0].mxu0
    %v3609 = vadd.f32 0.0, %v3608
    %v3610 = vpop.f32.mrb[0].mxu0
    %3611 = vmatprep.mubr.f32.mxu0 0.0
    %3612 = vmatmul.mubr.f32.gmra.mrb[0].mxu0 %v3532
    %v3613 = vpop.f32.mrb[0].mxu0
    %v3614 = vadd.f32 0.0, %v3613
    %v3615 = vpop.f32.mrb[0].mxu0
    %3616 = vmatprep.mubr.f32.mxu0 0.0
    %3617 = vmatmul.mubr.f32.gmra.mrb[0].mxu0 %v3535
    %v3618 = vpop.f32.mrb[0].mxu0
    %v3619 = vadd.f32 0.0, %v3618
    %v3620 = vpop.f32.mrb[0].mxu0
    %3621 = vdwg.mxu0
    %v3622 = vrcp.pop %v3509
    %v3623 = vrcp.pop %v3510
    %v3624 = vrcp.pop %v3511
    %v3625 = vrcp.pop %v3512
    %v3626 = vmul.f32 %v3604, %v3622
    %v3627 = vmul.f32 %v3609, %v3623
    %v3628 = vmul.f32 %v3614, %v3624
    %v3629 = vmul.f32 %v3619, %v3625
    %3630 = vrot.lane.b32.xlu0 %v2729, 112
    %v3631 = vpop.permute.xlu0 %3630
    %3632 = vrot.lane.b32.xlu0 %v2735, 112
    %v3633 = vpop.permute.xlu0 %3632
    %3634 = vrot.lane.b32.xlu0 %v2741, 112
    %v3635 = vpop.permute.xlu0 %3634
    %3636 = vrot.lane.b32.xlu0 %v2747, 112
    %v3637 = vpop.permute.xlu0 %3636
    %3638 = vrot.lane.b32.xlu0 %v2729, 80
    %v3639 = vpop.permute.xlu0 %3638
    %3640 = vrot.lane.b32.xlu0 %v2735, 80
    %v3641 = vpop.permute.xlu0 %3640
    %3642 = vrot.lane.b32.xlu0 %v2741, 80
    %v3643 = vpop.permute.xlu0 %3642
    %3644 = vrot.lane.b32.xlu0 %v2747, 80
    %v3645 = vpop.permute.xlu0 %3644
    %v3646 = vsel %vm448, %v3631, 0
    %v3648 = vsel %vm448, %v3633, 0
    %v3650 = vsel %vm448, %v3635, 0
    %v3652 = vsel %vm448, %v3637, 0
    %v3654 = vsel %vm448, %v3639, 0
    %v3656 = vsel %vm448, %v3641, 0
    %v3658 = vsel %vm448, %v3643, 0
    %v3660 = vsel %vm448, %v3645, 0
    %3662 = vmatprep.subr.mxu0 0.0
    %3663 = vmatpush1.xpose.msra.mxu0 %v3654
    %3664 = vmatprep.subr.mxu0 0.0
    %3665 = vmatpush1.xpose.msra.mxu0 %v3656
    %3666 = vmatprep.subr.mxu0 0.0
    %3667 = vmatpush1.xpose.msra.mxu0 %v3658
    %3668 = vmatprep.subr.mxu0 0.0
    %3669 = vmatpush1.xpose.msra.mxu0 %v3660
    %3670 = vmatprep.subr.mxu0 0.0
    %3671 = vmatpush1.xpose.msra.mxu0 0.0
    %3672 = vmatprep.subr.mxu0 0.0
    %3673 = vmatpush1.xpose.msra.mxu0 0.0
    %3674 = vmatprep.subr.mxu0 0.0
    %3675 = vmatpush1.xpose.msra.mxu0 0.0
    %3676 = vmatprep.subr.mxu0 0.0
    %3677 = vmatpush1.xpose.msra.mxu0 0.0
    %3678 = vmatprep.subr.mxu0 0.0
    %3679 = vmatpush1.xpose.msra.mxu0 0.0
    %3680 = vmatprep.subr.mxu0 0.0
    %3681 = vmatpush1.xpose.msra.mxu0 0.0
    %3682 = vmatprep.subr.mxu0 0.0
    %3683 = vmatpush1.xpose.msra.mxu0 0.0
    %3684 = vmatprep.subr.mxu0 0.0
    %3685 = vmatpush1.xpose.msra.mxu0 0.0
    %3686 = vmatprep.subr.mxu0 0.0
    %3687 = vmatpush1.xpose.msra.mxu0 0.0
    %3688 = vmatprep.subr.mxu0 0.0
    %3689 = vmatpush1.xpose.msra.mxu0 0.0
    %3690 = vmatprep.subr.mxu0 0.0
    %3691 = vmatpush1.xpose.msra.mxu0 0.0
    %3692 = vmatprep.subr.mxu0 0.0
    %3693 = vmatpush1.xpose.msra.mxu0 0.0
    %3694 = vmatprep.subr.mxu0 0.0
    %3695 = vmatpush1.xpose.msra.mxu0 0.0
    %3696 = vmatprep.subr.mxu0 0.0
    %3697 = vmatpush1.xpose.msra.mxu0 0.0
    %3698 = vmatprep.subr.mxu0 0.0
    %3699 = vmatpush1.xpose.msra.mxu0 0.0
    %3700 = vmatprep.subr.mxu0 0.0
    %3701 = vmatpush1.xpose.msra.mxu0 0.0
    %3702 = vmatprep.subr.mxu0 0.0
    %3703 = vmatpush1.xpose.msra.mxu0 0.0
    %3704 = vmatprep.subr.mxu0 0.0
    %3705 = vmatpush1.xpose.msra.mxu0 0.0
    %3706 = vmatprep.subr.mxu0 0.0
    %3707 = vmatpush1.xpose.msra.mxu0 0.0
    %3708 = vmatprep.subr.mxu0 0.0
    %3709 = vmatpush1.xpose.msra.mxu0 0.0
    %3710 = vmatprep.subr.mxu0 0.0
    %3711 = vmatpush1.xpose.msra.mxu0 0.0
    %3712 = vmatprep.subr.mxu0 0.0
    %3713 = vmatpush1.xpose.msra.mxu0 0.0
    %3714 = vmatprep.subr.mxu0 0.0
    %3715 = vmatpush1.xpose.msra.mxu0 0.0
    %3716 = vmatprep.subr.mxu0 0.0
    %3717 = vmatpush1.xpose.msra.mxu0 0.0
    %3718 = vmatprep.subr.mxu0 0.0
    %3719 = vmatpush1.xpose.msra.mxu0 0.0
    %3720 = vmatprep.subr.mxu0 0.0
    %3721 = vmatpush1.xpose.msra.mxu0 0.0
    %3722 = vmatprep.subr.mxu0 0.0
    %3723 = vmatpush1.xpose.msra.mxu0 0.0
    %3724 = vmatprep.subr.mxu0 0.0
    %3725 = vmatpush1.xpose.msra.mxu0 0.0
    %3726 = vmatprep.mubr.f32.mxu0 0.0
    %3727 = vmatmul.mubr.f32.gmra.mrb[0].mxu0 %v3646
    %v3728 = vpop.f32.mrb[0].mxu0
    %v3729 = vadd.f32 0.0, %v3728
    %v3730 = vpop.f32.mrb[0].mxu0
    %3731 = vmatprep.mubr.f32.mxu0 0.0
    %3732 = vmatmul.mubr.f32.gmra.mrb[0].mxu0 %v3648
    %v3733 = vpop.f32.mrb[0].mxu0
    %v3734 = vadd.f32 0.0, %v3733
    %v3735 = vpop.f32.mrb[0].mxu0
    %3736 = vmatprep.mubr.f32.mxu0 0.0
    %3737 = vmatmul.mubr.f32.gmra.mrb[0].mxu0 %v3650
    %v3738 = vpop.f32.mrb[0].mxu0
    %v3739 = vadd.f32 0.0, %v3738
    %v3740 = vpop.f32.mrb[0].mxu0
    %3741 = vmatprep.mubr.f32.mxu0 0.0
    %3742 = vmatmul.mubr.f32.gmra.mrb[0].mxu0 %v3652
    %v3743 = vpop.f32.mrb[0].mxu0
    %v3744 = vadd.f32 0.0, %v3743
    %v3745 = vpop.f32.mrb[0].mxu0
    %3746 = vdwg.mxu0
    %3747 = vrot.lane.b32.xlu0 %v2857, 96
    %v3748 = vpop.permute.xlu0 %3747
    %3749 = vrot.lane.b32.xlu0 %v2859, 96
    %v3750 = vpop.permute.xlu0 %3749
    %3751 = vrot.lane.b32.xlu0 %v2861, 96
    %v3752 = vpop.permute.xlu0 %3751
    %3753 = vrot.lane.b32.xlu0 %v2863, 96
    %v3754 = vpop.permute.xlu0 %3753
    %3755 = vrot.lane.b32.xlu0 %v2857, 32
    %v3756 = vpop.permute.xlu0 %3755
    %3757 = vrot.lane.b32.xlu0 %v2859, 32
    %v3758 = vpop.permute.xlu0 %3757
    %3759 = vrot.lane.b32.xlu0 %v2861, 32
    %v3760 = vpop.permute.xlu0 %3759
    %3761 = vrot.lane.b32.xlu0 %v2863, 32
    %v3762 = vpop.permute.xlu0 %3761
    %v3763 = vsel %vm562, %v3748, 0
    %v3765 = vsel %vm562, %v3750, 0
    %v3767 = vsel %vm562, %v3752, 0
    %v3769 = vsel %vm562, %v3754, 0
    %v3771 = vsel %vm562, %v3756, 0
    %v3773 = vsel %vm562, %v3758, 0
    %v3775 = vsel %vm562, %v3760, 0
    %v3777 = vsel %vm562, %v3762, 0
    %3779 = vmatprep.subr.mxu0 0.0
    %3780 = vmatpush1.xpose.msra.mxu0 %v3771
    %3781 = vmatprep.subr.mxu0 0.0
    %3782 = vmatpush1.xpose.msra.mxu0 %v3773
    %3783 = vmatprep.subr.mxu0 0.0
    %3784 = vmatpush1.xpose.msra.mxu0 %v3775
    %3785 = vmatprep.subr.mxu0 0.0
    %3786 = vmatpush1.xpose.msra.mxu0 %v3777
    %3787 = vmatprep.subr.mxu0 0.0
    %3788 = vmatpush1.xpose.msra.mxu0 0.0
    %3789 = vmatprep.subr.mxu0 0.0
    %3790 = vmatpush1.xpose.msra.mxu0 0.0
    %3791 = vmatprep.subr.mxu0 0.0
    %3792 = vmatpush1.xpose.msra.mxu0 0.0
    %3793 = vmatprep.subr.mxu0 0.0
    %3794 = vmatpush1.xpose.msra.mxu0 0.0
    %3795 = vmatprep.subr.mxu0 0.0
    %3796 = vmatpush1.xpose.msra.mxu0 0.0
    %3797 = vmatprep.subr.mxu0 0.0
    %3798 = vmatpush1.xpose.msra.mxu0 0.0
    %3799 = vmatprep.subr.mxu0 0.0
    %3800 = vmatpush1.xpose.msra.mxu0 0.0
    %3801 = vmatprep.subr.mxu0 0.0
    %3802 = vmatpush1.xpose.msra.mxu0 0.0
    %3803 = vmatprep.subr.mxu0 0.0
    %3804 = vmatpush1.xpose.msra.mxu0 0.0
    %3805 = vmatprep.subr.mxu0 0.0
    %3806 = vmatpush1.xpose.msra.mxu0 0.0
    %3807 = vmatprep.subr.mxu0 0.0
    %3808 = vmatpush1.xpose.msra.mxu0 0.0
    %3809 = vmatprep.subr.mxu0 0.0
    %3810 = vmatpush1.xpose.msra.mxu0 0.0
    %3811 = vmatprep.subr.mxu0 0.0
    %3812 = vmatpush1.xpose.msra.mxu0 0.0
    %3813 = vmatprep.subr.mxu0 0.0
    %3814 = vmatpush1.xpose.msra.mxu0 0.0
    %3815 = vmatprep.subr.mxu0 0.0
    %3816 = vmatpush1.xpose.msra.mxu0 0.0
    %3817 = vmatprep.subr.mxu0 0.0
    %3818 = vmatpush1.xpose.msra.mxu0 0.0
    %3819 = vmatprep.subr.mxu0 0.0
    %3820 = vmatpush1.xpose.msra.mxu0 0.0
    %3821 = vmatprep.subr.mxu0 0.0
    %3822 = vmatpush1.xpose.msra.mxu0 0.0
    %3823 = vmatprep.subr.mxu0 0.0
    %3824 = vmatpush1.xpose.msra.mxu0 0.0
    %3825 = vmatprep.subr.mxu0 0.0
    %3826 = vmatpush1.xpose.msra.mxu0 0.0
    %3827 = vmatprep.subr.mxu0 0.0
    %3828 = vmatpush1.xpose.msra.mxu0 0.0
    %3829 = vmatprep.subr.mxu0 0.0
    %3830 = vmatpush1.xpose.msra.mxu0 0.0
    %3831 = vmatprep.subr.mxu0 0.0
    %3832 = vmatpush1.xpose.msra.mxu0 0.0
    %3833 = vmatprep.subr.mxu0 0.0
    %3834 = vmatpush1.xpose.msra.mxu0 0.0
    %3835 = vmatprep.subr.mxu0 0.0
    %3836 = vmatpush1.xpose.msra.mxu0 0.0
    %3837 = vmatprep.subr.mxu0 0.0
    %3838 = vmatpush1.xpose.msra.mxu0 0.0
    %3839 = vmatprep.subr.mxu0 0.0
    %3840 = vmatpush1.xpose.msra.mxu0 0.0
    %3841 = vmatprep.subr.mxu0 0.0
    %3842 = vmatpush1.xpose.msra.mxu0 0.0
    %3843 = vmatprep.mubr.f32.mxu0 0.0
    %3844 = vmatmul.mubr.f32.gmra.mrb[0].mxu0 %v3763
    %v3845 = vpop.f32.mrb[0].mxu0
    %v3846 = vadd.f32 0.0, %v3845
    %v3847 = vpop.f32.mrb[0].mxu0
    %3848 = vmatprep.mubr.f32.mxu0 0.0
    %3849 = vmatmul.mubr.f32.gmra.mrb[0].mxu0 %v3765
    %v3850 = vpop.f32.mrb[0].mxu0
    %v3851 = vadd.f32 0.0, %v3850
    %v3852 = vpop.f32.mrb[0].mxu0
    %3853 = vmatprep.mubr.f32.mxu0 0.0
    %3854 = vmatmul.mubr.f32.gmra.mrb[0].mxu0 %v3767
    %v3855 = vpop.f32.mrb[0].mxu0
    %v3856 = vadd.f32 0.0, %v3855
    %v3857 = vpop.f32.mrb[0].mxu0
    %3858 = vmatprep.mubr.f32.mxu0 0.0
    %3859 = vmatmul.mubr.f32.gmra.mrb[0].mxu0 %v3769
    %v3860 = vpop.f32.mrb[0].mxu0
    %v3861 = vadd.f32 0.0, %v3860
    %v3862 = vpop.f32.mrb[0].mxu0
    %3863 = vdwg.mxu0
    %v3864 = vmul.f32 %v3729, 1.442695
    %v3865 = vpow.pop %v3864
    %v3866 = vmul.f32 %v3734, 1.442695
    %v3867 = vpow.pop %v3866
    %v3868 = vmul.f32 %v3739, 1.442695
    %v3869 = vpow.pop %v3868
    %v3870 = vmul.f32 %v3744, 1.442695
    %v3871 = vpow.pop %v3870
    %v3872 = vmul.f32 %v3846, %v188
    %v3873 = vmul.f32 %v3851, %v189
    %v3874 = vmul.f32 %v3856, %v190
    %v3875 = vmul.f32 %v3861, %v191
    %v3876 = vsel %vm184, %v3865, %v3872
    %v3877 = vsel %vm185, %v3867, %v3873
    %v3878 = vsel %vm186, %v3869, %v3874
    %v3879 = vsel %vm187, %v3871, %v3875
    %v3880 = vsel %vm220, %v3876, 0.0
    %3881 = vadd.xlane.f32.xlu0 %v3880
    %v3882 = vpop.xlane.xlu0 %3881
    %v3883 = vsel %vm220, %v3877, 0.0
    %3884 = vadd.xlane.f32.xlu0 %v3883
    %v3885 = vpop.xlane.xlu0 %3884
    %v3886 = vsel %vm220, %v3878, 0.0
    %3887 = vadd.xlane.f32.xlu0 %v3886
    %v3888 = vpop.xlane.xlu0 %3887
    %v3889 = vsel %vm220, %v3879, 0.0
    %3890 = vadd.xlane.f32.xlu0 %v3889
    %v3891 = vpop.xlane.xlu0 %3890
    %vm3892 = vcmp.gt.f32.partialorder %v3882, 0.0
    %vm3893 = vcmp.gt.f32.partialorder %v3885, 0.0
    %vm3894 = vcmp.gt.f32.partialorder %v3888, 0.0
    %vm3895 = vcmp.gt.f32.partialorder %v3891, 0.0
    %v3896 = vsel %vm3892, %v3882, 1.0
    %v3897 = vsel %vm3893, %v3885, 1.0
    %v3898 = vsel %vm3894, %v3888, 1.0
    %v3899 = vsel %vm3895, %v3891, 1.0
    %3900 = vrot.lane.b32.xlu0 %v2729, 48
    %v3901 = vpop.permute.xlu0 %3900
    %3902 = vrot.lane.b32.xlu0 %v2735, 48
    %v3903 = vpop.permute.xlu0 %3902
    %3904 = vrot.lane.b32.xlu0 %v2741, 48
    %v3905 = vpop.permute.xlu0 %3904
    %3906 = vrot.lane.b32.xlu0 %v2747, 48
    %v3907 = vpop.permute.xlu0 %3906
    %v3913 = vsel %vm220, %v3876, 0
    %v3916 = vsel %vm220, %v3877, 0
    %v3919 = vsel %vm220, %v3878, 0
    %v3922 = vsel %vm220, %v3879, 0
    %3924 = vmatprep.subr.mxu0 0.0
    %3925 = vmatpush1.msra.mxu0 %v3901
    %3926 = vmatprep.subr.mxu0 0.0
    %3927 = vmatpush1.msra.mxu0 %v3903
    %3928 = vmatprep.subr.mxu0 0.0
    %3929 = vmatpush1.msra.mxu0 %v3905
    %3930 = vmatprep.subr.mxu0 0.0
    %3931 = vmatpush1.msra.mxu0 %v3907
    %3932 = vmatprep.subr.mxu0 0.0
    %3933 = vmatpush1.msra.mxu0 0.0
    %3934 = vmatprep.subr.mxu0 0.0
    %3935 = vmatpush1.msra.mxu0 0.0
    %3936 = vmatprep.subr.mxu0 0.0
    %3937 = vmatpush1.msra.mxu0 0.0
    %3938 = vmatprep.subr.mxu0 0.0
    %3939 = vmatpush1.msra.mxu0 0.0
    %3940 = vmatprep.subr.mxu0 0.0
    %3941 = vmatpush1.msra.mxu0 0.0
    %3942 = vmatprep.subr.mxu0 0.0
    %3943 = vmatpush1.msra.mxu0 0.0
    %3944 = vmatprep.subr.mxu0 0.0
    %3945 = vmatpush1.msra.mxu0 0.0
    %3946 = vmatprep.subr.mxu0 0.0
    %3947 = vmatpush1.msra.mxu0 0.0
    %3948 = vmatprep.subr.mxu0 0.0
    %3949 = vmatpush1.msra.mxu0 0.0
    %3950 = vmatprep.subr.mxu0 0.0
    %3951 = vmatpush1.msra.mxu0 0.0
    %3952 = vmatprep.subr.mxu0 0.0
    %3953 = vmatpush1.msra.mxu0 0.0
    %3954 = vmatprep.subr.mxu0 0.0
    %3955 = vmatpush1.msra.mxu0 0.0
    %3956 = vmatprep.subr.mxu0 0.0
    %3957 = vmatpush1.msra.mxu0 0.0
    %3958 = vmatprep.subr.mxu0 0.0
    %3959 = vmatpush1.msra.mxu0 0.0
    %3960 = vmatprep.subr.mxu0 0.0
    %3961 = vmatpush1.msra.mxu0 0.0
    %3962 = vmatprep.subr.mxu0 0.0
    %3963 = vmatpush1.msra.mxu0 0.0
    %3964 = vmatprep.subr.mxu0 0.0
    %3965 = vmatpush1.msra.mxu0 0.0
    %3966 = vmatprep.subr.mxu0 0.0
    %3967 = vmatpush1.msra.mxu0 0.0
    %3968 = vmatprep.subr.mxu0 0.0
    %3969 = vmatpush1.msra.mxu0 0.0
    %3970 = vmatprep.subr.mxu0 0.0
    %3971 = vmatpush1.msra.mxu0 0.0
    %3972 = vmatprep.subr.mxu0 0.0
    %3973 = vmatpush1.msra.mxu0 0.0
    %3974 = vmatprep.subr.mxu0 0.0
    %3975 = vmatpush1.msra.mxu0 0.0
    %3976 = vmatprep.subr.mxu0 0.0
    %3977 = vmatpush1.msra.mxu0 0.0
    %3978 = vmatprep.subr.mxu0 0.0
    %3979 = vmatpush1.msra.mxu0 0.0
    %3980 = vmatprep.subr.mxu0 0.0
    %3981 = vmatpush1.msra.mxu0 0.0
    %3982 = vmatprep.subr.mxu0 0.0
    %3983 = vmatpush1.msra.mxu0 0.0
    %3984 = vmatprep.subr.mxu0 0.0
    %3985 = vmatpush1.msra.mxu0 0.0
    %3986 = vmatprep.subr.mxu0 0.0
    %3987 = vmatpush1.msra.mxu0 0.0
    %3988 = vmatprep.mubr.f32.mxu0 0.0
    %3989 = vmatmul.mubr.f32.gmra.mrb[0].mxu0 %v3913
    %v3990 = vpop.f32.mrb[0].mxu0
    %v3991 = vadd.f32 0.0, %v3990
    %v3992 = vpop.f32.mrb[0].mxu0
    %3993 = vmatprep.mubr.f32.mxu0 0.0
    %3994 = vmatmul.mubr.f32.gmra.mrb[0].mxu0 %v3916
    %v3995 = vpop.f32.mrb[0].mxu0
    %v3996 = vadd.f32 0.0, %v3995
    %v3997 = vpop.f32.mrb[0].mxu0
    %3998 = vmatprep.mubr.f32.mxu0 0.0
    %3999 = vmatmul.mubr.f32.gmra.mrb[0].mxu0 %v3919
    %v4000 = vpop.f32.mrb[0].mxu0
    %v4001 = vadd.f32 0.0, %v4000
    %v4002 = vpop.f32.mrb[0].mxu0
    %4003 = vmatprep.mubr.f32.mxu0 0.0
    %4004 = vmatmul.mubr.f32.gmra.mrb[0].mxu0 %v3922
    %v4005 = vpop.f32.mrb[0].mxu0
    %v4006 = vadd.f32 0.0, %v4005
    %v4007 = vpop.f32.mrb[0].mxu0
    %4008 = vdwg.mxu0
    %v4009 = vrcp.pop %v3896
    %v4010 = vrcp.pop %v3897
    %v4011 = vrcp.pop %v3898
    %v4012 = vrcp.pop %v3899
    %v4013 = vmul.f32 %v3991, %v4009
    %v4014 = vmul.f32 %v3996, %v4010
    %v4015 = vmul.f32 %v4001, %v4011
    %v4016 = vmul.f32 %v4006, %v4012
    %4017 = vrot.lane.b32.xlu0 %v2729, 104
    %v4018 = vpop.permute.xlu0 %4017
    %4019 = vrot.lane.b32.xlu0 %v2735, 104
    %v4020 = vpop.permute.xlu0 %4019
    %4021 = vrot.lane.b32.xlu0 %v2741, 104
    %v4022 = vpop.permute.xlu0 %4021
    %4023 = vrot.lane.b32.xlu0 %v2747, 104
    %v4024 = vpop.permute.xlu0 %4023
    %4025 = vrot.lane.b32.xlu0 %v2729, 72
    %v4026 = vpop.permute.xlu0 %4025
    %4027 = vrot.lane.b32.xlu0 %v2735, 72
    %v4028 = vpop.permute.xlu0 %4027
    %4029 = vrot.lane.b32.xlu0 %v2741, 72
    %v4030 = vpop.permute.xlu0 %4029
    %4031 = vrot.lane.b32.xlu0 %v2747, 72
    %v4032 = vpop.permute.xlu0 %4031
    %v4033 = vsel %vm448, %v4018, 0
    %v4035 = vsel %vm448, %v4020, 0
    %v4037 = vsel %vm448, %v4022, 0
    %v4039 = vsel %vm448, %v4024, 0
    %v4041 = vsel %vm448, %v4026, 0
    %v4043 = vsel %vm448, %v4028, 0
    %v4045 = vsel %vm448, %v4030, 0
    %v4047 = vsel %vm448, %v4032, 0
    %4049 = vmatprep.subr.mxu0 0.0
    %4050 = vmatpush1.xpose.msra.mxu0 %v4041
    %4051 = vmatprep.subr.mxu0 0.0
    %4052 = vmatpush1.xpose.msra.mxu0 %v4043
    %4053 = vmatprep.subr.mxu0 0.0
    %4054 = vmatpush1.xpose.msra.mxu0 %v4045
    %4055 = vmatprep.subr.mxu0 0.0
    %4056 = vmatpush1.xpose.msra.mxu0 %v4047
    %4057 = vmatprep.subr.mxu0 0.0
    %4058 = vmatpush1.xpose.msra.mxu0 0.0
    %4059 = vmatprep.subr.mxu0 0.0
    %4060 = vmatpush1.xpose.msra.mxu0 0.0
    %4061 = vmatprep.subr.mxu0 0.0
    %4062 = vmatpush1.xpose.msra.mxu0 0.0
    %4063 = vmatprep.subr.mxu0 0.0
    %4064 = vmatpush1.xpose.msra.mxu0 0.0
    %4065 = vmatprep.subr.mxu0 0.0
    %4066 = vmatpush1.xpose.msra.mxu0 0.0
    %4067 = vmatprep.subr.mxu0 0.0
    %4068 = vmatpush1.xpose.msra.mxu0 0.0
    %4069 = vmatprep.subr.mxu0 0.0
    %4070 = vmatpush1.xpose.msra.mxu0 0.0
    %4071 = vmatprep.subr.mxu0 0.0
    %4072 = vmatpush1.xpose.msra.mxu0 0.0
    %4073 = vmatprep.subr.mxu0 0.0
    %4074 = vmatpush1.xpose.msra.mxu0 0.0
    %4075 = vmatprep.subr.mxu0 0.0
    %4076 = vmatpush1.xpose.msra.mxu0 0.0
    %4077 = vmatprep.subr.mxu0 0.0
    %4078 = vmatpush1.xpose.msra.mxu0 0.0
    %4079 = vmatprep.subr.mxu0 0.0
    %4080 = vmatpush1.xpose.msra.mxu0 0.0
    %4081 = vmatprep.subr.mxu0 0.0
    %4082 = vmatpush1.xpose.msra.mxu0 0.0
    %4083 = vmatprep.subr.mxu0 0.0
    %4084 = vmatpush1.xpose.msra.mxu0 0.0
    %4085 = vmatprep.subr.mxu0 0.0
    %4086 = vmatpush1.xpose.msra.mxu0 0.0
    %4087 = vmatprep.subr.mxu0 0.0
    %4088 = vmatpush1.xpose.msra.mxu0 0.0
    %4089 = vmatprep.subr.mxu0 0.0
    %4090 = vmatpush1.xpose.msra.mxu0 0.0
    %4091 = vmatprep.subr.mxu0 0.0
    %4092 = vmatpush1.xpose.msra.mxu0 0.0
    %4093 = vmatprep.subr.mxu0 0.0
    %4094 = vmatpush1.xpose.msra.mxu0 0.0
    %4095 = vmatprep.subr.mxu0 0.0
    %4096 = vmatpush1.xpose.msra.mxu0 0.0
    %4097 = vmatprep.subr.mxu0 0.0
    %4098 = vmatpush1.xpose.msra.mxu0 0.0
    %4099 = vmatprep.subr.mxu0 0.0
    %4100 = vmatpush1.xpose.msra.mxu0 0.0
    %4101 = vmatprep.subr.mxu0 0.0
    %4102 = vmatpush1.xpose.msra.mxu0 0.0
    %4103 = vmatprep.subr.mxu0 0.0
    %4104 = vmatpush1.xpose.msra.mxu0 0.0
    %4105 = vmatprep.subr.mxu0 0.0
    %4106 = vmatpush1.xpose.msra.mxu0 0.0
    %4107 = vmatprep.subr.mxu0 0.0
    %4108 = vmatpush1.xpose.msra.mxu0 0.0
    %4109 = vmatprep.subr.mxu0 0.0
    %4110 = vmatpush1.xpose.msra.mxu0 0.0
    %4111 = vmatprep.subr.mxu0 0.0
    %4112 = vmatpush1.xpose.msra.mxu0 0.0
    %4113 = vmatprep.mubr.f32.mxu0 0.0
    %4114 = vmatmul.mubr.f32.gmra.mrb[0].mxu0 %v4033
    %v4115 = vpop.f32.mrb[0].mxu0
    %v4116 = vadd.f32 0.0, %v4115
    %v4117 = vpop.f32.mrb[0].mxu0
    %4118 = vmatprep.mubr.f32.mxu0 0.0
    %4119 = vmatmul.mubr.f32.gmra.mrb[0].mxu0 %v4035
    %v4120 = vpop.f32.mrb[0].mxu0
    %v4121 = vadd.f32 0.0, %v4120
    %v4122 = vpop.f32.mrb[0].mxu0
    %4123 = vmatprep.mubr.f32.mxu0 0.0
    %4124 = vmatmul.mubr.f32.gmra.mrb[0].mxu0 %v4037
    %v4125 = vpop.f32.mrb[0].mxu0
    %v4126 = vadd.f32 0.0, %v4125
    %v4127 = vpop.f32.mrb[0].mxu0
    %4128 = vmatprep.mubr.f32.mxu0 0.0
    %4129 = vmatmul.mubr.f32.gmra.mrb[0].mxu0 %v4039
    %v4130 = vpop.f32.mrb[0].mxu0
    %v4131 = vadd.f32 0.0, %v4130
    %v4132 = vpop.f32.mrb[0].mxu0
    %4133 = vdwg.mxu0
    %4134 = vrot.lane.b32.xlu0 %v2857, 80
    %v4135 = vpop.permute.xlu0 %4134
    %4136 = vrot.lane.b32.xlu0 %v2859, 80
    %v4137 = vpop.permute.xlu0 %4136
    %4138 = vrot.lane.b32.xlu0 %v2861, 80
    %v4139 = vpop.permute.xlu0 %4138
    %4140 = vrot.lane.b32.xlu0 %v2863, 80
    %v4141 = vpop.permute.xlu0 %4140
    %4142 = vrot.lane.b32.xlu0 %v2857, 16
    %v4143 = vpop.permute.xlu0 %4142
    %4144 = vrot.lane.b32.xlu0 %v2859, 16
    %v4145 = vpop.permute.xlu0 %4144
    %4146 = vrot.lane.b32.xlu0 %v2861, 16
    %v4147 = vpop.permute.xlu0 %4146
    %4148 = vrot.lane.b32.xlu0 %v2863, 16
    %v4149 = vpop.permute.xlu0 %4148
    %v4150 = vsel %vm562, %v4135, 0
    %v4152 = vsel %vm562, %v4137, 0
    %v4154 = vsel %vm562, %v4139, 0
    %v4156 = vsel %vm562, %v4141, 0
    %v4158 = vsel %vm562, %v4143, 0
    %v4160 = vsel %vm562, %v4145, 0
    %v4162 = vsel %vm562, %v4147, 0
    %v4164 = vsel %vm562, %v4149, 0
    %4166 = vmatprep.subr.mxu0 0.0
    %4167 = vmatpush1.xpose.msra.mxu0 %v4158
    %4168 = vmatprep.subr.mxu0 0.0
    %4169 = vmatpush1.xpose.msra.mxu0 %v4160
    %4170 = vmatprep.subr.mxu0 0.0
    %4171 = vmatpush1.xpose.msra.mxu0 %v4162
    %4172 = vmatprep.subr.mxu0 0.0
    %4173 = vmatpush1.xpose.msra.mxu0 %v4164
    %4174 = vmatprep.subr.mxu0 0.0
    %4175 = vmatpush1.xpose.msra.mxu0 0.0
    %4176 = vmatprep.subr.mxu0 0.0
    %4177 = vmatpush1.xpose.msra.mxu0 0.0
    %4178 = vmatprep.subr.mxu0 0.0
    %4179 = vmatpush1.xpose.msra.mxu0 0.0
    %4180 = vmatprep.subr.mxu0 0.0
    %4181 = vmatpush1.xpose.msra.mxu0 0.0
    %4182 = vmatprep.subr.mxu0 0.0
    %4183 = vmatpush1.xpose.msra.mxu0 0.0
    %4184 = vmatprep.subr.mxu0 0.0
    %4185 = vmatpush1.xpose.msra.mxu0 0.0
    %4186 = vmatprep.subr.mxu0 0.0
    %4187 = vmatpush1.xpose.msra.mxu0 0.0
    %4188 = vmatprep.subr.mxu0 0.0
    %4189 = vmatpush1.xpose.msra.mxu0 0.0
    %4190 = vmatprep.subr.mxu0 0.0
    %4191 = vmatpush1.xpose.msra.mxu0 0.0
    %4192 = vmatprep.subr.mxu0 0.0
    %4193 = vmatpush1.xpose.msra.mxu0 0.0
    %4194 = vmatprep.subr.mxu0 0.0
    %4195 = vmatpush1.xpose.msra.mxu0 0.0
    %4196 = vmatprep.subr.mxu0 0.0
    %4197 = vmatpush1.xpose.msra.mxu0 0.0
    %4198 = vmatprep.subr.mxu0 0.0
    %4199 = vmatpush1.xpose.msra.mxu0 0.0
    %4200 = vmatprep.subr.mxu0 0.0
    %4201 = vmatpush1.xpose.msra.mxu0 0.0
    %4202 = vmatprep.subr.mxu0 0.0
    %4203 = vmatpush1.xpose.msra.mxu0 0.0
    %4204 = vmatprep.subr.mxu0 0.0
    %4205 = vmatpush1.xpose.msra.mxu0 0.0
    %4206 = vmatprep.subr.mxu0 0.0
    %4207 = vmatpush1.xpose.msra.mxu0 0.0
    %4208 = vmatprep.subr.mxu0 0.0
    %4209 = vmatpush1.xpose.msra.mxu0 0.0
    %4210 = vmatprep.subr.mxu0 0.0
    %4211 = vmatpush1.xpose.msra.mxu0 0.0
    %4212 = vmatprep.subr.mxu0 0.0
    %4213 = vmatpush1.xpose.msra.mxu0 0.0
    %4214 = vmatprep.subr.mxu0 0.0
    %4215 = vmatpush1.xpose.msra.mxu0 0.0
    %4216 = vmatprep.subr.mxu0 0.0
    %4217 = vmatpush1.xpose.msra.mxu0 0.0
    %4218 = vmatprep.subr.mxu0 0.0
    %4219 = vmatpush1.xpose.msra.mxu0 0.0
    %4220 = vmatprep.subr.mxu0 0.0
    %4221 = vmatpush1.xpose.msra.mxu0 0.0
    %4222 = vmatprep.subr.mxu0 0.0
    %4223 = vmatpush1.xpose.msra.mxu0 0.0
    %4224 = vmatprep.subr.mxu0 0.0
    %4225 = vmatpush1.xpose.msra.mxu0 0.0
    %4226 = vmatprep.subr.mxu0 0.0
    %4227 = vmatpush1.xpose.msra.mxu0 0.0
    %4228 = vmatprep.subr.mxu0 0.0
    %4229 = vmatpush1.xpose.msra.mxu0 0.0
    %4230 = vmatprep.mubr.f32.mxu0 0.0
    %4231 = vmatmul.mubr.f32.gmra.mrb[0].mxu0 %v4150
    %v4232 = vpop.f32.mrb[0].mxu0
    %v4233 = vadd.f32 0.0, %v4232
    %v4234 = vpop.f32.mrb[0].mxu0
    %4235 = vmatprep.mubr.f32.mxu0 0.0
    %4236 = vmatmul.mubr.f32.gmra.mrb[0].mxu0 %v4152
    %v4237 = vpop.f32.mrb[0].mxu0
    %v4238 = vadd.f32 0.0, %v4237
    %v4239 = vpop.f32.mrb[0].mxu0
    %4240 = vmatprep.mubr.f32.mxu0 0.0
    %4241 = vmatmul.mubr.f32.gmra.mrb[0].mxu0 %v4154
    %v4242 = vpop.f32.mrb[0].mxu0
    %v4243 = vadd.f32 0.0, %v4242
    %v4244 = vpop.f32.mrb[0].mxu0
    %4245 = vmatprep.mubr.f32.mxu0 0.0
    %4246 = vmatmul.mubr.f32.gmra.mrb[0].mxu0 %v4156
    %v4247 = vpop.f32.mrb[0].mxu0
    %v4248 = vadd.f32 0.0, %v4247
    %v4249 = vpop.f32.mrb[0].mxu0
    %4250 = vdwg.mxu0
    %v4251 = vmul.f32 %v4116, 1.442695
    %v4252 = vpow.pop %v4251
    %v4253 = vmul.f32 %v4121, 1.442695
    %v4254 = vpow.pop %v4253
    %v4255 = vmul.f32 %v4126, 1.442695
    %v4256 = vpow.pop %v4255
    %v4257 = vmul.f32 %v4131, 1.442695
    %v4258 = vpow.pop %v4257
    %v4259 = vmul.f32 %v4233, %v188
    %v4260 = vmul.f32 %v4238, %v189
    %v4261 = vmul.f32 %v4243, %v190
    %v4262 = vmul.f32 %v4248, %v191
    %v4263 = vsel %vm184, %v4252, %v4259
    %v4264 = vsel %vm185, %v4254, %v4260
    %v4265 = vsel %vm186, %v4256, %v4261
    %v4266 = vsel %vm187, %v4258, %v4262
    %v4267 = vsel %vm220, %v4263, 0.0
    %4268 = vadd.xlane.f32.xlu0 %v4267
    %v4269 = vpop.xlane.xlu0 %4268
    %v4270 = vsel %vm220, %v4264, 0.0
    %4271 = vadd.xlane.f32.xlu0 %v4270
    %v4272 = vpop.xlane.xlu0 %4271
    %v4273 = vsel %vm220, %v4265, 0.0
    %4274 = vadd.xlane.f32.xlu0 %v4273
    %v4275 = vpop.xlane.xlu0 %4274
    %v4276 = vsel %vm220, %v4266, 0.0
    %4277 = vadd.xlane.f32.xlu0 %v4276
    %v4278 = vpop.xlane.xlu0 %4277
    %vm4279 = vcmp.gt.f32.partialorder %v4269, 0.0
    %vm4280 = vcmp.gt.f32.partialorder %v4272, 0.0
    %vm4281 = vcmp.gt.f32.partialorder %v4275, 0.0
    %vm4282 = vcmp.gt.f32.partialorder %v4278, 0.0
    %v4283 = vsel %vm4279, %v4269, 1.0
    %v4284 = vsel %vm4280, %v4272, 1.0
    %v4285 = vsel %vm4281, %v4275, 1.0
    %v4286 = vsel %vm4282, %v4278, 1.0
    %4287 = vrot.lane.b32.xlu0 %v2729, 40
    %v4288 = vpop.permute.xlu0 %4287
    %4289 = vrot.lane.b32.xlu0 %v2735, 40
    %v4290 = vpop.permute.xlu0 %4289
    %4291 = vrot.lane.b32.xlu0 %v2741, 40
    %v4292 = vpop.permute.xlu0 %4291
    %4293 = vrot.lane.b32.xlu0 %v2747, 40
    %v4294 = vpop.permute.xlu0 %4293
    %v4300 = vsel %vm220, %v4263, 0
    %v4303 = vsel %vm220, %v4264, 0
    %v4306 = vsel %vm220, %v4265, 0
    %v4309 = vsel %vm220, %v4266, 0
    %4311 = vmatprep.subr.mxu0 0.0
    %4312 = vmatpush1.msra.mxu0 %v4288
    %4313 = vmatprep.subr.mxu0 0.0
    %4314 = vmatpush1.msra.mxu0 %v4290
    %4315 = vmatprep.subr.mxu0 0.0
    %4316 = vmatpush1.msra.mxu0 %v4292
    %4317 = vmatprep.subr.mxu0 0.0
    %4318 = vmatpush1.msra.mxu0 %v4294
    %4319 = vmatprep.subr.mxu0 0.0
    %4320 = vmatpush1.msra.mxu0 0.0
    %4321 = vmatprep.subr.mxu0 0.0
    %4322 = vmatpush1.msra.mxu0 0.0
    %4323 = vmatprep.subr.mxu0 0.0
    %4324 = vmatpush1.msra.mxu0 0.0
    %4325 = vmatprep.subr.mxu0 0.0
    %4326 = vmatpush1.msra.mxu0 0.0
    %4327 = vmatprep.subr.mxu0 0.0
    %4328 = vmatpush1.msra.mxu0 0.0
    %4329 = vmatprep.subr.mxu0 0.0
    %4330 = vmatpush1.msra.mxu0 0.0
    %4331 = vmatprep.subr.mxu0 0.0
    %4332 = vmatpush1.msra.mxu0 0.0
    %4333 = vmatprep.subr.mxu0 0.0
    %4334 = vmatpush1.msra.mxu0 0.0
    %4335 = vmatprep.subr.mxu0 0.0
    %4336 = vmatpush1.msra.mxu0 0.0
    %4337 = vmatprep.subr.mxu0 0.0
    %4338 = vmatpush1.msra.mxu0 0.0
    %4339 = vmatprep.subr.mxu0 0.0
    %4340 = vmatpush1.msra.mxu0 0.0
    %4341 = vmatprep.subr.mxu0 0.0
    %4342 = vmatpush1.msra.mxu0 0.0
    %4343 = vmatprep.subr.mxu0 0.0
    %4344 = vmatpush1.msra.mxu0 0.0
    %4345 = vmatprep.subr.mxu0 0.0
    %4346 = vmatpush1.msra.mxu0 0.0
    %4347 = vmatprep.subr.mxu0 0.0
    %4348 = vmatpush1.msra.mxu0 0.0
    %4349 = vmatprep.subr.mxu0 0.0
    %4350 = vmatpush1.msra.mxu0 0.0
    %4351 = vmatprep.subr.mxu0 0.0
    %4352 = vmatpush1.msra.mxu0 0.0
    %4353 = vmatprep.subr.mxu0 0.0
    %4354 = vmatpush1.msra.mxu0 0.0
    %4355 = vmatprep.subr.mxu0 0.0
    %4356 = vmatpush1.msra.mxu0 0.0
    %4357 = vmatprep.subr.mxu0 0.0
    %4358 = vmatpush1.msra.mxu0 0.0
    %4359 = vmatprep.subr.mxu0 0.0
    %4360 = vmatpush1.msra.mxu0 0.0
    %4361 = vmatprep.subr.mxu0 0.0
    %4362 = vmatpush1.msra.mxu0 0.0
    %4363 = vmatprep.subr.mxu0 0.0
    %4364 = vmatpush1.msra.mxu0 0.0
    %4365 = vmatprep.subr.mxu0 0.0
    %4366 = vmatpush1.msra.mxu0 0.0
    %4367 = vmatprep.subr.mxu0 0.0
    %4368 = vmatpush1.msra.mxu0 0.0
    %4369 = vmatprep.subr.mxu0 0.0
    %4370 = vmatpush1.msra.mxu0 0.0
    %4371 = vmatprep.subr.mxu0 0.0
    %4372 = vmatpush1.msra.mxu0 0.0
    %4373 = vmatprep.subr.mxu0 0.0
    %4374 = vmatpush1.msra.mxu0 0.0
    %4375 = vmatprep.mubr.f32.mxu0 0.0
    %4376 = vmatmul.mubr.f32.gmra.mrb[0].mxu0 %v4300
    %v4377 = vpop.f32.mrb[0].mxu0
    %v4378 = vadd.f32 0.0, %v4377
    %v4379 = vpop.f32.mrb[0].mxu0
    %4380 = vmatprep.mubr.f32.mxu0 0.0
    %4381 = vmatmul.mubr.f32.gmra.mrb[0].mxu0 %v4303
    %v4382 = vpop.f32.mrb[0].mxu0
    %v4383 = vadd.f32 0.0, %v4382
    %v4384 = vpop.f32.mrb[0].mxu0
    %4385 = vmatprep.mubr.f32.mxu0 0.0
    %4386 = vmatmul.mubr.f32.gmra.mrb[0].mxu0 %v4306
    %v4387 = vpop.f32.mrb[0].mxu0
    %v4388 = vadd.f32 0.0, %v4387
    %v4389 = vpop.f32.mrb[0].mxu0
    %4390 = vmatprep.mubr.f32.mxu0 0.0
    %4391 = vmatmul.mubr.f32.gmra.mrb[0].mxu0 %v4309
    %v4392 = vpop.f32.mrb[0].mxu0
    %v4393 = vadd.f32 0.0, %v4392
    %v4394 = vpop.f32.mrb[0].mxu0
    %4395 = vdwg.mxu0
    %v4396 = vrcp.pop %v4283
    %v4397 = vrcp.pop %v4284
    %v4398 = vrcp.pop %v4285
    %v4399 = vrcp.pop %v4286
    %v4400 = vmul.f32 %v4378, %v4396
    %v4401 = vmul.f32 %v4383, %v4397
    %v4402 = vmul.f32 %v4388, %v4398
    %v4403 = vmul.f32 %v4393, %v4399
    %4408 = vrot.lane.b32.xlu0 %v3626, 8
    %v4409 = vpop.permute.xlu0 %4408
    %4410 = vrot.lane.b32.xlu0 %v3627, 8
    %v4411 = vpop.permute.xlu0 %4410
    %4412 = vrot.lane.b32.xlu0 %v3628, 8
    %v4413 = vpop.permute.xlu0 %4412
    %4414 = vrot.lane.b32.xlu0 %v3629, 8
    %v4415 = vpop.permute.xlu0 %4414
    %4424 = vrot.lane.b32.xlu0 %v4013, 16
    %v4425 = vpop.permute.xlu0 %4424
    %4426 = vrot.lane.b32.xlu0 %v4014, 16
    %v4427 = vpop.permute.xlu0 %4426
    %4428 = vrot.lane.b32.xlu0 %v4015, 16
    %v4429 = vpop.permute.xlu0 %4428
    %4430 = vrot.lane.b32.xlu0 %v4016, 16
    %v4431 = vpop.permute.xlu0 %4430
    %4440 = vrot.lane.b32.xlu0 %v4400, 24
    %v4441 = vpop.permute.xlu0 %4440
    %4442 = vrot.lane.b32.xlu0 %v4401, 24
    %v4443 = vpop.permute.xlu0 %4442
    %4444 = vrot.lane.b32.xlu0 %v4402, 24
    %v4445 = vpop.permute.xlu0 %4444
    %4446 = vrot.lane.b32.xlu0 %v4403, 24
    %v4447 = vpop.permute.xlu0 %4446
    %v4452 = vsel %vm448, %v3239, %v4409
    %v4453 = vsel %vm448, %v3240, %v4411
    %v4454 = vsel %vm448, %v3241, %v4413
    %v4455 = vsel %vm448, %v3242, %v4415
    %v4456 = vsel %vm562, %v4452, %v4425
    %v4457 = vsel %vm562, %v4453, %v4427
    %v4458 = vsel %vm562, %v4454, %v4429
    %v4459 = vsel %vm562, %v4455, %v4431
    %v4460 = vsel %vm2034, %v4456, %v4441
    %v4461 = vsel %vm2034, %v4457, %v4443
    %v4462 = vsel %vm2034, %v4458, %v4445
    %v4463 = vsel %vm2034, %v4459, %v4447
    %s4464 = scalar_lea.vmem %s6, 32
    %v4465 = vld [vmem:[%s4464] sm:$0xff]
    %v4466 = vld [vmem:[%s4464 + $0x8] sm:$0xff]
    %v4467 = vld [vmem:[%s4464 + $0x10] sm:$0xff]
    %v4468 = vld [vmem:[%s4464 + $0x18] sm:$0xff]
    %s4469 = scalar_lea.vmem [#allocation5], 1
    %v4470 = vld [vmem:[%s4469] sm:$0x1]
    %v4472 = vlaneseq
    %v4473 = vshrl.u32 %v4472, 7
    %v4474 = vsub.s32 0, %v4473
    %v4475 = vrot.slane %v4470, %v4474
    %v4478 = vsel %vm220, %v4460, 0
    %v4481 = vsel %vm220, %v4461, 0
    %v4484 = vsel %vm220, %v4462, 0
    %v4487 = vsel %vm220, %v4463, 0
    %4489 = vmatprep.subr.mxu0 0.0
    %4490 = vmatpush1.msra.mxu0 %v4465
    %4491 = vmatprep.subr.mxu0 0.0
    %4492 = vmatpush1.msra.mxu0 %v4466
    %4493 = vmatprep.subr.mxu0 0.0
    %4494 = vmatpush1.msra.mxu0 %v4467
    %4495 = vmatprep.subr.mxu0 0.0
    %4496 = vmatpush1.msra.mxu0 %v4468
    %4497 = vmatprep.subr.mxu0 0.0
    %4498 = vmatpush1.msra.mxu0 0.0
    %4499 = vmatprep.subr.mxu0 0.0
    %4500 = vmatpush1.msra.mxu0 0.0
    %4501 = vmatprep.subr.mxu0 0.0
    %4502 = vmatpush1.msra.mxu0 0.0
    %4503 = vmatprep.subr.mxu0 0.0
    %4504 = vmatpush1.msra.mxu0 0.0
    %4505 = vmatprep.subr.mxu0 0.0
    %4506 = vmatpush1.msra.mxu0 0.0
    %4507 = vmatprep.subr.mxu0 0.0
    %4508 = vmatpush1.msra.mxu0 0.0
    %4509 = vmatprep.subr.mxu0 0.0
    %4510 = vmatpush1.msra.mxu0 0.0
    %4511 = vmatprep.subr.mxu0 0.0
    %4512 = vmatpush1.msra.mxu0 0.0
    %4513 = vmatprep.subr.mxu0 0.0
    %4514 = vmatpush1.msra.mxu0 0.0
    %4515 = vmatprep.subr.mxu0 0.0
    %4516 = vmatpush1.msra.mxu0 0.0
    %4517 = vmatprep.subr.mxu0 0.0
    %4518 = vmatpush1.msra.mxu0 0.0
    %4519 = vmatprep.subr.mxu0 0.0
    %4520 = vmatpush1.msra.mxu0 0.0
    %4521 = vmatprep.subr.mxu0 0.0
    %4522 = vmatpush1.msra.mxu0 0.0
    %4523 = vmatprep.subr.mxu0 0.0
    %4524 = vmatpush1.msra.mxu0 0.0
    %4525 = vmatprep.subr.mxu0 0.0
    %4526 = vmatpush1.msra.mxu0 0.0
    %4527 = vmatprep.subr.mxu0 0.0
    %4528 = vmatpush1.msra.mxu0 0.0
    %4529 = vmatprep.subr.mxu0 0.0
    %4530 = vmatpush1.msra.mxu0 0.0
    %4531 = vmatprep.subr.mxu0 0.0
    %4532 = vmatpush1.msra.mxu0 0.0
    %4533 = vmatprep.subr.mxu0 0.0
    %4534 = vmatpush1.msra.mxu0 0.0
    %4535 = vmatprep.subr.mxu0 0.0
    %4536 = vmatpush1.msra.mxu0 0.0
    %4537 = vmatprep.subr.mxu0 0.0
    %4538 = vmatpush1.msra.mxu0 0.0
    %4539 = vmatprep.subr.mxu0 0.0
    %4540 = vmatpush1.msra.mxu0 0.0
    %4541 = vmatprep.subr.mxu0 0.0
    %4542 = vmatpush1.msra.mxu0 0.0
    %4543 = vmatprep.subr.mxu0 0.0
    %4544 = vmatpush1.msra.mxu0 0.0
    %4545 = vmatprep.subr.mxu0 0.0
    %4546 = vmatpush1.msra.mxu0 0.0
    %4547 = vmatprep.subr.mxu0 0.0
    %4548 = vmatpush1.msra.mxu0 0.0
    %4549 = vmatprep.subr.mxu0 0.0
    %4550 = vmatpush1.msra.mxu0 0.0
    %4551 = vmatprep.subr.mxu0 0.0
    %4552 = vmatpush1.msra.mxu0 0.0
    %4553 = vmatprep.mubr.f32.mxu0 0.0
    %4554 = vmatmul.mubr.f32.gmra.mrb[0].mxu0 %v4478
    %v4555 = vpop.f32.mrb[0].mxu0
    %v4556 = vadd.f32 %v4475, %v4555
    %v4557 = vpop.f32.mrb[0].mxu0
    %4558 = vmatprep.mubr.f32.mxu0 0.0
    %4559 = vmatmul.mubr.f32.gmra.mrb[0].mxu0 %v4481
    %v4560 = vpop.f32.mrb[0].mxu0
    %v4561 = vadd.f32 %v4475, %v4560
    %v4562 = vpop.f32.mrb[0].mxu0
    %4563 = vmatprep.mubr.f32.mxu0 0.0
    %4564 = vmatmul.mubr.f32.gmra.mrb[0].mxu0 %v4484
    %v4565 = vpop.f32.mrb[0].mxu0
    %v4566 = vadd.f32 %v4475, %v4565
    %v4567 = vpop.f32.mrb[0].mxu0
    %4568 = vmatprep.mubr.f32.mxu0 0.0
    %4569 = vmatmul.mubr.f32.gmra.mrb[0].mxu0 %v4487
    %v4570 = vpop.f32.mrb[0].mxu0
    %v4571 = vadd.f32 %v4475, %v4570
    %v4572 = vpop.f32.mrb[0].mxu0
    %4573 = vdwg.mxu0
    %v4574 = vadd.f32 %v2624, %v4556
    %v4575 = vadd.f32 %v2625, %v4561
    %v4576 = vadd.f32 %v2626, %v4566
    %v4577 = vadd.f32 %v2627, %v4571
    %s4578 = scalar_lea.vmem [#allocation7], 1
    %v4579 = vld [vmem:[%s4578] sm:$0x1]
    %s4580 = scalar_lea.vmem [#allocation8], 1
    %v4581 = vld [vmem:[%s4580] sm:$0x1]
    %v4582 = vsel %vm220, %v4574, 0.0
    %4583 = vadd.xlane.f32.xlu0 %v4582
    %v4584 = vpop.xlane.xlu0 %4583
    %v4585 = vsel %vm220, %v4575, 0.0
    %4586 = vadd.xlane.f32.xlu0 %v4585
    %v4587 = vpop.xlane.xlu0 %4586
    %v4588 = vsel %vm220, %v4576, 0.0
    %4589 = vadd.xlane.f32.xlu0 %v4588
    %v4590 = vpop.xlane.xlu0 %4589
    %v4591 = vsel %vm220, %v4577, 0.0
    %4592 = vadd.xlane.f32.xlu0 %v4591
    %v4593 = vpop.xlane.xlu0 %4592
    %v4594 = vmul.f32 %v4584, %v2165
    %v4595 = vmul.f32 %v4587, %v2165
    %v4596 = vmul.f32 %v4590, %v2165
    %v4597 = vmul.f32 %v4593, %v2165
    %v4598 = vsub.f32 %v4574, %v4594
    %v4599 = vsub.f32 %v4575, %v4595
    %v4600 = vsub.f32 %v4576, %v4596
    %v4601 = vsub.f32 %v4577, %v4597
    %v4602 = vmul.f32 %v4598, %v4598
    %v4603 = vmul.f32 %v4599, %v4599
    %v4604 = vmul.f32 %v4600, %v4600
    %v4605 = vmul.f32 %v4601, %v4601
    %v4606 = vsel %vm220, %v4602, 0.0
    %4607 = vadd.xlane.f32.xlu0 %v4606
    %v4608 = vpop.xlane.xlu0 %4607
    %v4609 = vsel %vm220, %v4603, 0.0
    %4610 = vadd.xlane.f32.xlu0 %v4609
    %v4611 = vpop.xlane.xlu0 %4610
    %v4612 = vsel %vm220, %v4604, 0.0
    %4613 = vadd.xlane.f32.xlu0 %v4612
    %v4614 = vpop.xlane.xlu0 %4613
    %v4615 = vsel %vm220, %v4605, 0.0
    %4616 = vadd.xlane.f32.xlu0 %v4615
    %v4617 = vpop.xlane.xlu0 %4616
    %v4618 = vmul.f32 %v4608, %v2165
    %v4619 = vmul.f32 %v4611, %v2165
    %v4620 = vmul.f32 %v4614, %v2165
    %v4621 = vmul.f32 %v4617, %v2165
    %v4622 = vadd.f32 %v4618, 1e-05
    %v4623 = vadd.f32 %v4619, 1e-05
    %v4624 = vadd.f32 %v4620, 1e-05
    %v4625 = vadd.f32 %v4621, 1e-05
    %v4626 = vrsqrt.pop %v4622
    %v4627 = vrsqrt.pop %v4623
    %v4628 = vrsqrt.pop %v4624
    %v4629 = vrsqrt.pop %v4625
    %v4630 = vmul.f32 %v4598, %v4626
    %v4631 = vmul.f32 %v4599, %v4627
    %v4632 = vmul.f32 %v4600, %v4628
    %v4633 = vmul.f32 %v4601, %v4629
    %v4635 = vlaneseq
    %v4636 = vshrl.u32 %v4635, 7
    %v4637 = vsub.s32 0, %v4636
    %v4638 = vrot.slane %v4579, %v4637
    %v4640 = vmul.f32 %v4630, %v4638
    %v4641 = vmul.f32 %v4631, %v4638
    %v4642 = vmul.f32 %v4632, %v4638
    %v4643 = vmul.f32 %v4633, %v4638
    %v4645 = vlaneseq
    %v4646 = vshrl.u32 %v4645, 7
    %v4647 = vsub.s32 0, %v4646
    %v4648 = vrot.slane %v4581, %v4647
    %v4650 = vadd.f32 %v4640, %v4648
    %v4651 = vadd.f32 %v4641, %v4648
    %v4652 = vadd.f32 %v4642, %v4648
    %v4653 = vadd.f32 %v4643, %v4648
    %s4654 = scalar_lea.vmem [#allocation10], 32
    %v4655 = vld [vmem:[%s4654] sm:$0xff]
    %v4656 = vld [vmem:[%s4654 + $0x8] sm:$0xff]
    %v4657 = vld [vmem:[%s4654 + $0x10] sm:$0xff]
    %v4658 = vld [vmem:[%s4654 + $0x18] sm:$0xff]
    %s4659 = scalar_lea.vmem [#allocation11], 1
    %v4660 = vld [vmem:[%s4659] sm:$0x1]
    %v4662 = vlaneseq
    %v4663 = vshrl.u32 %v4662, 7
    %v4664 = vsub.s32 0, %v4663
    %v4665 = vrot.slane %v4660, %v4664
    %v4668 = vsel %vm220, %v4650, 0
    %v4671 = vsel %vm220, %v4651, 0
    %v4674 = vsel %vm220, %v4652, 0
    %v4677 = vsel %vm220, %v4653, 0
    %4679 = vmatprep.subr.mxu0 0.0
    %4680 = vmatpush1.msra.mxu0 %v4655
    %4681 = vmatprep.subr.mxu0 0.0
    %4682 = vmatpush1.msra.mxu0 %v4656
    %4683 = vmatprep.subr.mxu0 0.0
    %4684 = vmatpush1.msra.mxu0 %v4657
    %4685 = vmatprep.subr.mxu0 0.0
    %4686 = vmatpush1.msra.mxu0 %v4658
    %4687 = vmatprep.subr.mxu0 0.0
    %4688 = vmatpush1.msra.mxu0 0.0
    %4689 = vmatprep.subr.mxu0 0.0
    %4690 = vmatpush1.msra.mxu0 0.0
    %4691 = vmatprep.subr.mxu0 0.0
    %4692 = vmatpush1.msra.mxu0 0.0
    %4693 = vmatprep.subr.mxu0 0.0
    %4694 = vmatpush1.msra.mxu0 0.0
    %4695 = vmatprep.subr.mxu0 0.0
    %4696 = vmatpush1.msra.mxu0 0.0
    %4697 = vmatprep.subr.mxu0 0.0
    %4698 = vmatpush1.msra.mxu0 0.0
    %4699 = vmatprep.subr.mxu0 0.0
    %4700 = vmatpush1.msra.mxu0 0.0
    %4701 = vmatprep.subr.mxu0 0.0
    %4702 = vmatpush1.msra.mxu0 0.0
    %4703 = vmatprep.subr.mxu0 0.0
    %4704 = vmatpush1.msra.mxu0 0.0
    %4705 = vmatprep.subr.mxu0 0.0
    %4706 = vmatpush1.msra.mxu0 0.0
    %4707 = vmatprep.subr.mxu0 0.0
    %4708 = vmatpush1.msra.mxu0 0.0
    %4709 = vmatprep.subr.mxu0 0.0
    %4710 = vmatpush1.msra.mxu0 0.0
    %4711 = vmatprep.subr.mxu0 0.0
    %4712 = vmatpush1.msra.mxu0 0.0
    %4713 = vmatprep.subr.mxu0 0.0
    %4714 = vmatpush1.msra.mxu0 0.0
    %4715 = vmatprep.subr.mxu0 0.0
    %4716 = vmatpush1.msra.mxu0 0.0
    %4717 = vmatprep.subr.mxu0 0.0
    %4718 = vmatpush1.msra.mxu0 0.0
    %4719 = vmatprep.subr.mxu0 0.0
    %4720 = vmatpush1.msra.mxu0 0.0
    %4721 = vmatprep.subr.mxu0 0.0
    %4722 = vmatpush1.msra.mxu0 0.0
    %4723 = vmatprep.subr.mxu0 0.0
    %4724 = vmatpush1.msra.mxu0 0.0
    %4725 = vmatprep.subr.mxu0 0.0
    %4726 = vmatpush1.msra.mxu0 0.0
    %4727 = vmatprep.subr.mxu0 0.0
    %4728 = vmatpush1.msra.mxu0 0.0
    %4729 = vmatprep.subr.mxu0 0.0
    %4730 = vmatpush1.msra.mxu0 0.0
    %4731 = vmatprep.subr.mxu0 0.0
    %4732 = vmatpush1.msra.mxu0 0.0
    %4733 = vmatprep.subr.mxu0 0.0
    %4734 = vmatpush1.msra.mxu0 0.0
    %4735 = vmatprep.subr.mxu0 0.0
    %4736 = vmatpush1.msra.mxu0 0.0
    %4737 = vmatprep.subr.mxu0 0.0
    %4738 = vmatpush1.msra.mxu0 0.0
    %4739 = vmatprep.subr.mxu0 0.0
    %4740 = vmatpush1.msra.mxu0 0.0
    %4741 = vmatprep.subr.mxu0 0.0
    %4742 = vmatpush1.msra.mxu0 0.0
    %4743 = vmatprep.mubr.f32.mxu0 0.0
    %4744 = vmatmul.mubr.f32.gmra.mrb[0].mxu0 %v4668
    %v4745 = vpop.f32.mrb[0].mxu0
    %v4746 = vadd.f32 %v4665, %v4745
    %v4747 = vpop.f32.mrb[0].mxu0
    %4748 = vmatprep.mubr.f32.mxu0 0.0
    %4749 = vmatmul.mubr.f32.gmra.mrb[0].mxu0 %v4671
    %v4750 = vpop.f32.mrb[0].mxu0
    %v4751 = vadd.f32 %v4665, %v4750
    %v4752 = vpop.f32.mrb[0].mxu0
    %4753 = vmatprep.mubr.f32.mxu0 0.0
    %4754 = vmatmul.mubr.f32.gmra.mrb[0].mxu0 %v4674
    %v4755 = vpop.f32.mrb[0].mxu0
    %v4756 = vadd.f32 %v4665, %v4755
    %v4757 = vpop.f32.mrb[0].mxu0
    %4758 = vmatprep.mubr.f32.mxu0 0.0
    %4759 = vmatmul.mubr.f32.gmra.mrb[0].mxu0 %v4677
    %v4760 = vpop.f32.mrb[0].mxu0
    %v4761 = vadd.f32 %v4665, %v4760
    %v4762 = vpop.f32.mrb[0].mxu0
    %4763 = vdwg.mxu0
    %v4764 = vmul.f32 %v4746, 0.5
    %v4765 = vmul.f32 %v4751, 0.5
    %v4766 = vmul.f32 %v4756, 0.5
    %v4767 = vmul.f32 %v4761, 0.5
    %v4768 = vmul.f32 %v4746, 0.70710677
    %v4769 = vmul.f32 %v4751, 0.70710677
    %v4770 = vmul.f32 %v4756, 0.70710677
    %v4771 = vmul.f32 %v4761, 0.70710677
    %vm4772 = vcmp.ge.f32.partialorder %v4768, 0.0
    %vm4773 = vcmp.ge.f32.partialorder %v4769, 0.0
    %vm4774 = vcmp.ge.f32.partialorder %v4770, 0.0
    %vm4775 = vcmp.ge.f32.partialorder %v4771, 0.0
    %v4776 = vsel %vm4772, 1.0, -1.0
    %v4777 = vsel %vm4773, 1.0, -1.0
    %v4778 = vsel %vm4774, 1.0, -1.0
    %v4779 = vsel %vm4775, 1.0, -1.0
    %v4780 = vand.u32 2147483647, %v4768
    %v4781 = vand.u32 2147483647, %v4769
    %v4782 = vand.u32 2147483647, %v4770
    %v4783 = vand.u32 2147483647, %v4771
    %v4784 = vmul.f32 %v4780, 0.3275911
    %v4785 = vmul.f32 %v4781, 0.3275911
    %v4786 = vmul.f32 %v4782, 0.3275911
    %v4787 = vmul.f32 %v4783, 0.3275911
    %v4788 = vadd.f32 %v4784, 1.0
    %v4789 = vadd.f32 %v4785, 1.0
    %v4790 = vadd.f32 %v4786, 1.0
    %v4791 = vadd.f32 %v4787, 1.0
    %v4792 = vrcp.pop %v4788
    %v4793 = vrcp.pop %v4789
    %v4794 = vrcp.pop %v4790
    %v4795 = vrcp.pop %v4791
    %v4796 = vmul.f32 %v4792, 1.0614054
    %v4797 = vmul.f32 %v4793, 1.0614054
    %v4798 = vmul.f32 %v4794, 1.0614054
    %v4799 = vmul.f32 %v4795, 1.0614054
    %v4800 = vadd.f32 %v4796, -1.4531521
    %v4801 = vadd.f32 %v4797, -1.4531521
    %v4802 = vadd.f32 %v4798, -1.4531521
    %v4803 = vadd.f32 %v4799, -1.4531521
    %v4804 = vmul.f32 %v4800, %v4792
    %v4805 = vmul.f32 %v4801, %v4793
    %v4806 = vmul.f32 %v4802, %v4794
    %v4807 = vmul.f32 %v4803, %v4795
    %v4808 = vadd.f32 %v4804, 1.4214138
    %v4809 = vadd.f32 %v4805, 1.4214138
    %v4810 = vadd.f32 %v4806, 1.4214138
    %v4811 = vadd.f32 %v4807, 1.4214138
    %v4812 = vmul.f32 %v4808, %v4792
    %v4813 = vmul.f32 %v4809, %v4793
    %v4814 = vmul.f32 %v4810, %v4794
    %v4815 = vmul.f32 %v4811, %v4795
    %v4816 = vadd.f32 %v4812, -0.28449672
    %v4817 = vadd.f32 %v4813, -0.28449672
    %v4818 = vadd.f32 %v4814, -0.28449672
    %v4819 = vadd.f32 %v4815, -0.28449672
    %v4820 = vmul.f32 %v4816, %v4792
    %v4821 = vmul.f32 %v4817, %v4793
    %v4822 = vmul.f32 %v4818, %v4794
    %v4823 = vmul.f32 %v4819, %v4795
    %v4824 = vadd.f32 %v4820, 0.2548296
    %v4825 = vadd.f32 %v4821, 0.2548296
    %v4826 = vadd.f32 %v4822, 0.2548296
    %v4827 = vadd.f32 %v4823, 0.2548296
    %v4828 = vmul.f32 %v4824, %v4792
    %v4829 = vmul.f32 %v4825, %v4793
    %v4830 = vmul.f32 %v4826, %v4794
    %v4831 = vmul.f32 %v4827, %v4795
    %v4832 = vsub.f32 0.0, %v4780
    %v4833 = vsub.f32 0.0, %v4781
    %v4834 = vsub.f32 0.0, %v4782
    %v4835 = vsub.f32 0.0, %v4783
    %v4836 = vmul.f32 %v4832, %v4780
    %v4837 = vmul.f32 %v4833, %v4781
    %v4838 = vmul.f32 %v4834, %v4782
    %v4839 = vmul.f32 %v4835, %v4783
    %v4840 = vmul.f32 %v4836, 1.442695
    %v4841 = vpow.pop %v4840
    %v4842 = vmul.f32 %v4837, 1.442695
    %v4843 = vpow.pop %v4842
    %v4844 = vmul.f32 %v4838, 1.442695
    %v4845 = vpow.pop %v4844
    %v4846 = vmul.f32 %v4839, 1.442695
    %v4847 = vpow.pop %v4846
    %v4848 = vmul.f32 %v4828, %v4841
    %v4849 = vmul.f32 %v4829, %v4843
    %v4850 = vmul.f32 %v4830, %v4845
    %v4851 = vmul.f32 %v4831, %v4847
    %v4852 = vsub.f32 1.0, %v4848
    %v4853 = vsub.f32 1.0, %v4849
    %v4854 = vsub.f32 1.0, %v4850
    %v4855 = vsub.f32 1.0, %v4851
    %v4856 = vmul.f32 %v4776, %v4852
    %v4857 = vmul.f32 %v4777, %v4853
    %v4858 = vmul.f32 %v4778, %v4854
    %v4859 = vmul.f32 %v4779, %v4855
    %v4860 = vadd.f32 %v4856, 1.0
    %v4861 = vadd.f32 %v4857, 1.0
    %v4862 = vadd.f32 %v4858, 1.0
    %v4863 = vadd.f32 %v4859, 1.0
    %v4864 = vmul.f32 %v4764, %v4860
    %v4865 = vmul.f32 %v4765, %v4861
    %v4866 = vmul.f32 %v4766, %v4862
    %v4867 = vmul.f32 %v4767, %v4863
    %s4868 = scalar_lea.vmem %s12, 64
    %v4869 = vld [vmem:[%s4868] sm:$0xff]
    %v4870 = vld [vmem:[%s4868 + $0x8] sm:$0xff]
    %v4871 = vld [vmem:[%s4868 + $0x10] sm:$0xff]
    %v4872 = vld [vmem:[%s4868 + $0x18] sm:$0xff]
    %v4873 = vld [vmem:[%s4868 + $0x20] sm:$0xff]
    %v4874 = vld [vmem:[%s4868 + $0x28] sm:$0xff]
    %v4875 = vld [vmem:[%s4868 + $0x30] sm:$0xff]
    %v4876 = vld [vmem:[%s4868 + $0x38] sm:$0xff]
    %s4877 = scalar_lea.vmem [#allocation13], 1
    %v4878 = vld [vmem:[%s4877] sm:$0x1]
    %v4880 = vlaneseq
    %v4881 = vshrl.u32 %v4880, 7
    %v4882 = vsub.s32 0, %v4881
    %v4883 = vrot.slane %v4878, %v4882
    %v4886 = vsel %vm326, %v4864, 0
    %v4889 = vsel %vm326, %v4865, 0
    %v4892 = vsel %vm326, %v4866, 0
    %v4895 = vsel %vm326, %v4867, 0
    %4897 = vmatprep.subr.mxu0 0.0
    %4898 = vmatpush1.msra.mxu0 %v4869
    %4899 = vmatprep.subr.mxu0 0.0
    %4900 = vmatpush1.msra.mxu0 %v4870
    %4901 = vmatprep.subr.mxu0 0.0
    %4902 = vmatpush1.msra.mxu0 %v4871
    %4903 = vmatprep.subr.mxu0 0.0
    %4904 = vmatpush1.msra.mxu0 %v4872
    %4905 = vmatprep.subr.mxu0 0.0
    %4906 = vmatpush1.msra.mxu0 %v4873
    %4907 = vmatprep.subr.mxu0 0.0
    %4908 = vmatpush1.msra.mxu0 %v4874
    %4909 = vmatprep.subr.mxu0 0.0
    %4910 = vmatpush1.msra.mxu0 %v4875
    %4911 = vmatprep.subr.mxu0 0.0
    %4912 = vmatpush1.msra.mxu0 %v4876
    %4913 = vmatprep.subr.mxu0 0.0
    %4914 = vmatpush1.msra.mxu0 0.0
    %4915 = vmatprep.subr.mxu0 0.0
    %4916 = vmatpush1.msra.mxu0 0.0
    %4917 = vmatprep.subr.mxu0 0.0
    %4918 = vmatpush1.msra.mxu0 0.0
    %4919 = vmatprep.subr.mxu0 0.0
    %4920 = vmatpush1.msra.mxu0 0.0
    %4921 = vmatprep.subr.mxu0 0.0
    %4922 = vmatpush1.msra.mxu0 0.0
    %4923 = vmatprep.subr.mxu0 0.0
    %4924 = vmatpush1.msra.mxu0 0.0
    %4925 = vmatprep.subr.mxu0 0.0
    %4926 = vmatpush1.msra.mxu0 0.0
    %4927 = vmatprep.subr.mxu0 0.0
    %4928 = vmatpush1.msra.mxu0 0.0
    %4929 = vmatprep.subr.mxu0 0.0
    %4930 = vmatpush1.msra.mxu0 0.0
    %4931 = vmatprep.subr.mxu0 0.0
    %4932 = vmatpush1.msra.mxu0 0.0
    %4933 = vmatprep.subr.mxu0 0.0
    %4934 = vmatpush1.msra.mxu0 0.0
    %4935 = vmatprep.subr.mxu0 0.0
    %4936 = vmatpush1.msra.mxu0 0.0
    %4937 = vmatprep.subr.mxu0 0.0
    %4938 = vmatpush1.msra.mxu0 0.0
    %4939 = vmatprep.subr.mxu0 0.0
    %4940 = vmatpush1.msra.mxu0 0.0
    %4941 = vmatprep.subr.mxu0 0.0
    %4942 = vmatpush1.msra.mxu0 0.0
    %4943 = vmatprep.subr.mxu0 0.0
    %4944 = vmatpush1.msra.mxu0 0.0
    %4945 = vmatprep.subr.mxu0 0.0
    %4946 = vmatpush1.msra.mxu0 0.0
    %4947 = vmatprep.subr.mxu0 0.0
    %4948 = vmatpush1.msra.mxu0 0.0
    %4949 = vmatprep.subr.mxu0 0.0
    %4950 = vmatpush1.msra.mxu0 0.0
    %4951 = vmatprep.subr.mxu0 0.0
    %4952 = vmatpush1.msra.mxu0 0.0
    %4953 = vmatprep.subr.mxu0 0.0
    %4954 = vmatpush1.msra.mxu0 0.0
    %4955 = vmatprep.subr.mxu0 0.0
    %4956 = vmatpush1.msra.mxu0 0.0
    %4957 = vmatprep.subr.mxu0 0.0
    %4958 = vmatpush1.msra.mxu0 0.0
    %4959 = vmatprep.subr.mxu0 0.0
    %4960 = vmatpush1.msra.mxu0 0.0
    %4961 = vmatprep.mubr.f32.mxu0 0.0
    %4962 = vmatmul.mubr.f32.gmra.mrb[0].mxu0 %v4886
    %v4963 = vpop.f32.mrb[0].mxu0
    %v4964 = vadd.f32 %v4883, %v4963
    %v4965 = vpop.f32.mrb[0].mxu0
    %4966 = vmatprep.mubr.f32.mxu0 0.0
    %4967 = vmatmul.mubr.f32.gmra.mrb[0].mxu0 %v4889
    %v4968 = vpop.f32.mrb[0].mxu0
    %v4969 = vadd.f32 %v4883, %v4968
    %v4970 = vpop.f32.mrb[0].mxu0
    %4971 = vmatprep.mubr.f32.mxu0 0.0
    %4972 = vmatmul.mubr.f32.gmra.mrb[0].mxu0 %v4892
    %v4973 = vpop.f32.mrb[0].mxu0
    %v4974 = vadd.f32 %v4883, %v4973
    %v4975 = vpop.f32.mrb[0].mxu0
    %4976 = vmatprep.mubr.f32.mxu0 0.0
    %4977 = vmatmul.mubr.f32.gmra.mrb[0].mxu0 %v4895
    %v4978 = vpop.f32.mrb[0].mxu0
    %v4979 = vadd.f32 %v4883, %v4978
    %v4980 = vpop.f32.mrb[0].mxu0
    %4981 = vdwg.mxu0
    %v4982 = vadd.f32 %v4650, %v4964
    %v4983 = vadd.f32 %v4651, %v4969
    %v4984 = vadd.f32 %v4652, %v4974
    %v4985 = vadd.f32 %v4653, %v4979
    %s4986 = scalar_lea.vmem [#allocation14], 1
    %v4987 = vld [vmem:[%s4986] sm:$0x1]
    %s4988 = scalar_lea.vmem [#allocation16], 1
    %v4989 = vld [vmem:[%s4988] sm:$0x1]
    %v4990 = vsel %vm220, %v4982, 0.0
    %4991 = vadd.xlane.f32.xlu0 %v4990
    %v4992 = vpop.xlane.xlu0 %4991
    %v4993 = vsel %vm220, %v4983, 0.0
    %4994 = vadd.xlane.f32.xlu0 %v4993
    %v4995 = vpop.xlane.xlu0 %4994
    %v4996 = vsel %vm220, %v4984, 0.0
    %4997 = vadd.xlane.f32.xlu0 %v4996
    %v4998 = vpop.xlane.xlu0 %4997
    %v4999 = vsel %vm220, %v4985, 0.0
    %5000 = vadd.xlane.f32.xlu0 %v4999
    %v5001 = vpop.xlane.xlu0 %5000
    %v5002 = vmul.f32 %v4992, %v2165
    %v5003 = vmul.f32 %v4995, %v2165
    %v5004 = vmul.f32 %v4998, %v2165
    %v5005 = vmul.f32 %v5001, %v2165
    %v5006 = vsub.f32 %v4982, %v5002
    %v5007 = vsub.f32 %v4983, %v5003
    %v5008 = vsub.f32 %v4984, %v5004
    %v5009 = vsub.f32 %v4985, %v5005
    %v5010 = vmul.f32 %v5006, %v5006
    %v5011 = vmul.f32 %v5007, %v5007
    %v5012 = vmul.f32 %v5008, %v5008
    %v5013 = vmul.f32 %v5009, %v5009
    %v5014 = vsel %vm220, %v5010, 0.0
    %5015 = vadd.xlane.f32.xlu0 %v5014
    %v5016 = vpop.xlane.xlu0 %5015
    %v5017 = vsel %vm220, %v5011, 0.0
    %5018 = vadd.xlane.f32.xlu0 %v5017
    %v5019 = vpop.xlane.xlu0 %5018
    %v5020 = vsel %vm220, %v5012, 0.0
    %5021 = vadd.xlane.f32.xlu0 %v5020
    %v5022 = vpop.xlane.xlu0 %5021
    %v5023 = vsel %vm220, %v5013, 0.0
    %5024 = vadd.xlane.f32.xlu0 %v5023
    %v5025 = vpop.xlane.xlu0 %5024
    %v5026 = vmul.f32 %v5016, %v2165
    %v5027 = vmul.f32 %v5019, %v2165
    %v5028 = vmul.f32 %v5022, %v2165
    %v5029 = vmul.f32 %v5025, %v2165
    %v5030 = vadd.f32 %v5026, 1e-05
    %v5031 = vadd.f32 %v5027, 1e-05
    %v5032 = vadd.f32 %v5028, 1e-05
    %v5033 = vadd.f32 %v5029, 1e-05
    %v5034 = vrsqrt.pop %v5030
    %v5035 = vrsqrt.pop %v5031
    %v5036 = vrsqrt.pop %v5032
    %v5037 = vrsqrt.pop %v5033
    %v5038 = vmul.f32 %v5006, %v5034
    %v5039 = vmul.f32 %v5007, %v5035
    %v5040 = vmul.f32 %v5008, %v5036
    %v5041 = vmul.f32 %v5009, %v5037
    %v5043 = vlaneseq
    %v5044 = vshrl.u32 %v5043, 7
    %v5045 = vsub.s32 0, %v5044
    %v5046 = vrot.slane %v4987, %v5045
    %v5048 = vmul.f32 %v5038, %v5046
    %v5049 = vmul.f32 %v5039, %v5046
    %v5050 = vmul.f32 %v5040, %v5046
    %v5051 = vmul.f32 %v5041, %v5046
    %v5053 = vlaneseq
    %v5054 = vshrl.u32 %v5053, 7
    %v5055 = vsub.s32 0, %v5054
    %v5056 = vrot.slane %v4989, %v5055
    %v5058 = vadd.f32 %v5048, %v5056
    %v5059 = vadd.f32 %v5049, %v5056
    %v5060 = vadd.f32 %v5050, %v5056
    %v5061 = vadd.f32 %v5051, %v5056
    %5062 = vst.msk [vmem:[#allocation17] sm:$0xff] %vm220, %v5058
    %5063 = vst.msk [vmem:[#allocation17 + $0x8] sm:$0xff] %vm220, %v5059
    %5064 = vst.msk [vmem:[#allocation17 + $0x10] sm:$0xff] %vm220, %v5060
    %5065 = vst.msk [vmem:[#allocation17 + $0x18] sm:$0xff] %vm220, %v5061
    // Predicated region
    $region102: #{backbone_forward.1} parent=1 // pred_check
      _
    $region103: #{backbone_forward.1} parent=1 // pred_check_branch
      %5067 = sbr.rel (0) target = $region105
    $region104: #{backbone_forward.1} parent=1 // pred_region
      %s5069 = ssub.s32 512, 512
      %5070 = vsyncadd [#allocation4], %s5069
      %s5071 = sshll.u32 [#allocation17], 4
      %s5072 = int_to_ptr.vmem [resolvable:$true] %s5071
      %5077 = dma.vmem_to_hbm [thread:$0]  %s5072, 512, %s16, [#allocation4], 128, 128, 8
    $region105: #{backbone_forward.1} parent=1 // pred_fallthru
      _
    // Predicated region
    $region106: #{backbone_forward.1} parent=1 // pred_check
      _
    $region107: #{backbone_forward.1} parent=1 // pred_check_branch
      %5079 = sbr.rel (0) target = $region109
    $region108: #{backbone_forward.1} parent=1 // pred_region
      %5080 = dma.done [#allocation4], 512
    $region109: #{backbone_forward.1} parent=1 // pred_fallthru
      _
    %5081 = vsyncpa [#allocation3], 1
    %5082 = vsyncpa [#allocation6], 1
    %5083 = vsyncpa [#allocation9], 1
    %5084 = vsyncpa [#allocation12], 1
    %5085 = vsyncpa [#allocation15], 1
    %5086 = vsyncpa [#allocation4], 1

</llo_original>
